<compile_context>
chip_gen: v5e
topology: v5e:2x2
jax: 0.10.0
libtpu: 0.0.40
codegen_flags: <defaults>
</compile_context>

<pallas_src>
import functools

import jax
import jax.numpy as jnp
from jax.experimental import pallas as pl
from jax.experimental.pallas import tpu as pltpu

DROPOUT_RATE = 0.2
H1, H2, H3 = 128, 64, 32     # module defaults; natural per-layer gate widths 4*H = 512/256/128


# ----------------------------- shared fused math ------------------------------
# Used both inside the Pallas kernel (on loaded VMEM values) and as the matched-precision
# pure-JAX reference, so the two traces are op-for-op identical (modulo the approx reciprocal).
def _lstm_cell(gates, c, h_size):
    # gates laid out as 4 contiguous blocks of h_size: [i | f | g | o]  (PyTorch order)
    i = jax.nn.sigmoid(gates[:, 0 * h_size:1 * h_size])
    f = jax.nn.sigmoid(gates[:, 1 * h_size:2 * h_size])
    g = jnp.tanh(gates[:, 2 * h_size:3 * h_size])
    o = jax.nn.sigmoid(gates[:, 3 * h_size:4 * h_size])
    c_new = f * c + i * g
    h_new = o * jnp.tanh(c_new)
    return h_new, c_new


def _fused_math(x_flat, w_ih1, w_hh1, b1, w_ih2, w_hh2, b2,
                att_w, att_b, w3_h2, w3_ctx, w_hh3, b3, fc_w, fc_b,
                *, T, B, recip):
    f32 = jnp.float32
    bf16 = jnp.bfloat16

    def run_layer(xw, w_hh, h_size, extra_bias=None, collect=True):
        # xw: (T*B, 4*h_size) hoisted input projection (+ bias); only h @ w_hh stays in the loop.
        h = jnp.zeros((B, h_size), f32)
        c = jnp.zeros((B, h_size), f32)
        hs = []
        # TODO(synk): for large static T use lax.fori_loop(..., unroll=k) with h/c carries.
        for t in range(T):                                  # fully unrolled (small static T)
            gates = xw[t * B:(t + 1) * B, :] + jnp.dot(
                h.astype(bf16), w_hh, preferred_element_type=f32)
            if extra_bias is not None:
                gates = gates + extra_bias
            h, c = _lstm_cell(gates, c, h_size)
            if collect:
                hs.append(h)
        return hs if collect else h

    # ---- LSTM 1 -------------------------------------------------------------
    xw1 = jnp.dot(x_flat, w_ih1, preferred_element_type=f32) + b1           # (T*B, 4*H1)
    h1 = run_layer(xw1, w_hh1, H1)

    # ---- LSTM 2 (dropout scale of lstm1 output folded into w_ih2) -----------
    h1_flat = jnp.concatenate(h1, axis=0).astype(bf16)                      # (T*B, H1)
    xw2 = jnp.dot(h1_flat, w_ih2, preferred_element_type=f32) + b2          # (T*B, 4*H2)
    h2 = run_layer(xw2, w_hh2, H2)

    # ---- Attention over time (scale folded into att_w): ONE batched score matmul ----
    h2_flat = jnp.concatenate(h2, axis=0).astype(bf16)                      # (T*B, H2)
    scores = jnp.dot(h2_flat, att_w, preferred_element_type=f32) + att_b    # (T*B, 1)
    score_cols = [scores[t * B:(t + 1) * B, :] for t in range(T)]           # sublane slices
    m = score_cols[0]
    for t in range(1, T):
        m = jnp.maximum(m, score_cols[t])
    exps = [jnp.exp(s - m) for s in score_cols]
    denom = exps[0]
    for t in range(1, T):
        denom = denom + exps[t]
    inv = recip(denom)                                                      # EUP approx in-kernel
    att_cols = [e * inv for e in exps]                                      # softmax over T
    ctx = att_cols[0] * h2[0]
    for t in range(1, T):
        ctx = ctx + att_cols[t] * h2[t]                                     # (B, H2) context

    # ---- LSTM 3: split input projection; ctx contribution is loop-invariant --
    xw3 = jnp.dot(h2_flat, w3_h2, preferred_element_type=f32)               # (T*B, 4*H3)
    b3_eff = b3 + jnp.dot(ctx.astype(bf16), w3_ctx, preferred_element_type=f32)   # (B, 4*H3)
    h3_last = run_layer(xw3, w_hh3, H3, extra_bias=b3_eff, collect=False)

    # ---- FC (scale folded into fc_w) -----------------------------------------
    out = jnp.dot(h3_last.astype(bf16), fc_w, preferred_element_type=f32) + fc_b   # (B, 1)
    return out, att_cols


# ----------------------------- fused Pallas kernel -----------------------------
def _fused_kernel(x_ref, w_ih1_ref, w_hh1_ref, b1_ref,
                  w_ih2_ref, w_hh2_ref, b2_ref,
                  att_w_ref, att_b_ref,
                  w3_h2_ref, w3_ctx_ref, w_hh3_ref, b3_ref,
                  fc_w_ref, fc_b_ref,
                  out_ref, att_ref, *, T, B, T_pad):
    out, att_cols = _fused_math(
        x_ref[...], w_ih1_ref[...], w_hh1_ref[...], b1_ref[...],
        w_ih2_ref[...], w_hh2_ref[...], b2_ref[...],
        att_w_ref[...], att_b_ref[...],
        w3_h2_ref[...], w3_ctx_ref[...], w_hh3_ref[...], b3_ref[...],
        fc_w_ref[...], fc_b_ref[...],
        T=T, B=B, recip=lambda v: pl.reciprocal(v, approx=True))
    out_ref[...] = out
    # Single lane-dense (B, T_pad) attention store (T_pad multiple of 128) instead of T
    # one-lane masked stores; columns scattered with cheap broadcast selects.
    lane = jax.lax.broadcasted_iota(jnp.int32, (B, T_pad), 1)
    att_slab = jnp.zeros((B, T_pad), jnp.float32)
    for t in range(T):
        att_slab = jnp.where(lane == t, att_cols[t], att_slab)
    att_ref[...] = att_slab


# ----------------------------- parameter preparation ---------------------------
def prepare_params(p, dropout_rate=DROPOUT_RATE):
    """Scale-fold dropout and bf16-cast matmul weights; no gate padding (natural widths)."""
    s = 1.0 - dropout_rate
    bf16 = jnp.bfloat16
    f32 = jnp.float32
    w_ih1, w_hh1, b1 = p["lstm1"]          # (F,4H1), (H1,4H1), (1,4H1)
    w_ih2, w_hh2, b2 = p["lstm2"]          # (H1,4H2), (H2,4H2), (1,4H2)
    w_ih3, w_hh3, b3 = p["lstm3"]          # (2H2,4H3), (H3,4H3), (1,4H3)
    return (
        w_ih1.astype(bf16), w_hh1.astype(bf16), b1.astype(f32),
        (w_ih2 * s).astype(bf16), w_hh2.astype(bf16), b2.astype(f32),      # fold lstm1 scale
        (p["att_w"] * s).T.astype(bf16), p["att_b"].astype(f32),           # fold lstm2 scale
        (w_ih3[:H2] * s).astype(bf16), (w_ih3[H2:] * s).astype(bf16),      # out2 / ctx parts
        w_hh3.astype(bf16), b3.astype(f32),
        (p["fc_w"] * s).astype(bf16), p["fc_b"].astype(f32),               # fold lstm3 scale
    )


def _batch_blocking(batch):
    """Per-grid-step batch block (BB) and number of blocks (NB)."""
    b8 = ((batch + 7) // 8) * 8                      # sublane-align
    if b8 <= 128:
        return b8, 1
    bb = 128
    return bb, (b8 + bb - 1) // bb


def _prepare_inputs(params, x, dropout_rate):
    B, T, F = x.shape
    BB, NB = _batch_blocking(B)
    B_pad = BB * NB
    T_pad = ((T + 127) // 128) * 128                 # lane-dense attention output width
    prep = prepare_params(params, dropout_rate)
    x_tm = jnp.transpose(x, (1, 0, 2)).astype(jnp.float32)        # (T, B, F) time-major
    x_tm = jnp.pad(x_tm, ((0, 0), (0, B_pad - B), (0, 0)))
    # (NB, T*BB, F): batch-block major, time-major within each block.
    x_blk = (x_tm.reshape(T, NB, BB, F).transpose(1, 0, 2, 3)
                 .reshape(NB, T * BB, F).astype(jnp.bfloat16))
    meta = dict(B=B, T=T, F=F, BB=BB, NB=NB, B_pad=B_pad, T_pad=T_pad)
    return prep, x_blk, meta


def _vmem_limit_bytes(prep, meta):
    """Rough resident-bytes estimate -> scoped VMEM limit (capped at v7x-safe 64 MiB)."""
    T, BB, F, T_pad = meta["T"], meta["BB"], meta["F"], meta["T_pad"]
    w_bytes = sum(int(w.size) * w.dtype.itemsize for w in prep)
    io_bytes = T * BB * F * 2 + BB * 4 + BB * T_pad * 4
    act_bytes = T * BB * 4 * (H1 + H2 + H3) * 4      # hoisted gate projections (f32)
    act_bytes += T * BB * (H1 + H2) * 6              # h lists (f32) + bf16 flat copies
    est = 2 * (w_bytes + io_bytes) + act_bytes + (4 << 20)
    return int(min(64 << 20, max(32 << 20, est)))


# ----------------------------- public forward ----------------------------------
def stacked_lstm_forward(params, x, dropout_rate=DROPOUT_RATE):
    """x: (B, T, F) batch-first. Returns (output (B,1), attention_weights (B,T,1))."""
    prep, x_blk, m = _prepare_inputs(params, x, dropout_rate)
    B, T, F = m["B"], m["T"], m["F"]
    BB, NB, T_pad = m["BB"], m["NB"], m["T_pad"]
    kernel = functools.partial(_fused_kernel, T=T, B=BB, T_pad=T_pad)

    def full_spec(a):
        zeros = (0,) * a.ndim
        return pl.BlockSpec(a.shape, lambda nb: zeros)   # same block every step -> stays resident

    in_specs = ([pl.BlockSpec((None, T * BB, F), lambda nb: (nb, 0, 0))]
                + [full_spec(w) for w in prep])
    out_specs = (pl.BlockSpec((None, BB, 1), lambda nb: (nb, 0, 0)),
                 pl.BlockSpec((None, BB, T_pad), lambda nb: (nb, 0, 0)))

    out_blk, att_blk = pl.pallas_call(
        kernel,
        grid=(NB,),                                      # batch blocks: parallel (v7x 2 TCs)
        out_shape=(jax.ShapeDtypeStruct((NB, BB, 1), jnp.float32),
                   jax.ShapeDtypeStruct((NB, BB, T_pad), jnp.float32)),
        in_specs=in_specs,
        out_specs=out_specs,
        compiler_params=pltpu.CompilerParams(
            dimension_semantics=("parallel",),
            vmem_limit_bytes=_vmem_limit_bytes(prep, m)),
    )(x_blk, *prep)

    out = out_blk.reshape(NB * BB, 1)[:B]
    att = att_blk.reshape(NB * BB, T_pad)[:B, :T]
    return out, att[:, :, None]


# ----------------------------- references --------------------------------------
def reference_forward_matched(params, x, dropout_rate=DROPOUT_RATE):
    """Pure-JAX reference with numerics matched to the kernel (same prepared bf16 weights)."""
    prep, x_blk, m = _prepare_inputs(params, x, dropout_rate)
    B, T, BB, NB = m["B"], m["T"], m["BB"], m["NB"]
    outs, atts = [], []
    for nb in range(NB):
        out, att_cols = _fused_math(x_blk[nb], *prep, T=T, B=BB, recip=lambda v: 1.0 / v)
        outs.append(out)
        atts.append(jnp.concatenate(att_cols, axis=1))
    out = jnp.concatenate(outs, axis=0)[:B]
    att = jnp.concatenate(atts, axis=0)[:B]
    return out, att[:, :, None]


def _lstm_ref_f32(x_tm, w_ih, w_hh, b):
    h_size = w_hh.shape[0]
    B = x_tm.shape[1]

    def step(carry, x_t):
        h, c = carry
        gates = x_t @ w_ih + h @ w_hh + b
        i = jax.nn.sigmoid(gates[:, :h_size])
        f = jax.nn.sigmoid(gates[:, h_size:2 * h_size])
        g = jnp.tanh(gates[:, 2 * h_size:3 * h_size])
        o = jax.nn.sigmoid(gates[:, 3 * h_size:])
        c = f * c + i * g
        h = o * jnp.tanh(c)
        return (h, c), h

    init = (jnp.zeros((B, h_size), jnp.float32), jnp.zeros((B, h_size), jnp.float32))
    _, ys = jax.lax.scan(step, init, x_tm)
    return ys


def reference_forward(params, x, dropout_rate=DROPOUT_RATE):
    """Faithful f32 reference of the PyTorch forward (apply_dropout=False path)."""
    scale = 1.0 - dropout_rate
    x_tm = jnp.transpose(x, (1, 0, 2)).astype(jnp.float32)
    out1 = _lstm_ref_f32(x_tm, *params["lstm1"]) * scale
    out2 = _lstm_ref_f32(out1, *params["lstm2"]) * scale
    scores = jnp.einsum("tbh,h->tb", out2, params["att_w"][0]) + params["att_b"]
    att = jax.nn.softmax(scores, axis=0)
    ctx = jnp.sum(att[:, :, None] * out2, axis=0)
    T = out2.shape[0]
    combined = jnp.concatenate(
        [out2, jnp.broadcast_to(ctx[None], (T,) + ctx.shape)], axis=-1)
    out3 = _lstm_ref_f32(combined, *params["lstm3"]) * scale
    out = out3[-1] @ params["fc_w"] + params["fc_b"]
    return out, jnp.transpose(att, (1, 0))[:, :, None]


# ----------------------------- param init (deterministic) -----------------------
def init_params(key, input_size):
    def uni(k, shape, bound):
        return jax.random.uniform(k, shape, jnp.float32, -bound, bound)

    keys = jax.random.split(key, 16)

    def lstm_params(k0, k1, k2, k3, d_in, h):
        bound = 1.0 / jnp.sqrt(h)
        w_ih = uni(k0, (d_in, 4 * h), bound)   # (D, 4H): transpose of PyTorch (4H, D); i,f,g,o order
        w_hh = uni(k1, (h, 4 * h), bound)
        b = uni(k2, (1, 4 * h), bound) + uni(k3, (1, 4 * h), bound)  # b_ih + b_hh
        return (w_ih, w_hh, b)

    return {
        "lstm1": lstm_params(keys[0], keys[1], keys[2], keys[3], input_size, H1),
        "lstm2": lstm_params(keys[4], keys[5], keys[6], keys[7], H1, H2),
        "lstm3": lstm_params(keys[8], keys[9], keys[10], keys[11], 2 * H2, H3),
        "att_w": uni(keys[12], (1, H2), 1.0 / jnp.sqrt(H2)),
        "att_b": uni(keys[13], (1, 1), 1.0 / jnp.sqrt(H2)),
        "fc_w": uni(keys[14], (H3, 1), 1.0 / jnp.sqrt(H3)),
        "fc_b": uni(keys[15], (1, 1), 1.0 / jnp.sqrt(H3)),
    }


if __name__ == "__main__":
    B, T, F = 2, 8, 8   # batch, seq_len, input_size

    key = jax.random.PRNGKey(0)
    kx, kp = jax.random.split(key)
    x = jax.random.normal(kx, (B, T, F), jnp.float32)
    params = init_params(kp, F)

    out, att_out = jax.jit(stacked_lstm_forward)(params, x)
    out = jax.block_until_ready(out)
    att_out = jax.block_until_ready(att_out)
    assert out.shape == (B, 1) and att_out.shape == (B, T, 1)

    # Tight check vs a pure-JAX reference with matched (bf16-operand, f32-accumulate) numerics
    # (small slack for the in-kernel approx reciprocal).
    m_out, m_att = jax.jit(reference_forward_matched)(params, x)
    assert jnp.allclose(out, m_out, atol=5e-3, rtol=5e-3)
    assert jnp.allclose(att_out, m_att, atol=5e-3, rtol=5e-3)

    # Loose check vs the faithful full-f32 reference (bf16 weights introduce small drift).
    r_out, r_att = jax.jit(reference_forward)(params, x)
    assert jnp.allclose(out, r_out, atol=5e-2, rtol=5e-2)
    assert jnp.allclose(att_out, r_att, atol=5e-2, rtol=5e-2)

    print("KERNEL_OK")
</pallas_src>

<mosaic_0001>
module attributes {stable_mosaic.version = 11 : i64} {
  func.func @_fused_kernel(%arg0: i32, %arg1: memref<1x64x8xbf16, #tpu.memory_space<vmem>>, %arg2: memref<8x512xbf16, #tpu.memory_space<vmem>>, %arg3: memref<128x512xbf16, #tpu.memory_space<vmem>>, %arg4: memref<1x512xf32, #tpu.memory_space<vmem>>, %arg5: memref<128x256xbf16, #tpu.memory_space<vmem>>, %arg6: memref<64x256xbf16, #tpu.memory_space<vmem>>, %arg7: memref<1x256xf32, #tpu.memory_space<vmem>>, %arg8: memref<64x1xbf16, #tpu.memory_space<vmem>>, %arg9: memref<1x1xf32, #tpu.memory_space<vmem>>, %arg10: memref<64x128xbf16, #tpu.memory_space<vmem>>, %arg11: memref<64x128xbf16, #tpu.memory_space<vmem>>, %arg12: memref<32x128xbf16, #tpu.memory_space<vmem>>, %arg13: memref<1x128xf32, #tpu.memory_space<vmem>>, %arg14: memref<32x1xbf16, #tpu.memory_space<vmem>>, %arg15: memref<1x1xf32, #tpu.memory_space<vmem>>, %arg16: memref<1x8x1xf32, #tpu.memory_space<vmem>>, %arg17: memref<1x8x128xf32, #tpu.memory_space<vmem>>) attributes {dimension_semantics = [#tpu.dimension_semantics<parallel>], iteration_bounds = array<i64: 1>, scalar_prefetch = 0 : i64, scratch_operands = 0 : i64, tpu.core_type = #tpu.core_type<tc>, window_params = [{transform_indices = @transform_0, window_bounds = array<i64: 1, 64, 8>}, {pipeline_mode = #tpu.pipeline_mode<synchronous>, transform_indices = @transform_1, window_bounds = array<i64: 8, 512>}, {pipeline_mode = #tpu.pipeline_mode<synchronous>, transform_indices = @transform_2, window_bounds = array<i64: 128, 512>}, {pipeline_mode = #tpu.pipeline_mode<synchronous>, transform_indices = @transform_3, window_bounds = array<i64: 1, 512>}, {pipeline_mode = #tpu.pipeline_mode<synchronous>, transform_indices = @transform_4, window_bounds = array<i64: 128, 256>}, {pipeline_mode = #tpu.pipeline_mode<synchronous>, transform_indices = @transform_5, window_bounds = array<i64: 64, 256>}, {pipeline_mode = #tpu.pipeline_mode<synchronous>, transform_indices = @transform_6, window_bounds = array<i64: 1, 256>}, {pipeline_mode = #tpu.pipeline_mode<synchronous>, transform_indices = @transform_7, window_bounds = array<i64: 64, 1>}, {pipeline_mode = #tpu.pipeline_mode<synchronous>, transform_indices = @transform_8, window_bounds = array<i64: 1, 1>}, {pipeline_mode = #tpu.pipeline_mode<synchronous>, transform_indices = @transform_9, window_bounds = array<i64: 64, 128>}, {pipeline_mode = #tpu.pipeline_mode<synchronous>, transform_indices = @transform_10, window_bounds = array<i64: 64, 128>}, {pipeline_mode = #tpu.pipeline_mode<synchronous>, transform_indices = @transform_11, window_bounds = array<i64: 32, 128>}, {pipeline_mode = #tpu.pipeline_mode<synchronous>, transform_indices = @transform_12, window_bounds = array<i64: 1, 128>}, {pipeline_mode = #tpu.pipeline_mode<synchronous>, transform_indices = @transform_13, window_bounds = array<i64: 32, 1>}, {pipeline_mode = #tpu.pipeline_mode<synchronous>, transform_indices = @transform_14, window_bounds = array<i64: 1, 1>}, {transform_indices = @transform_15, window_bounds = array<i64: 1, 8, 1>}, {transform_indices = @transform_16, window_bounds = array<i64: 1, 8, 128>}]} {
    %c0 = arith.constant 0 : index
    %c0_0 = arith.constant 0 : index
    %c0_1 = arith.constant 0 : index
    %0 = vector.load %arg1[%c0, %c0_0, %c0_1] : memref<1x64x8xbf16, #tpu.memory_space<vmem>>, vector<1x64x8xbf16>
    %1 = vector.shape_cast %0 : vector<1x64x8xbf16> to vector<64x8xbf16>
    %c0_2 = arith.constant 0 : index
    %c0_3 = arith.constant 0 : index
    %2 = vector.load %arg2[%c0_2, %c0_3] : memref<8x512xbf16, #tpu.memory_space<vmem>>, vector<8x512xbf16>
    %c0_4 = arith.constant 0 : index
    %c0_5 = arith.constant 0 : index
    %3 = vector.load %arg3[%c0_4, %c0_5] : memref<128x512xbf16, #tpu.memory_space<vmem>>, vector<128x512xbf16>
    %c0_6 = arith.constant 0 : index
    %c0_7 = arith.constant 0 : index
    %4 = vector.load %arg4[%c0_6, %c0_7] : memref<1x512xf32, #tpu.memory_space<vmem>>, vector<1x512xf32>
    %c0_8 = arith.constant 0 : index
    %c0_9 = arith.constant 0 : index
    %5 = vector.load %arg5[%c0_8, %c0_9] : memref<128x256xbf16, #tpu.memory_space<vmem>>, vector<128x256xbf16>
    %c0_10 = arith.constant 0 : index
    %c0_11 = arith.constant 0 : index
    %6 = vector.load %arg6[%c0_10, %c0_11] : memref<64x256xbf16, #tpu.memory_space<vmem>>, vector<64x256xbf16>
    %c0_12 = arith.constant 0 : index
    %c0_13 = arith.constant 0 : index
    %7 = vector.load %arg7[%c0_12, %c0_13] : memref<1x256xf32, #tpu.memory_space<vmem>>, vector<1x256xf32>
    %c0_14 = arith.constant 0 : index
    %c0_15 = arith.constant 0 : index
    %8 = vector.load %arg8[%c0_14, %c0_15] : memref<64x1xbf16, #tpu.memory_space<vmem>>, vector<64x1xbf16>
    %c0_16 = arith.constant 0 : index
    %c0_17 = arith.constant 0 : index
    %9 = vector.load %arg9[%c0_16, %c0_17] : memref<1x1xf32, #tpu.memory_space<vmem>>, vector<1x1xf32>
    %c0_18 = arith.constant 0 : index
    %c0_19 = arith.constant 0 : index
    %10 = vector.load %arg10[%c0_18, %c0_19] : memref<64x128xbf16, #tpu.memory_space<vmem>>, vector<64x128xbf16>
    %c0_20 = arith.constant 0 : index
    %c0_21 = arith.constant 0 : index
    %11 = vector.load %arg11[%c0_20, %c0_21] : memref<64x128xbf16, #tpu.memory_space<vmem>>, vector<64x128xbf16>
    %c0_22 = arith.constant 0 : index
    %c0_23 = arith.constant 0 : index
    %12 = vector.load %arg12[%c0_22, %c0_23] : memref<32x128xbf16, #tpu.memory_space<vmem>>, vector<32x128xbf16>
    %c0_24 = arith.constant 0 : index
    %c0_25 = arith.constant 0 : index
    %13 = vector.load %arg13[%c0_24, %c0_25] : memref<1x128xf32, #tpu.memory_space<vmem>>, vector<1x128xf32>
    %c0_26 = arith.constant 0 : index
    %c0_27 = arith.constant 0 : index
    %14 = vector.load %arg14[%c0_26, %c0_27] : memref<32x1xbf16, #tpu.memory_space<vmem>>, vector<32x1xbf16>
    %c0_28 = arith.constant 0 : index
    %c0_29 = arith.constant 0 : index
    %15 = vector.load %arg15[%c0_28, %c0_29] : memref<1x1xf32, #tpu.memory_space<vmem>>, vector<1x1xf32>
    %cst = arith.constant dense<0.000000e+00> : vector<64x512xf32>
    %16 = tpu.matmul %1, %2, %cst {dimension_numbers = #tpu.dot_dimension_numbers<[1], [0], [0], [1], [0, 0, 1, 1], [], []>} : vector<64x8xbf16>, vector<8x512xbf16>, vector<64x512xf32> -> vector<64x512xf32>
    %17 = vector.broadcast %4 : vector<1x512xf32> to vector<64x512xf32>
    %18 = arith.addf %16, %17 : vector<64x512xf32>
    %cst_30 = arith.constant 0.000000e+00 : f32
    %19 = vector.broadcast %cst_30 : f32 to vector<8x128xf32>
    %cst_31 = arith.constant 0.000000e+00 : f32
    %20 = vector.broadcast %cst_31 : f32 to vector<8x128xf32>
    %21 = vector.extract_strided_slice %18 {offsets = [0, 0], sizes = [8, 512], strides = [1, 1]} : vector<64x512xf32> to vector<8x512xf32>
    %22 = arith.truncf %19 : vector<8x128xf32> to vector<8x128xbf16>
    %cst_32 = arith.constant dense<0.000000e+00> : vector<8x512xf32>
    %23 = tpu.matmul %22, %3, %cst_32 {dimension_numbers = #tpu.dot_dimension_numbers<[1], [0], [0], [1], [0, 0, 1, 1], [], []>} : vector<8x128xbf16>, vector<128x512xbf16>, vector<8x512xf32> -> vector<8x512xf32>
    %24 = arith.addf %21, %23 : vector<8x512xf32>
    %25 = vector.extract_strided_slice %24 {offsets = [0, 0], sizes = [8, 128], strides = [1, 1]} : vector<8x512xf32> to vector<8x128xf32>
    %26 = arith.negf %25 : vector<8x128xf32>
    %27 = math.exp %26 : vector<8x128xf32>
    %cst_33 = arith.constant 1.000000e+00 : f32
    %28 = vector.broadcast %cst_33 : f32 to vector<8x128xf32>
    %29 = arith.addf %28, %27 : vector<8x128xf32>
    %30 = arith.divf %28, %29 : vector<8x128xf32>
    %31 = vector.extract_strided_slice %24 {offsets = [0, 128], sizes = [8, 128], strides = [1, 1]} : vector<8x512xf32> to vector<8x128xf32>
    %32 = arith.negf %31 : vector<8x128xf32>
    %33 = math.exp %32 : vector<8x128xf32>
    %cst_34 = arith.constant 1.000000e+00 : f32
    %34 = vector.broadcast %cst_34 : f32 to vector<8x128xf32>
    %35 = arith.addf %34, %33 : vector<8x128xf32>
    %36 = arith.divf %34, %35 : vector<8x128xf32>
    %37 = vector.extract_strided_slice %24 {offsets = [0, 256], sizes = [8, 128], strides = [1, 1]} : vector<8x512xf32> to vector<8x128xf32>
    %38 = math.tanh %37 : vector<8x128xf32>
    %39 = vector.extract_strided_slice %24 {offsets = [0, 384], sizes = [8, 128], strides = [1, 1]} : vector<8x512xf32> to vector<8x128xf32>
    %40 = arith.negf %39 : vector<8x128xf32>
    %41 = math.exp %40 : vector<8x128xf32>
    %cst_35 = arith.constant 1.000000e+00 : f32
    %42 = vector.broadcast %cst_35 : f32 to vector<8x128xf32>
    %43 = arith.addf %42, %41 : vector<8x128xf32>
    %44 = arith.divf %42, %43 : vector<8x128xf32>
    %45 = arith.mulf %36, %20 : vector<8x128xf32>
    %46 = arith.mulf %30, %38 : vector<8x128xf32>
    %47 = arith.addf %45, %46 : vector<8x128xf32>
    %48 = math.tanh %47 : vector<8x128xf32>
    %49 = arith.mulf %44, %48 : vector<8x128xf32>
    %50 = vector.extract_strided_slice %18 {offsets = [8, 0], sizes = [8, 512], strides = [1, 1]} : vector<64x512xf32> to vector<8x512xf32>
    %51 = arith.truncf %49 : vector<8x128xf32> to vector<8x128xbf16>
    %cst_36 = arith.constant dense<0.000000e+00> : vector<8x512xf32>
    %52 = tpu.matmul %51, %3, %cst_36 {dimension_numbers = #tpu.dot_dimension_numbers<[1], [0], [0], [1], [0, 0, 1, 1], [], []>} : vector<8x128xbf16>, vector<128x512xbf16>, vector<8x512xf32> -> vector<8x512xf32>
    %53 = arith.addf %50, %52 : vector<8x512xf32>
    %54 = vector.extract_strided_slice %53 {offsets = [0, 0], sizes = [8, 128], strides = [1, 1]} : vector<8x512xf32> to vector<8x128xf32>
    %55 = arith.negf %54 : vector<8x128xf32>
    %56 = math.exp %55 : vector<8x128xf32>
    %cst_37 = arith.constant 1.000000e+00 : f32
    %57 = vector.broadcast %cst_37 : f32 to vector<8x128xf32>
    %58 = arith.addf %57, %56 : vector<8x128xf32>
    %59 = arith.divf %57, %58 : vector<8x128xf32>
    %60 = vector.extract_strided_slice %53 {offsets = [0, 128], sizes = [8, 128], strides = [1, 1]} : vector<8x512xf32> to vector<8x128xf32>
    %61 = arith.negf %60 : vector<8x128xf32>
    %62 = math.exp %61 : vector<8x128xf32>
    %cst_38 = arith.constant 1.000000e+00 : f32
    %63 = vector.broadcast %cst_38 : f32 to vector<8x128xf32>
    %64 = arith.addf %63, %62 : vector<8x128xf32>
    %65 = arith.divf %63, %64 : vector<8x128xf32>
    %66 = vector.extract_strided_slice %53 {offsets = [0, 256], sizes = [8, 128], strides = [1, 1]} : vector<8x512xf32> to vector<8x128xf32>
    %67 = math.tanh %66 : vector<8x128xf32>
    %68 = vector.extract_strided_slice %53 {offsets = [0, 384], sizes = [8, 128], strides = [1, 1]} : vector<8x512xf32> to vector<8x128xf32>
    %69 = arith.negf %68 : vector<8x128xf32>
    %70 = math.exp %69 : vector<8x128xf32>
    %cst_39 = arith.constant 1.000000e+00 : f32
    %71 = vector.broadcast %cst_39 : f32 to vector<8x128xf32>
    %72 = arith.addf %71, %70 : vector<8x128xf32>
    %73 = arith.divf %71, %72 : vector<8x128xf32>
    %74 = arith.mulf %65, %47 : vector<8x128xf32>
    %75 = arith.mulf %59, %67 : vector<8x128xf32>
    %76 = arith.addf %74, %75 : vector<8x128xf32>
    %77 = math.tanh %76 : vector<8x128xf32>
    %78 = arith.mulf %73, %77 : vector<8x128xf32>
    %79 = vector.extract_strided_slice %18 {offsets = [16, 0], sizes = [8, 512], strides = [1, 1]} : vector<64x512xf32> to vector<8x512xf32>
    %80 = arith.truncf %78 : vector<8x128xf32> to vector<8x128xbf16>
    %cst_40 = arith.constant dense<0.000000e+00> : vector<8x512xf32>
    %81 = tpu.matmul %80, %3, %cst_40 {dimension_numbers = #tpu.dot_dimension_numbers<[1], [0], [0], [1], [0, 0, 1, 1], [], []>} : vector<8x128xbf16>, vector<128x512xbf16>, vector<8x512xf32> -> vector<8x512xf32>
    %82 = arith.addf %79, %81 : vector<8x512xf32>
    %83 = vector.extract_strided_slice %82 {offsets = [0, 0], sizes = [8, 128], strides = [1, 1]} : vector<8x512xf32> to vector<8x128xf32>
    %84 = arith.negf %83 : vector<8x128xf32>
    %85 = math.exp %84 : vector<8x128xf32>
    %cst_41 = arith.constant 1.000000e+00 : f32
    %86 = vector.broadcast %cst_41 : f32 to vector<8x128xf32>
    %87 = arith.addf %86, %85 : vector<8x128xf32>
    %88 = arith.divf %86, %87 : vector<8x128xf32>
    %89 = vector.extract_strided_slice %82 {offsets = [0, 128], sizes = [8, 128], strides = [1, 1]} : vector<8x512xf32> to vector<8x128xf32>
    %90 = arith.negf %89 : vector<8x128xf32>
    %91 = math.exp %90 : vector<8x128xf32>
    %cst_42 = arith.constant 1.000000e+00 : f32
    %92 = vector.broadcast %cst_42 : f32 to vector<8x128xf32>
    %93 = arith.addf %92, %91 : vector<8x128xf32>
    %94 = arith.divf %92, %93 : vector<8x128xf32>
    %95 = vector.extract_strided_slice %82 {offsets = [0, 256], sizes = [8, 128], strides = [1, 1]} : vector<8x512xf32> to vector<8x128xf32>
    %96 = math.tanh %95 : vector<8x128xf32>
    %97 = vector.extract_strided_slice %82 {offsets = [0, 384], sizes = [8, 128], strides = [1, 1]} : vector<8x512xf32> to vector<8x128xf32>
    %98 = arith.negf %97 : vector<8x128xf32>
    %99 = math.exp %98 : vector<8x128xf32>
    %cst_43 = arith.constant 1.000000e+00 : f32
    %100 = vector.broadcast %cst_43 : f32 to vector<8x128xf32>
    %101 = arith.addf %100, %99 : vector<8x128xf32>
    %102 = arith.divf %100, %101 : vector<8x128xf32>
    %103 = arith.mulf %94, %76 : vector<8x128xf32>
    %104 = arith.mulf %88, %96 : vector<8x128xf32>
    %105 = arith.addf %103, %104 : vector<8x128xf32>
    %106 = math.tanh %105 : vector<8x128xf32>
    %107 = arith.mulf %102, %106 : vector<8x128xf32>
    %108 = vector.extract_strided_slice %18 {offsets = [24, 0], sizes = [8, 512], strides = [1, 1]} : vector<64x512xf32> to vector<8x512xf32>
    %109 = arith.truncf %107 : vector<8x128xf32> to vector<8x128xbf16>
    %cst_44 = arith.constant dense<0.000000e+00> : vector<8x512xf32>
    %110 = tpu.matmul %109, %3, %cst_44 {dimension_numbers = #tpu.dot_dimension_numbers<[1], [0], [0], [1], [0, 0, 1, 1], [], []>} : vector<8x128xbf16>, vector<128x512xbf16>, vector<8x512xf32> -> vector<8x512xf32>
    %111 = arith.addf %108, %110 : vector<8x512xf32>
    %112 = vector.extract_strided_slice %111 {offsets = [0, 0], sizes = [8, 128], strides = [1, 1]} : vector<8x512xf32> to vector<8x128xf32>
    %113 = arith.negf %112 : vector<8x128xf32>
    %114 = math.exp %113 : vector<8x128xf32>
    %cst_45 = arith.constant 1.000000e+00 : f32
    %115 = vector.broadcast %cst_45 : f32 to vector<8x128xf32>
    %116 = arith.addf %115, %114 : vector<8x128xf32>
    %117 = arith.divf %115, %116 : vector<8x128xf32>
    %118 = vector.extract_strided_slice %111 {offsets = [0, 128], sizes = [8, 128], strides = [1, 1]} : vector<8x512xf32> to vector<8x128xf32>
    %119 = arith.negf %118 : vector<8x128xf32>
    %120 = math.exp %119 : vector<8x128xf32>
    %cst_46 = arith.constant 1.000000e+00 : f32
    %121 = vector.broadcast %cst_46 : f32 to vector<8x128xf32>
    %122 = arith.addf %121, %120 : vector<8x128xf32>
    %123 = arith.divf %121, %122 : vector<8x128xf32>
    %124 = vector.extract_strided_slice %111 {offsets = [0, 256], sizes = [8, 128], strides = [1, 1]} : vector<8x512xf32> to vector<8x128xf32>
    %125 = math.tanh %124 : vector<8x128xf32>
    %126 = vector.extract_strided_slice %111 {offsets = [0, 384], sizes = [8, 128], strides = [1, 1]} : vector<8x512xf32> to vector<8x128xf32>
    %127 = arith.negf %126 : vector<8x128xf32>
    %128 = math.exp %127 : vector<8x128xf32>
    %cst_47 = arith.constant 1.000000e+00 : f32
    %129 = vector.broadcast %cst_47 : f32 to vector<8x128xf32>
    %130 = arith.addf %129, %128 : vector<8x128xf32>
    %131 = arith.divf %129, %130 : vector<8x128xf32>
    %132 = arith.mulf %123, %105 : vector<8x128xf32>
    %133 = arith.mulf %117, %125 : vector<8x128xf32>
    %134 = arith.addf %132, %133 : vector<8x128xf32>
    %135 = math.tanh %134 : vector<8x128xf32>
    %136 = arith.mulf %131, %135 : vector<8x128xf32>
    %137 = vector.extract_strided_slice %18 {offsets = [32, 0], sizes = [8, 512], strides = [1, 1]} : vector<64x512xf32> to vector<8x512xf32>
    %138 = arith.truncf %136 : vector<8x128xf32> to vector<8x128xbf16>
    %cst_48 = arith.constant dense<0.000000e+00> : vector<8x512xf32>
    %139 = tpu.matmul %138, %3, %cst_48 {dimension_numbers = #tpu.dot_dimension_numbers<[1], [0], [0], [1], [0, 0, 1, 1], [], []>} : vector<8x128xbf16>, vector<128x512xbf16>, vector<8x512xf32> -> vector<8x512xf32>
    %140 = arith.addf %137, %139 : vector<8x512xf32>
    %141 = vector.extract_strided_slice %140 {offsets = [0, 0], sizes = [8, 128], strides = [1, 1]} : vector<8x512xf32> to vector<8x128xf32>
    %142 = arith.negf %141 : vector<8x128xf32>
    %143 = math.exp %142 : vector<8x128xf32>
    %cst_49 = arith.constant 1.000000e+00 : f32
    %144 = vector.broadcast %cst_49 : f32 to vector<8x128xf32>
    %145 = arith.addf %144, %143 : vector<8x128xf32>
    %146 = arith.divf %144, %145 : vector<8x128xf32>
    %147 = vector.extract_strided_slice %140 {offsets = [0, 128], sizes = [8, 128], strides = [1, 1]} : vector<8x512xf32> to vector<8x128xf32>
    %148 = arith.negf %147 : vector<8x128xf32>
    %149 = math.exp %148 : vector<8x128xf32>
    %cst_50 = arith.constant 1.000000e+00 : f32
    %150 = vector.broadcast %cst_50 : f32 to vector<8x128xf32>
    %151 = arith.addf %150, %149 : vector<8x128xf32>
    %152 = arith.divf %150, %151 : vector<8x128xf32>
    %153 = vector.extract_strided_slice %140 {offsets = [0, 256], sizes = [8, 128], strides = [1, 1]} : vector<8x512xf32> to vector<8x128xf32>
    %154 = math.tanh %153 : vector<8x128xf32>
    %155 = vector.extract_strided_slice %140 {offsets = [0, 384], sizes = [8, 128], strides = [1, 1]} : vector<8x512xf32> to vector<8x128xf32>
    %156 = arith.negf %155 : vector<8x128xf32>
    %157 = math.exp %156 : vector<8x128xf32>
    %cst_51 = arith.constant 1.000000e+00 : f32
    %158 = vector.broadcast %cst_51 : f32 to vector<8x128xf32>
    %159 = arith.addf %158, %157 : vector<8x128xf32>
    %160 = arith.divf %158, %159 : vector<8x128xf32>
    %161 = arith.mulf %152, %134 : vector<8x128xf32>
    %162 = arith.mulf %146, %154 : vector<8x128xf32>
    %163 = arith.addf %161, %162 : vector<8x128xf32>
    %164 = math.tanh %163 : vector<8x128xf32>
    %165 = arith.mulf %160, %164 : vector<8x128xf32>
    %166 = vector.extract_strided_slice %18 {offsets = [40, 0], sizes = [8, 512], strides = [1, 1]} : vector<64x512xf32> to vector<8x512xf32>
    %167 = arith.truncf %165 : vector<8x128xf32> to vector<8x128xbf16>
    %cst_52 = arith.constant dense<0.000000e+00> : vector<8x512xf32>
    %168 = tpu.matmul %167, %3, %cst_52 {dimension_numbers = #tpu.dot_dimension_numbers<[1], [0], [0], [1], [0, 0, 1, 1], [], []>} : vector<8x128xbf16>, vector<128x512xbf16>, vector<8x512xf32> -> vector<8x512xf32>
    %169 = arith.addf %166, %168 : vector<8x512xf32>
    %170 = vector.extract_strided_slice %169 {offsets = [0, 0], sizes = [8, 128], strides = [1, 1]} : vector<8x512xf32> to vector<8x128xf32>
    %171 = arith.negf %170 : vector<8x128xf32>
    %172 = math.exp %171 : vector<8x128xf32>
    %cst_53 = arith.constant 1.000000e+00 : f32
    %173 = vector.broadcast %cst_53 : f32 to vector<8x128xf32>
    %174 = arith.addf %173, %172 : vector<8x128xf32>
    %175 = arith.divf %173, %174 : vector<8x128xf32>
    %176 = vector.extract_strided_slice %169 {offsets = [0, 128], sizes = [8, 128], strides = [1, 1]} : vector<8x512xf32> to vector<8x128xf32>
    %177 = arith.negf %176 : vector<8x128xf32>
    %178 = math.exp %177 : vector<8x128xf32>
    %cst_54 = arith.constant 1.000000e+00 : f32
    %179 = vector.broadcast %cst_54 : f32 to vector<8x128xf32>
    %180 = arith.addf %179, %178 : vector<8x128xf32>
    %181 = arith.divf %179, %180 : vector<8x128xf32>
    %182 = vector.extract_strided_slice %169 {offsets = [0, 256], sizes = [8, 128], strides = [1, 1]} : vector<8x512xf32> to vector<8x128xf32>
    %183 = math.tanh %182 : vector<8x128xf32>
    %184 = vector.extract_strided_slice %169 {offsets = [0, 384], sizes = [8, 128], strides = [1, 1]} : vector<8x512xf32> to vector<8x128xf32>
    %185 = arith.negf %184 : vector<8x128xf32>
    %186 = math.exp %185 : vector<8x128xf32>
    %cst_55 = arith.constant 1.000000e+00 : f32
    %187 = vector.broadcast %cst_55 : f32 to vector<8x128xf32>
    %188 = arith.addf %187, %186 : vector<8x128xf32>
    %189 = arith.divf %187, %188 : vector<8x128xf32>
    %190 = arith.mulf %181, %163 : vector<8x128xf32>
    %191 = arith.mulf %175, %183 : vector<8x128xf32>
    %192 = arith.addf %190, %191 : vector<8x128xf32>
    %193 = math.tanh %192 : vector<8x128xf32>
    %194 = arith.mulf %189, %193 : vector<8x128xf32>
    %195 = vector.extract_strided_slice %18 {offsets = [48, 0], sizes = [8, 512], strides = [1, 1]} : vector<64x512xf32> to vector<8x512xf32>
    %196 = arith.truncf %194 : vector<8x128xf32> to vector<8x128xbf16>
    %cst_56 = arith.constant dense<0.000000e+00> : vector<8x512xf32>
    %197 = tpu.matmul %196, %3, %cst_56 {dimension_numbers = #tpu.dot_dimension_numbers<[1], [0], [0], [1], [0, 0, 1, 1], [], []>} : vector<8x128xbf16>, vector<128x512xbf16>, vector<8x512xf32> -> vector<8x512xf32>
    %198 = arith.addf %195, %197 : vector<8x512xf32>
    %199 = vector.extract_strided_slice %198 {offsets = [0, 0], sizes = [8, 128], strides = [1, 1]} : vector<8x512xf32> to vector<8x128xf32>
    %200 = arith.negf %199 : vector<8x128xf32>
    %201 = math.exp %200 : vector<8x128xf32>
    %cst_57 = arith.constant 1.000000e+00 : f32
    %202 = vector.broadcast %cst_57 : f32 to vector<8x128xf32>
    %203 = arith.addf %202, %201 : vector<8x128xf32>
    %204 = arith.divf %202, %203 : vector<8x128xf32>
    %205 = vector.extract_strided_slice %198 {offsets = [0, 128], sizes = [8, 128], strides = [1, 1]} : vector<8x512xf32> to vector<8x128xf32>
    %206 = arith.negf %205 : vector<8x128xf32>
    %207 = math.exp %206 : vector<8x128xf32>
    %cst_58 = arith.constant 1.000000e+00 : f32
    %208 = vector.broadcast %cst_58 : f32 to vector<8x128xf32>
    %209 = arith.addf %208, %207 : vector<8x128xf32>
    %210 = arith.divf %208, %209 : vector<8x128xf32>
    %211 = vector.extract_strided_slice %198 {offsets = [0, 256], sizes = [8, 128], strides = [1, 1]} : vector<8x512xf32> to vector<8x128xf32>
    %212 = math.tanh %211 : vector<8x128xf32>
    %213 = vector.extract_strided_slice %198 {offsets = [0, 384], sizes = [8, 128], strides = [1, 1]} : vector<8x512xf32> to vector<8x128xf32>
    %214 = arith.negf %213 : vector<8x128xf32>
    %215 = math.exp %214 : vector<8x128xf32>
    %cst_59 = arith.constant 1.000000e+00 : f32
    %216 = vector.broadcast %cst_59 : f32 to vector<8x128xf32>
    %217 = arith.addf %216, %215 : vector<8x128xf32>
    %218 = arith.divf %216, %217 : vector<8x128xf32>
    %219 = arith.mulf %210, %192 : vector<8x128xf32>
    %220 = arith.mulf %204, %212 : vector<8x128xf32>
    %221 = arith.addf %219, %220 : vector<8x128xf32>
    %222 = math.tanh %221 : vector<8x128xf32>
    %223 = arith.mulf %218, %222 : vector<8x128xf32>
    %224 = vector.extract_strided_slice %18 {offsets = [56, 0], sizes = [8, 512], strides = [1, 1]} : vector<64x512xf32> to vector<8x512xf32>
    %225 = arith.truncf %223 : vector<8x128xf32> to vector<8x128xbf16>
    %cst_60 = arith.constant dense<0.000000e+00> : vector<8x512xf32>
    %226 = tpu.matmul %225, %3, %cst_60 {dimension_numbers = #tpu.dot_dimension_numbers<[1], [0], [0], [1], [0, 0, 1, 1], [], []>} : vector<8x128xbf16>, vector<128x512xbf16>, vector<8x512xf32> -> vector<8x512xf32>
    %227 = arith.addf %224, %226 : vector<8x512xf32>
    %228 = vector.extract_strided_slice %227 {offsets = [0, 0], sizes = [8, 128], strides = [1, 1]} : vector<8x512xf32> to vector<8x128xf32>
    %229 = arith.negf %228 : vector<8x128xf32>
    %230 = math.exp %229 : vector<8x128xf32>
    %cst_61 = arith.constant 1.000000e+00 : f32
    %231 = vector.broadcast %cst_61 : f32 to vector<8x128xf32>
    %232 = arith.addf %231, %230 : vector<8x128xf32>
    %233 = arith.divf %231, %232 : vector<8x128xf32>
    %234 = vector.extract_strided_slice %227 {offsets = [0, 128], sizes = [8, 128], strides = [1, 1]} : vector<8x512xf32> to vector<8x128xf32>
    %235 = arith.negf %234 : vector<8x128xf32>
    %236 = math.exp %235 : vector<8x128xf32>
    %cst_62 = arith.constant 1.000000e+00 : f32
    %237 = vector.broadcast %cst_62 : f32 to vector<8x128xf32>
    %238 = arith.addf %237, %236 : vector<8x128xf32>
    %239 = arith.divf %237, %238 : vector<8x128xf32>
    %240 = vector.extract_strided_slice %227 {offsets = [0, 256], sizes = [8, 128], strides = [1, 1]} : vector<8x512xf32> to vector<8x128xf32>
    %241 = math.tanh %240 : vector<8x128xf32>
    %242 = vector.extract_strided_slice %227 {offsets = [0, 384], sizes = [8, 128], strides = [1, 1]} : vector<8x512xf32> to vector<8x128xf32>
    %243 = arith.negf %242 : vector<8x128xf32>
    %244 = math.exp %243 : vector<8x128xf32>
    %cst_63 = arith.constant 1.000000e+00 : f32
    %245 = vector.broadcast %cst_63 : f32 to vector<8x128xf32>
    %246 = arith.addf %245, %244 : vector<8x128xf32>
    %247 = arith.divf %245, %246 : vector<8x128xf32>
    %248 = arith.mulf %239, %221 : vector<8x128xf32>
    %249 = arith.mulf %233, %241 : vector<8x128xf32>
    %250 = arith.addf %248, %249 : vector<8x128xf32>
    %251 = math.tanh %250 : vector<8x128xf32>
    %252 = arith.mulf %247, %251 : vector<8x128xf32>
    %253 = tpu.concatenate %49, %78, %107, %136, %165, %194, %223, %252 in 0 : vector<8x128xf32>, vector<8x128xf32>, vector<8x128xf32>, vector<8x128xf32>, vector<8x128xf32>, vector<8x128xf32>, vector<8x128xf32>, vector<8x128xf32> -> vector<64x128xf32>
    %254 = arith.truncf %253 : vector<64x128xf32> to vector<64x128xbf16>
    %cst_64 = arith.constant dense<0.000000e+00> : vector<64x256xf32>
    %255 = tpu.matmul %254, %5, %cst_64 {dimension_numbers = #tpu.dot_dimension_numbers<[1], [0], [0], [1], [0, 0, 1, 1], [], []>} : vector<64x128xbf16>, vector<128x256xbf16>, vector<64x256xf32> -> vector<64x256xf32>
    %256 = vector.broadcast %7 : vector<1x256xf32> to vector<64x256xf32>
    %257 = arith.addf %255, %256 : vector<64x256xf32>
    %cst_65 = arith.constant 0.000000e+00 : f32
    %258 = vector.broadcast %cst_65 : f32 to vector<8x64xf32>
    %cst_66 = arith.constant 0.000000e+00 : f32
    %259 = vector.broadcast %cst_66 : f32 to vector<8x64xf32>
    %260 = vector.extract_strided_slice %257 {offsets = [0, 0], sizes = [8, 256], strides = [1, 1]} : vector<64x256xf32> to vector<8x256xf32>
    %261 = arith.truncf %258 : vector<8x64xf32> to vector<8x64xbf16>
    %cst_67 = arith.constant dense<0.000000e+00> : vector<8x256xf32>
    %262 = tpu.matmul %261, %6, %cst_67 {dimension_numbers = #tpu.dot_dimension_numbers<[1], [0], [0], [1], [0, 0, 1, 1], [], []>} : vector<8x64xbf16>, vector<64x256xbf16>, vector<8x256xf32> -> vector<8x256xf32>
    %263 = arith.addf %260, %262 : vector<8x256xf32>
    %264 = vector.extract_strided_slice %263 {offsets = [0, 0], sizes = [8, 64], strides = [1, 1]} : vector<8x256xf32> to vector<8x64xf32>
    %265 = arith.negf %264 : vector<8x64xf32>
    %266 = math.exp %265 : vector<8x64xf32>
    %cst_68 = arith.constant 1.000000e+00 : f32
    %267 = vector.broadcast %cst_68 : f32 to vector<8x64xf32>
    %268 = arith.addf %267, %266 : vector<8x64xf32>
    %269 = arith.divf %267, %268 : vector<8x64xf32>
    %270 = vector.extract_strided_slice %263 {offsets = [0, 64], sizes = [8, 64], strides = [1, 1]} : vector<8x256xf32> to vector<8x64xf32>
    %271 = arith.negf %270 : vector<8x64xf32>
    %272 = math.exp %271 : vector<8x64xf32>
    %cst_69 = arith.constant 1.000000e+00 : f32
    %273 = vector.broadcast %cst_69 : f32 to vector<8x64xf32>
    %274 = arith.addf %273, %272 : vector<8x64xf32>
    %275 = arith.divf %273, %274 : vector<8x64xf32>
    %276 = vector.extract_strided_slice %263 {offsets = [0, 128], sizes = [8, 64], strides = [1, 1]} : vector<8x256xf32> to vector<8x64xf32>
    %277 = math.tanh %276 : vector<8x64xf32>
    %278 = vector.extract_strided_slice %263 {offsets = [0, 192], sizes = [8, 64], strides = [1, 1]} : vector<8x256xf32> to vector<8x64xf32>
    %279 = arith.negf %278 : vector<8x64xf32>
    %280 = math.exp %279 : vector<8x64xf32>
    %cst_70 = arith.constant 1.000000e+00 : f32
    %281 = vector.broadcast %cst_70 : f32 to vector<8x64xf32>
    %282 = arith.addf %281, %280 : vector<8x64xf32>
    %283 = arith.divf %281, %282 : vector<8x64xf32>
    %284 = arith.mulf %275, %259 : vector<8x64xf32>
    %285 = arith.mulf %269, %277 : vector<8x64xf32>
    %286 = arith.addf %284, %285 : vector<8x64xf32>
    %287 = math.tanh %286 : vector<8x64xf32>
    %288 = arith.mulf %283, %287 : vector<8x64xf32>
    %289 = vector.extract_strided_slice %257 {offsets = [8, 0], sizes = [8, 256], strides = [1, 1]} : vector<64x256xf32> to vector<8x256xf32>
    %290 = arith.truncf %288 : vector<8x64xf32> to vector<8x64xbf16>
    %cst_71 = arith.constant dense<0.000000e+00> : vector<8x256xf32>
    %291 = tpu.matmul %290, %6, %cst_71 {dimension_numbers = #tpu.dot_dimension_numbers<[1], [0], [0], [1], [0, 0, 1, 1], [], []>} : vector<8x64xbf16>, vector<64x256xbf16>, vector<8x256xf32> -> vector<8x256xf32>
    %292 = arith.addf %289, %291 : vector<8x256xf32>
    %293 = vector.extract_strided_slice %292 {offsets = [0, 0], sizes = [8, 64], strides = [1, 1]} : vector<8x256xf32> to vector<8x64xf32>
    %294 = arith.negf %293 : vector<8x64xf32>
    %295 = math.exp %294 : vector<8x64xf32>
    %cst_72 = arith.constant 1.000000e+00 : f32
    %296 = vector.broadcast %cst_72 : f32 to vector<8x64xf32>
    %297 = arith.addf %296, %295 : vector<8x64xf32>
    %298 = arith.divf %296, %297 : vector<8x64xf32>
    %299 = vector.extract_strided_slice %292 {offsets = [0, 64], sizes = [8, 64], strides = [1, 1]} : vector<8x256xf32> to vector<8x64xf32>
    %300 = arith.negf %299 : vector<8x64xf32>
    %301 = math.exp %300 : vector<8x64xf32>
    %cst_73 = arith.constant 1.000000e+00 : f32
    %302 = vector.broadcast %cst_73 : f32 to vector<8x64xf32>
    %303 = arith.addf %302, %301 : vector<8x64xf32>
    %304 = arith.divf %302, %303 : vector<8x64xf32>
    %305 = vector.extract_strided_slice %292 {offsets = [0, 128], sizes = [8, 64], strides = [1, 1]} : vector<8x256xf32> to vector<8x64xf32>
    %306 = math.tanh %305 : vector<8x64xf32>
    %307 = vector.extract_strided_slice %292 {offsets = [0, 192], sizes = [8, 64], strides = [1, 1]} : vector<8x256xf32> to vector<8x64xf32>
    %308 = arith.negf %307 : vector<8x64xf32>
    %309 = math.exp %308 : vector<8x64xf32>
    %cst_74 = arith.constant 1.000000e+00 : f32
    %310 = vector.broadcast %cst_74 : f32 to vector<8x64xf32>
    %311 = arith.addf %310, %309 : vector<8x64xf32>
    %312 = arith.divf %310, %311 : vector<8x64xf32>
    %313 = arith.mulf %304, %286 : vector<8x64xf32>
    %314 = arith.mulf %298, %306 : vector<8x64xf32>
    %315 = arith.addf %313, %314 : vector<8x64xf32>
    %316 = math.tanh %315 : vector<8x64xf32>
    %317 = arith.mulf %312, %316 : vector<8x64xf32>
    %318 = vector.extract_strided_slice %257 {offsets = [16, 0], sizes = [8, 256], strides = [1, 1]} : vector<64x256xf32> to vector<8x256xf32>
    %319 = arith.truncf %317 : vector<8x64xf32> to vector<8x64xbf16>
    %cst_75 = arith.constant dense<0.000000e+00> : vector<8x256xf32>
    %320 = tpu.matmul %319, %6, %cst_75 {dimension_numbers = #tpu.dot_dimension_numbers<[1], [0], [0], [1], [0, 0, 1, 1], [], []>} : vector<8x64xbf16>, vector<64x256xbf16>, vector<8x256xf32> -> vector<8x256xf32>
    %321 = arith.addf %318, %320 : vector<8x256xf32>
    %322 = vector.extract_strided_slice %321 {offsets = [0, 0], sizes = [8, 64], strides = [1, 1]} : vector<8x256xf32> to vector<8x64xf32>
    %323 = arith.negf %322 : vector<8x64xf32>
    %324 = math.exp %323 : vector<8x64xf32>
    %cst_76 = arith.constant 1.000000e+00 : f32
    %325 = vector.broadcast %cst_76 : f32 to vector<8x64xf32>
    %326 = arith.addf %325, %324 : vector<8x64xf32>
    %327 = arith.divf %325, %326 : vector<8x64xf32>
    %328 = vector.extract_strided_slice %321 {offsets = [0, 64], sizes = [8, 64], strides = [1, 1]} : vector<8x256xf32> to vector<8x64xf32>
    %329 = arith.negf %328 : vector<8x64xf32>
    %330 = math.exp %329 : vector<8x64xf32>
    %cst_77 = arith.constant 1.000000e+00 : f32
    %331 = vector.broadcast %cst_77 : f32 to vector<8x64xf32>
    %332 = arith.addf %331, %330 : vector<8x64xf32>
    %333 = arith.divf %331, %332 : vector<8x64xf32>
    %334 = vector.extract_strided_slice %321 {offsets = [0, 128], sizes = [8, 64], strides = [1, 1]} : vector<8x256xf32> to vector<8x64xf32>
    %335 = math.tanh %334 : vector<8x64xf32>
    %336 = vector.extract_strided_slice %321 {offsets = [0, 192], sizes = [8, 64], strides = [1, 1]} : vector<8x256xf32> to vector<8x64xf32>
    %337 = arith.negf %336 : vector<8x64xf32>
    %338 = math.exp %337 : vector<8x64xf32>
    %cst_78 = arith.constant 1.000000e+00 : f32
    %339 = vector.broadcast %cst_78 : f32 to vector<8x64xf32>
    %340 = arith.addf %339, %338 : vector<8x64xf32>
    %341 = arith.divf %339, %340 : vector<8x64xf32>
    %342 = arith.mulf %333, %315 : vector<8x64xf32>
    %343 = arith.mulf %327, %335 : vector<8x64xf32>
    %344 = arith.addf %342, %343 : vector<8x64xf32>
    %345 = math.tanh %344 : vector<8x64xf32>
    %346 = arith.mulf %341, %345 : vector<8x64xf32>
    %347 = vector.extract_strided_slice %257 {offsets = [24, 0], sizes = [8, 256], strides = [1, 1]} : vector<64x256xf32> to vector<8x256xf32>
    %348 = arith.truncf %346 : vector<8x64xf32> to vector<8x64xbf16>
    %cst_79 = arith.constant dense<0.000000e+00> : vector<8x256xf32>
    %349 = tpu.matmul %348, %6, %cst_79 {dimension_numbers = #tpu.dot_dimension_numbers<[1], [0], [0], [1], [0, 0, 1, 1], [], []>} : vector<8x64xbf16>, vector<64x256xbf16>, vector<8x256xf32> -> vector<8x256xf32>
    %350 = arith.addf %347, %349 : vector<8x256xf32>
    %351 = vector.extract_strided_slice %350 {offsets = [0, 0], sizes = [8, 64], strides = [1, 1]} : vector<8x256xf32> to vector<8x64xf32>
    %352 = arith.negf %351 : vector<8x64xf32>
    %353 = math.exp %352 : vector<8x64xf32>
    %cst_80 = arith.constant 1.000000e+00 : f32
    %354 = vector.broadcast %cst_80 : f32 to vector<8x64xf32>
    %355 = arith.addf %354, %353 : vector<8x64xf32>
    %356 = arith.divf %354, %355 : vector<8x64xf32>
    %357 = vector.extract_strided_slice %350 {offsets = [0, 64], sizes = [8, 64], strides = [1, 1]} : vector<8x256xf32> to vector<8x64xf32>
    %358 = arith.negf %357 : vector<8x64xf32>
    %359 = math.exp %358 : vector<8x64xf32>
    %cst_81 = arith.constant 1.000000e+00 : f32
    %360 = vector.broadcast %cst_81 : f32 to vector<8x64xf32>
    %361 = arith.addf %360, %359 : vector<8x64xf32>
    %362 = arith.divf %360, %361 : vector<8x64xf32>
    %363 = vector.extract_strided_slice %350 {offsets = [0, 128], sizes = [8, 64], strides = [1, 1]} : vector<8x256xf32> to vector<8x64xf32>
    %364 = math.tanh %363 : vector<8x64xf32>
    %365 = vector.extract_strided_slice %350 {offsets = [0, 192], sizes = [8, 64], strides = [1, 1]} : vector<8x256xf32> to vector<8x64xf32>
    %366 = arith.negf %365 : vector<8x64xf32>
    %367 = math.exp %366 : vector<8x64xf32>
    %cst_82 = arith.constant 1.000000e+00 : f32
    %368 = vector.broadcast %cst_82 : f32 to vector<8x64xf32>
    %369 = arith.addf %368, %367 : vector<8x64xf32>
    %370 = arith.divf %368, %369 : vector<8x64xf32>
    %371 = arith.mulf %362, %344 : vector<8x64xf32>
    %372 = arith.mulf %356, %364 : vector<8x64xf32>
    %373 = arith.addf %371, %372 : vector<8x64xf32>
    %374 = math.tanh %373 : vector<8x64xf32>
    %375 = arith.mulf %370, %374 : vector<8x64xf32>
    %376 = vector.extract_strided_slice %257 {offsets = [32, 0], sizes = [8, 256], strides = [1, 1]} : vector<64x256xf32> to vector<8x256xf32>
    %377 = arith.truncf %375 : vector<8x64xf32> to vector<8x64xbf16>
    %cst_83 = arith.constant dense<0.000000e+00> : vector<8x256xf32>
    %378 = tpu.matmul %377, %6, %cst_83 {dimension_numbers = #tpu.dot_dimension_numbers<[1], [0], [0], [1], [0, 0, 1, 1], [], []>} : vector<8x64xbf16>, vector<64x256xbf16>, vector<8x256xf32> -> vector<8x256xf32>
    %379 = arith.addf %376, %378 : vector<8x256xf32>
    %380 = vector.extract_strided_slice %379 {offsets = [0, 0], sizes = [8, 64], strides = [1, 1]} : vector<8x256xf32> to vector<8x64xf32>
    %381 = arith.negf %380 : vector<8x64xf32>
    %382 = math.exp %381 : vector<8x64xf32>
    %cst_84 = arith.constant 1.000000e+00 : f32
    %383 = vector.broadcast %cst_84 : f32 to vector<8x64xf32>
    %384 = arith.addf %383, %382 : vector<8x64xf32>
    %385 = arith.divf %383, %384 : vector<8x64xf32>
    %386 = vector.extract_strided_slice %379 {offsets = [0, 64], sizes = [8, 64], strides = [1, 1]} : vector<8x256xf32> to vector<8x64xf32>
    %387 = arith.negf %386 : vector<8x64xf32>
    %388 = math.exp %387 : vector<8x64xf32>
    %cst_85 = arith.constant 1.000000e+00 : f32
    %389 = vector.broadcast %cst_85 : f32 to vector<8x64xf32>
    %390 = arith.addf %389, %388 : vector<8x64xf32>
    %391 = arith.divf %389, %390 : vector<8x64xf32>
    %392 = vector.extract_strided_slice %379 {offsets = [0, 128], sizes = [8, 64], strides = [1, 1]} : vector<8x256xf32> to vector<8x64xf32>
    %393 = math.tanh %392 : vector<8x64xf32>
    %394 = vector.extract_strided_slice %379 {offsets = [0, 192], sizes = [8, 64], strides = [1, 1]} : vector<8x256xf32> to vector<8x64xf32>
    %395 = arith.negf %394 : vector<8x64xf32>
    %396 = math.exp %395 : vector<8x64xf32>
    %cst_86 = arith.constant 1.000000e+00 : f32
    %397 = vector.broadcast %cst_86 : f32 to vector<8x64xf32>
    %398 = arith.addf %397, %396 : vector<8x64xf32>
    %399 = arith.divf %397, %398 : vector<8x64xf32>
    %400 = arith.mulf %391, %373 : vector<8x64xf32>
    %401 = arith.mulf %385, %393 : vector<8x64xf32>
    %402 = arith.addf %400, %401 : vector<8x64xf32>
    %403 = math.tanh %402 : vector<8x64xf32>
    %404 = arith.mulf %399, %403 : vector<8x64xf32>
    %405 = vector.extract_strided_slice %257 {offsets = [40, 0], sizes = [8, 256], strides = [1, 1]} : vector<64x256xf32> to vector<8x256xf32>
    %406 = arith.truncf %404 : vector<8x64xf32> to vector<8x64xbf16>
    %cst_87 = arith.constant dense<0.000000e+00> : vector<8x256xf32>
    %407 = tpu.matmul %406, %6, %cst_87 {dimension_numbers = #tpu.dot_dimension_numbers<[1], [0], [0], [1], [0, 0, 1, 1], [], []>} : vector<8x64xbf16>, vector<64x256xbf16>, vector<8x256xf32> -> vector<8x256xf32>
    %408 = arith.addf %405, %407 : vector<8x256xf32>
    %409 = vector.extract_strided_slice %408 {offsets = [0, 0], sizes = [8, 64], strides = [1, 1]} : vector<8x256xf32> to vector<8x64xf32>
    %410 = arith.negf %409 : vector<8x64xf32>
    %411 = math.exp %410 : vector<8x64xf32>
    %cst_88 = arith.constant 1.000000e+00 : f32
    %412 = vector.broadcast %cst_88 : f32 to vector<8x64xf32>
    %413 = arith.addf %412, %411 : vector<8x64xf32>
    %414 = arith.divf %412, %413 : vector<8x64xf32>
    %415 = vector.extract_strided_slice %408 {offsets = [0, 64], sizes = [8, 64], strides = [1, 1]} : vector<8x256xf32> to vector<8x64xf32>
    %416 = arith.negf %415 : vector<8x64xf32>
    %417 = math.exp %416 : vector<8x64xf32>
    %cst_89 = arith.constant 1.000000e+00 : f32
    %418 = vector.broadcast %cst_89 : f32 to vector<8x64xf32>
    %419 = arith.addf %418, %417 : vector<8x64xf32>
    %420 = arith.divf %418, %419 : vector<8x64xf32>
    %421 = vector.extract_strided_slice %408 {offsets = [0, 128], sizes = [8, 64], strides = [1, 1]} : vector<8x256xf32> to vector<8x64xf32>
    %422 = math.tanh %421 : vector<8x64xf32>
    %423 = vector.extract_strided_slice %408 {offsets = [0, 192], sizes = [8, 64], strides = [1, 1]} : vector<8x256xf32> to vector<8x64xf32>
    %424 = arith.negf %423 : vector<8x64xf32>
    %425 = math.exp %424 : vector<8x64xf32>
    %cst_90 = arith.constant 1.000000e+00 : f32
    %426 = vector.broadcast %cst_90 : f32 to vector<8x64xf32>
    %427 = arith.addf %426, %425 : vector<8x64xf32>
    %428 = arith.divf %426, %427 : vector<8x64xf32>
    %429 = arith.mulf %420, %402 : vector<8x64xf32>
    %430 = arith.mulf %414, %422 : vector<8x64xf32>
    %431 = arith.addf %429, %430 : vector<8x64xf32>
    %432 = math.tanh %431 : vector<8x64xf32>
    %433 = arith.mulf %428, %432 : vector<8x64xf32>
    %434 = vector.extract_strided_slice %257 {offsets = [48, 0], sizes = [8, 256], strides = [1, 1]} : vector<64x256xf32> to vector<8x256xf32>
    %435 = arith.truncf %433 : vector<8x64xf32> to vector<8x64xbf16>
    %cst_91 = arith.constant dense<0.000000e+00> : vector<8x256xf32>
    %436 = tpu.matmul %435, %6, %cst_91 {dimension_numbers = #tpu.dot_dimension_numbers<[1], [0], [0], [1], [0, 0, 1, 1], [], []>} : vector<8x64xbf16>, vector<64x256xbf16>, vector<8x256xf32> -> vector<8x256xf32>
    %437 = arith.addf %434, %436 : vector<8x256xf32>
    %438 = vector.extract_strided_slice %437 {offsets = [0, 0], sizes = [8, 64], strides = [1, 1]} : vector<8x256xf32> to vector<8x64xf32>
    %439 = arith.negf %438 : vector<8x64xf32>
    %440 = math.exp %439 : vector<8x64xf32>
    %cst_92 = arith.constant 1.000000e+00 : f32
    %441 = vector.broadcast %cst_92 : f32 to vector<8x64xf32>
    %442 = arith.addf %441, %440 : vector<8x64xf32>
    %443 = arith.divf %441, %442 : vector<8x64xf32>
    %444 = vector.extract_strided_slice %437 {offsets = [0, 64], sizes = [8, 64], strides = [1, 1]} : vector<8x256xf32> to vector<8x64xf32>
    %445 = arith.negf %444 : vector<8x64xf32>
    %446 = math.exp %445 : vector<8x64xf32>
    %cst_93 = arith.constant 1.000000e+00 : f32
    %447 = vector.broadcast %cst_93 : f32 to vector<8x64xf32>
    %448 = arith.addf %447, %446 : vector<8x64xf32>
    %449 = arith.divf %447, %448 : vector<8x64xf32>
    %450 = vector.extract_strided_slice %437 {offsets = [0, 128], sizes = [8, 64], strides = [1, 1]} : vector<8x256xf32> to vector<8x64xf32>
    %451 = math.tanh %450 : vector<8x64xf32>
    %452 = vector.extract_strided_slice %437 {offsets = [0, 192], sizes = [8, 64], strides = [1, 1]} : vector<8x256xf32> to vector<8x64xf32>
    %453 = arith.negf %452 : vector<8x64xf32>
    %454 = math.exp %453 : vector<8x64xf32>
    %cst_94 = arith.constant 1.000000e+00 : f32
    %455 = vector.broadcast %cst_94 : f32 to vector<8x64xf32>
    %456 = arith.addf %455, %454 : vector<8x64xf32>
    %457 = arith.divf %455, %456 : vector<8x64xf32>
    %458 = arith.mulf %449, %431 : vector<8x64xf32>
    %459 = arith.mulf %443, %451 : vector<8x64xf32>
    %460 = arith.addf %458, %459 : vector<8x64xf32>
    %461 = math.tanh %460 : vector<8x64xf32>
    %462 = arith.mulf %457, %461 : vector<8x64xf32>
    %463 = vector.extract_strided_slice %257 {offsets = [56, 0], sizes = [8, 256], strides = [1, 1]} : vector<64x256xf32> to vector<8x256xf32>
    %464 = arith.truncf %462 : vector<8x64xf32> to vector<8x64xbf16>
    %cst_95 = arith.constant dense<0.000000e+00> : vector<8x256xf32>
    %465 = tpu.matmul %464, %6, %cst_95 {dimension_numbers = #tpu.dot_dimension_numbers<[1], [0], [0], [1], [0, 0, 1, 1], [], []>} : vector<8x64xbf16>, vector<64x256xbf16>, vector<8x256xf32> -> vector<8x256xf32>
    %466 = arith.addf %463, %465 : vector<8x256xf32>
    %467 = vector.extract_strided_slice %466 {offsets = [0, 0], sizes = [8, 64], strides = [1, 1]} : vector<8x256xf32> to vector<8x64xf32>
    %468 = arith.negf %467 : vector<8x64xf32>
    %469 = math.exp %468 : vector<8x64xf32>
    %cst_96 = arith.constant 1.000000e+00 : f32
    %470 = vector.broadcast %cst_96 : f32 to vector<8x64xf32>
    %471 = arith.addf %470, %469 : vector<8x64xf32>
    %472 = arith.divf %470, %471 : vector<8x64xf32>
    %473 = vector.extract_strided_slice %466 {offsets = [0, 64], sizes = [8, 64], strides = [1, 1]} : vector<8x256xf32> to vector<8x64xf32>
    %474 = arith.negf %473 : vector<8x64xf32>
    %475 = math.exp %474 : vector<8x64xf32>
    %cst_97 = arith.constant 1.000000e+00 : f32
    %476 = vector.broadcast %cst_97 : f32 to vector<8x64xf32>
    %477 = arith.addf %476, %475 : vector<8x64xf32>
    %478 = arith.divf %476, %477 : vector<8x64xf32>
    %479 = vector.extract_strided_slice %466 {offsets = [0, 128], sizes = [8, 64], strides = [1, 1]} : vector<8x256xf32> to vector<8x64xf32>
    %480 = math.tanh %479 : vector<8x64xf32>
    %481 = vector.extract_strided_slice %466 {offsets = [0, 192], sizes = [8, 64], strides = [1, 1]} : vector<8x256xf32> to vector<8x64xf32>
    %482 = arith.negf %481 : vector<8x64xf32>
    %483 = math.exp %482 : vector<8x64xf32>
    %cst_98 = arith.constant 1.000000e+00 : f32
    %484 = vector.broadcast %cst_98 : f32 to vector<8x64xf32>
    %485 = arith.addf %484, %483 : vector<8x64xf32>
    %486 = arith.divf %484, %485 : vector<8x64xf32>
    %487 = arith.mulf %478, %460 : vector<8x64xf32>
    %488 = arith.mulf %472, %480 : vector<8x64xf32>
    %489 = arith.addf %487, %488 : vector<8x64xf32>
    %490 = math.tanh %489 : vector<8x64xf32>
    %491 = arith.mulf %486, %490 : vector<8x64xf32>
    %492 = tpu.concatenate %288, %317, %346, %375, %404, %433, %462, %491 in 0 : vector<8x64xf32>, vector<8x64xf32>, vector<8x64xf32>, vector<8x64xf32>, vector<8x64xf32>, vector<8x64xf32>, vector<8x64xf32>, vector<8x64xf32> -> vector<64x64xf32>
    %493 = arith.truncf %492 : vector<64x64xf32> to vector<64x64xbf16>
    %cst_99 = arith.constant dense<0.000000e+00> : vector<64x1xf32>
    %494 = tpu.matmul %493, %8, %cst_99 {dimension_numbers = #tpu.dot_dimension_numbers<[1], [0], [0], [1], [0, 0, 1, 1], [], []>} : vector<64x64xbf16>, vector<64x1xbf16>, vector<64x1xf32> -> vector<64x1xf32>
    %495 = vector.broadcast %9 : vector<1x1xf32> to vector<64x1xf32>
    %496 = arith.addf %494, %495 : vector<64x1xf32>
    %497 = vector.extract_strided_slice %496 {offsets = [0, 0], sizes = [8, 1], strides = [1, 1]} : vector<64x1xf32> to vector<8x1xf32>
    %498 = vector.extract_strided_slice %496 {offsets = [8, 0], sizes = [8, 1], strides = [1, 1]} : vector<64x1xf32> to vector<8x1xf32>
    %499 = vector.extract_strided_slice %496 {offsets = [16, 0], sizes = [8, 1], strides = [1, 1]} : vector<64x1xf32> to vector<8x1xf32>
    %500 = vector.extract_strided_slice %496 {offsets = [24, 0], sizes = [8, 1], strides = [1, 1]} : vector<64x1xf32> to vector<8x1xf32>
    %501 = vector.extract_strided_slice %496 {offsets = [32, 0], sizes = [8, 1], strides = [1, 1]} : vector<64x1xf32> to vector<8x1xf32>
    %502 = vector.extract_strided_slice %496 {offsets = [40, 0], sizes = [8, 1], strides = [1, 1]} : vector<64x1xf32> to vector<8x1xf32>
    %503 = vector.extract_strided_slice %496 {offsets = [48, 0], sizes = [8, 1], strides = [1, 1]} : vector<64x1xf32> to vector<8x1xf32>
    %504 = vector.extract_strided_slice %496 {offsets = [56, 0], sizes = [8, 1], strides = [1, 1]} : vector<64x1xf32> to vector<8x1xf32>
    %505 = arith.maximumf %497, %498 : vector<8x1xf32>
    %506 = arith.maximumf %505, %499 : vector<8x1xf32>
    %507 = arith.maximumf %506, %500 : vector<8x1xf32>
    %508 = arith.maximumf %507, %501 : vector<8x1xf32>
    %509 = arith.maximumf %508, %502 : vector<8x1xf32>
    %510 = arith.maximumf %509, %503 : vector<8x1xf32>
    %511 = arith.maximumf %510, %504 : vector<8x1xf32>
    %512 = arith.subf %497, %511 : vector<8x1xf32>
    %513 = math.exp %512 : vector<8x1xf32>
    %514 = arith.subf %498, %511 : vector<8x1xf32>
    %515 = math.exp %514 : vector<8x1xf32>
    %516 = arith.subf %499, %511 : vector<8x1xf32>
    %517 = math.exp %516 : vector<8x1xf32>
    %518 = arith.subf %500, %511 : vector<8x1xf32>
    %519 = math.exp %518 : vector<8x1xf32>
    %520 = arith.subf %501, %511 : vector<8x1xf32>
    %521 = math.exp %520 : vector<8x1xf32>
    %522 = arith.subf %502, %511 : vector<8x1xf32>
    %523 = math.exp %522 : vector<8x1xf32>
    %524 = arith.subf %503, %511 : vector<8x1xf32>
    %525 = math.exp %524 : vector<8x1xf32>
    %526 = arith.subf %504, %511 : vector<8x1xf32>
    %527 = math.exp %526 : vector<8x1xf32>
    %528 = arith.addf %513, %515 : vector<8x1xf32>
    %529 = arith.addf %528, %517 : vector<8x1xf32>
    %530 = arith.addf %529, %519 : vector<8x1xf32>
    %531 = arith.addf %530, %521 : vector<8x1xf32>
    %532 = arith.addf %531, %523 : vector<8x1xf32>
    %533 = arith.addf %532, %525 : vector<8x1xf32>
    %534 = arith.addf %533, %527 : vector<8x1xf32>
    %535 = tpu.reciprocal %534 {approx = true} : vector<8x1xf32> -> vector<8x1xf32>
    %536 = arith.mulf %513, %535 : vector<8x1xf32>
    %537 = arith.mulf %515, %535 : vector<8x1xf32>
    %538 = arith.mulf %517, %535 : vector<8x1xf32>
    %539 = arith.mulf %519, %535 : vector<8x1xf32>
    %540 = arith.mulf %521, %535 : vector<8x1xf32>
    %541 = arith.mulf %523, %535 : vector<8x1xf32>
    %542 = arith.mulf %525, %535 : vector<8x1xf32>
    %543 = arith.mulf %527, %535 : vector<8x1xf32>
    %544 = vector.broadcast %536 : vector<8x1xf32> to vector<8x64xf32>
    %545 = arith.mulf %544, %288 : vector<8x64xf32>
    %546 = vector.broadcast %537 : vector<8x1xf32> to vector<8x64xf32>
    %547 = arith.mulf %546, %317 : vector<8x64xf32>
    %548 = arith.addf %545, %547 : vector<8x64xf32>
    %549 = vector.broadcast %538 : vector<8x1xf32> to vector<8x64xf32>
    %550 = arith.mulf %549, %346 : vector<8x64xf32>
    %551 = arith.addf %548, %550 : vector<8x64xf32>
    %552 = vector.broadcast %539 : vector<8x1xf32> to vector<8x64xf32>
    %553 = arith.mulf %552, %375 : vector<8x64xf32>
    %554 = arith.addf %551, %553 : vector<8x64xf32>
    %555 = vector.broadcast %540 : vector<8x1xf32> to vector<8x64xf32>
    %556 = arith.mulf %555, %404 : vector<8x64xf32>
    %557 = arith.addf %554, %556 : vector<8x64xf32>
    %558 = vector.broadcast %541 : vector<8x1xf32> to vector<8x64xf32>
    %559 = arith.mulf %558, %433 : vector<8x64xf32>
    %560 = arith.addf %557, %559 : vector<8x64xf32>
    %561 = vector.broadcast %542 : vector<8x1xf32> to vector<8x64xf32>
    %562 = arith.mulf %561, %462 : vector<8x64xf32>
    %563 = arith.addf %560, %562 : vector<8x64xf32>
    %564 = vector.broadcast %543 : vector<8x1xf32> to vector<8x64xf32>
    %565 = arith.mulf %564, %491 : vector<8x64xf32>
    %566 = arith.addf %563, %565 : vector<8x64xf32>
    %cst_100 = arith.constant dense<0.000000e+00> : vector<64x128xf32>
    %567 = tpu.matmul %493, %10, %cst_100 {dimension_numbers = #tpu.dot_dimension_numbers<[1], [0], [0], [1], [0, 0, 1, 1], [], []>} : vector<64x64xbf16>, vector<64x128xbf16>, vector<64x128xf32> -> vector<64x128xf32>
    %568 = arith.truncf %566 : vector<8x64xf32> to vector<8x64xbf16>
    %cst_101 = arith.constant dense<0.000000e+00> : vector<8x128xf32>
    %569 = tpu.matmul %568, %11, %cst_101 {dimension_numbers = #tpu.dot_dimension_numbers<[1], [0], [0], [1], [0, 0, 1, 1], [], []>} : vector<8x64xbf16>, vector<64x128xbf16>, vector<8x128xf32> -> vector<8x128xf32>
    %570 = vector.broadcast %13 : vector<1x128xf32> to vector<8x128xf32>
    %571 = arith.addf %570, %569 : vector<8x128xf32>
    %cst_102 = arith.constant 0.000000e+00 : f32
    %572 = vector.broadcast %cst_102 : f32 to vector<8x32xf32>
    %cst_103 = arith.constant 0.000000e+00 : f32
    %573 = vector.broadcast %cst_103 : f32 to vector<8x32xf32>
    %574 = vector.extract_strided_slice %567 {offsets = [0, 0], sizes = [8, 128], strides = [1, 1]} : vector<64x128xf32> to vector<8x128xf32>
    %575 = arith.truncf %572 : vector<8x32xf32> to vector<8x32xbf16>
    %cst_104 = arith.constant dense<0.000000e+00> : vector<8x128xf32>
    %576 = tpu.matmul %575, %12, %cst_104 {dimension_numbers = #tpu.dot_dimension_numbers<[1], [0], [0], [1], [0, 0, 1, 1], [], []>} : vector<8x32xbf16>, vector<32x128xbf16>, vector<8x128xf32> -> vector<8x128xf32>
    %577 = arith.addf %574, %576 : vector<8x128xf32>
    %578 = arith.addf %577, %571 : vector<8x128xf32>
    %579 = vector.extract_strided_slice %578 {offsets = [0, 0], sizes = [8, 32], strides = [1, 1]} : vector<8x128xf32> to vector<8x32xf32>
    %580 = arith.negf %579 : vector<8x32xf32>
    %581 = math.exp %580 : vector<8x32xf32>
    %cst_105 = arith.constant 1.000000e+00 : f32
    %582 = vector.broadcast %cst_105 : f32 to vector<8x32xf32>
    %583 = arith.addf %582, %581 : vector<8x32xf32>
    %584 = arith.divf %582, %583 : vector<8x32xf32>
    %585 = vector.extract_strided_slice %578 {offsets = [0, 32], sizes = [8, 32], strides = [1, 1]} : vector<8x128xf32> to vector<8x32xf32>
    %586 = arith.negf %585 : vector<8x32xf32>
    %587 = math.exp %586 : vector<8x32xf32>
    %cst_106 = arith.constant 1.000000e+00 : f32
    %588 = vector.broadcast %cst_106 : f32 to vector<8x32xf32>
    %589 = arith.addf %588, %587 : vector<8x32xf32>
    %590 = arith.divf %588, %589 : vector<8x32xf32>
    %591 = vector.extract_strided_slice %578 {offsets = [0, 64], sizes = [8, 32], strides = [1, 1]} : vector<8x128xf32> to vector<8x32xf32>
    %592 = math.tanh %591 : vector<8x32xf32>
    %593 = vector.extract_strided_slice %578 {offsets = [0, 96], sizes = [8, 32], strides = [1, 1]} : vector<8x128xf32> to vector<8x32xf32>
    %594 = arith.negf %593 : vector<8x32xf32>
    %595 = math.exp %594 : vector<8x32xf32>
    %cst_107 = arith.constant 1.000000e+00 : f32
    %596 = vector.broadcast %cst_107 : f32 to vector<8x32xf32>
    %597 = arith.addf %596, %595 : vector<8x32xf32>
    %598 = arith.divf %596, %597 : vector<8x32xf32>
    %599 = arith.mulf %590, %573 : vector<8x32xf32>
    %600 = arith.mulf %584, %592 : vector<8x32xf32>
    %601 = arith.addf %599, %600 : vector<8x32xf32>
    %602 = math.tanh %601 : vector<8x32xf32>
    %603 = arith.mulf %598, %602 : vector<8x32xf32>
    %604 = vector.extract_strided_slice %567 {offsets = [8, 0], sizes = [8, 128], strides = [1, 1]} : vector<64x128xf32> to vector<8x128xf32>
    %605 = arith.truncf %603 : vector<8x32xf32> to vector<8x32xbf16>
    %cst_108 = arith.constant dense<0.000000e+00> : vector<8x128xf32>
    %606 = tpu.matmul %605, %12, %cst_108 {dimension_numbers = #tpu.dot_dimension_numbers<[1], [0], [0], [1], [0, 0, 1, 1], [], []>} : vector<8x32xbf16>, vector<32x128xbf16>, vector<8x128xf32> -> vector<8x128xf32>
    %607 = arith.addf %604, %606 : vector<8x128xf32>
    %608 = arith.addf %607, %571 : vector<8x128xf32>
    %609 = vector.extract_strided_slice %608 {offsets = [0, 0], sizes = [8, 32], strides = [1, 1]} : vector<8x128xf32> to vector<8x32xf32>
    %610 = arith.negf %609 : vector<8x32xf32>
    %611 = math.exp %610 : vector<8x32xf32>
    %cst_109 = arith.constant 1.000000e+00 : f32
    %612 = vector.broadcast %cst_109 : f32 to vector<8x32xf32>
    %613 = arith.addf %612, %611 : vector<8x32xf32>
    %614 = arith.divf %612, %613 : vector<8x32xf32>
    %615 = vector.extract_strided_slice %608 {offsets = [0, 32], sizes = [8, 32], strides = [1, 1]} : vector<8x128xf32> to vector<8x32xf32>
    %616 = arith.negf %615 : vector<8x32xf32>
    %617 = math.exp %616 : vector<8x32xf32>
    %cst_110 = arith.constant 1.000000e+00 : f32
    %618 = vector.broadcast %cst_110 : f32 to vector<8x32xf32>
    %619 = arith.addf %618, %617 : vector<8x32xf32>
    %620 = arith.divf %618, %619 : vector<8x32xf32>
    %621 = vector.extract_strided_slice %608 {offsets = [0, 64], sizes = [8, 32], strides = [1, 1]} : vector<8x128xf32> to vector<8x32xf32>
    %622 = math.tanh %621 : vector<8x32xf32>
    %623 = vector.extract_strided_slice %608 {offsets = [0, 96], sizes = [8, 32], strides = [1, 1]} : vector<8x128xf32> to vector<8x32xf32>
    %624 = arith.negf %623 : vector<8x32xf32>
    %625 = math.exp %624 : vector<8x32xf32>
    %cst_111 = arith.constant 1.000000e+00 : f32
    %626 = vector.broadcast %cst_111 : f32 to vector<8x32xf32>
    %627 = arith.addf %626, %625 : vector<8x32xf32>
    %628 = arith.divf %626, %627 : vector<8x32xf32>
    %629 = arith.mulf %620, %601 : vector<8x32xf32>
    %630 = arith.mulf %614, %622 : vector<8x32xf32>
    %631 = arith.addf %629, %630 : vector<8x32xf32>
    %632 = math.tanh %631 : vector<8x32xf32>
    %633 = arith.mulf %628, %632 : vector<8x32xf32>
    %634 = vector.extract_strided_slice %567 {offsets = [16, 0], sizes = [8, 128], strides = [1, 1]} : vector<64x128xf32> to vector<8x128xf32>
    %635 = arith.truncf %633 : vector<8x32xf32> to vector<8x32xbf16>
    %cst_112 = arith.constant dense<0.000000e+00> : vector<8x128xf32>
    %636 = tpu.matmul %635, %12, %cst_112 {dimension_numbers = #tpu.dot_dimension_numbers<[1], [0], [0], [1], [0, 0, 1, 1], [], []>} : vector<8x32xbf16>, vector<32x128xbf16>, vector<8x128xf32> -> vector<8x128xf32>
    %637 = arith.addf %634, %636 : vector<8x128xf32>
    %638 = arith.addf %637, %571 : vector<8x128xf32>
    %639 = vector.extract_strided_slice %638 {offsets = [0, 0], sizes = [8, 32], strides = [1, 1]} : vector<8x128xf32> to vector<8x32xf32>
    %640 = arith.negf %639 : vector<8x32xf32>
    %641 = math.exp %640 : vector<8x32xf32>
    %cst_113 = arith.constant 1.000000e+00 : f32
    %642 = vector.broadcast %cst_113 : f32 to vector<8x32xf32>
    %643 = arith.addf %642, %641 : vector<8x32xf32>
    %644 = arith.divf %642, %643 : vector<8x32xf32>
    %645 = vector.extract_strided_slice %638 {offsets = [0, 32], sizes = [8, 32], strides = [1, 1]} : vector<8x128xf32> to vector<8x32xf32>
    %646 = arith.negf %645 : vector<8x32xf32>
    %647 = math.exp %646 : vector<8x32xf32>
    %cst_114 = arith.constant 1.000000e+00 : f32
    %648 = vector.broadcast %cst_114 : f32 to vector<8x32xf32>
    %649 = arith.addf %648, %647 : vector<8x32xf32>
    %650 = arith.divf %648, %649 : vector<8x32xf32>
    %651 = vector.extract_strided_slice %638 {offsets = [0, 64], sizes = [8, 32], strides = [1, 1]} : vector<8x128xf32> to vector<8x32xf32>
    %652 = math.tanh %651 : vector<8x32xf32>
    %653 = vector.extract_strided_slice %638 {offsets = [0, 96], sizes = [8, 32], strides = [1, 1]} : vector<8x128xf32> to vector<8x32xf32>
    %654 = arith.negf %653 : vector<8x32xf32>
    %655 = math.exp %654 : vector<8x32xf32>
    %cst_115 = arith.constant 1.000000e+00 : f32
    %656 = vector.broadcast %cst_115 : f32 to vector<8x32xf32>
    %657 = arith.addf %656, %655 : vector<8x32xf32>
    %658 = arith.divf %656, %657 : vector<8x32xf32>
    %659 = arith.mulf %650, %631 : vector<8x32xf32>
    %660 = arith.mulf %644, %652 : vector<8x32xf32>
    %661 = arith.addf %659, %660 : vector<8x32xf32>
    %662 = math.tanh %661 : vector<8x32xf32>
    %663 = arith.mulf %658, %662 : vector<8x32xf32>
    %664 = vector.extract_strided_slice %567 {offsets = [24, 0], sizes = [8, 128], strides = [1, 1]} : vector<64x128xf32> to vector<8x128xf32>
    %665 = arith.truncf %663 : vector<8x32xf32> to vector<8x32xbf16>
    %cst_116 = arith.constant dense<0.000000e+00> : vector<8x128xf32>
    %666 = tpu.matmul %665, %12, %cst_116 {dimension_numbers = #tpu.dot_dimension_numbers<[1], [0], [0], [1], [0, 0, 1, 1], [], []>} : vector<8x32xbf16>, vector<32x128xbf16>, vector<8x128xf32> -> vector<8x128xf32>
    %667 = arith.addf %664, %666 : vector<8x128xf32>
    %668 = arith.addf %667, %571 : vector<8x128xf32>
    %669 = vector.extract_strided_slice %668 {offsets = [0, 0], sizes = [8, 32], strides = [1, 1]} : vector<8x128xf32> to vector<8x32xf32>
    %670 = arith.negf %669 : vector<8x32xf32>
    %671 = math.exp %670 : vector<8x32xf32>
    %cst_117 = arith.constant 1.000000e+00 : f32
    %672 = vector.broadcast %cst_117 : f32 to vector<8x32xf32>
    %673 = arith.addf %672, %671 : vector<8x32xf32>
    %674 = arith.divf %672, %673 : vector<8x32xf32>
    %675 = vector.extract_strided_slice %668 {offsets = [0, 32], sizes = [8, 32], strides = [1, 1]} : vector<8x128xf32> to vector<8x32xf32>
    %676 = arith.negf %675 : vector<8x32xf32>
    %677 = math.exp %676 : vector<8x32xf32>
    %cst_118 = arith.constant 1.000000e+00 : f32
    %678 = vector.broadcast %cst_118 : f32 to vector<8x32xf32>
    %679 = arith.addf %678, %677 : vector<8x32xf32>
    %680 = arith.divf %678, %679 : vector<8x32xf32>
    %681 = vector.extract_strided_slice %668 {offsets = [0, 64], sizes = [8, 32], strides = [1, 1]} : vector<8x128xf32> to vector<8x32xf32>
    %682 = math.tanh %681 : vector<8x32xf32>
    %683 = vector.extract_strided_slice %668 {offsets = [0, 96], sizes = [8, 32], strides = [1, 1]} : vector<8x128xf32> to vector<8x32xf32>
    %684 = arith.negf %683 : vector<8x32xf32>
    %685 = math.exp %684 : vector<8x32xf32>
    %cst_119 = arith.constant 1.000000e+00 : f32
    %686 = vector.broadcast %cst_119 : f32 to vector<8x32xf32>
    %687 = arith.addf %686, %685 : vector<8x32xf32>
    %688 = arith.divf %686, %687 : vector<8x32xf32>
    %689 = arith.mulf %680, %661 : vector<8x32xf32>
    %690 = arith.mulf %674, %682 : vector<8x32xf32>
    %691 = arith.addf %689, %690 : vector<8x32xf32>
    %692 = math.tanh %691 : vector<8x32xf32>
    %693 = arith.mulf %688, %692 : vector<8x32xf32>
    %694 = vector.extract_strided_slice %567 {offsets = [32, 0], sizes = [8, 128], strides = [1, 1]} : vector<64x128xf32> to vector<8x128xf32>
    %695 = arith.truncf %693 : vector<8x32xf32> to vector<8x32xbf16>
    %cst_120 = arith.constant dense<0.000000e+00> : vector<8x128xf32>
    %696 = tpu.matmul %695, %12, %cst_120 {dimension_numbers = #tpu.dot_dimension_numbers<[1], [0], [0], [1], [0, 0, 1, 1], [], []>} : vector<8x32xbf16>, vector<32x128xbf16>, vector<8x128xf32> -> vector<8x128xf32>
    %697 = arith.addf %694, %696 : vector<8x128xf32>
    %698 = arith.addf %697, %571 : vector<8x128xf32>
    %699 = vector.extract_strided_slice %698 {offsets = [0, 0], sizes = [8, 32], strides = [1, 1]} : vector<8x128xf32> to vector<8x32xf32>
    %700 = arith.negf %699 : vector<8x32xf32>
    %701 = math.exp %700 : vector<8x32xf32>
    %cst_121 = arith.constant 1.000000e+00 : f32
    %702 = vector.broadcast %cst_121 : f32 to vector<8x32xf32>
    %703 = arith.addf %702, %701 : vector<8x32xf32>
    %704 = arith.divf %702, %703 : vector<8x32xf32>
    %705 = vector.extract_strided_slice %698 {offsets = [0, 32], sizes = [8, 32], strides = [1, 1]} : vector<8x128xf32> to vector<8x32xf32>
    %706 = arith.negf %705 : vector<8x32xf32>
    %707 = math.exp %706 : vector<8x32xf32>
    %cst_122 = arith.constant 1.000000e+00 : f32
    %708 = vector.broadcast %cst_122 : f32 to vector<8x32xf32>
    %709 = arith.addf %708, %707 : vector<8x32xf32>
    %710 = arith.divf %708, %709 : vector<8x32xf32>
    %711 = vector.extract_strided_slice %698 {offsets = [0, 64], sizes = [8, 32], strides = [1, 1]} : vector<8x128xf32> to vector<8x32xf32>
    %712 = math.tanh %711 : vector<8x32xf32>
    %713 = vector.extract_strided_slice %698 {offsets = [0, 96], sizes = [8, 32], strides = [1, 1]} : vector<8x128xf32> to vector<8x32xf32>
    %714 = arith.negf %713 : vector<8x32xf32>
    %715 = math.exp %714 : vector<8x32xf32>
    %cst_123 = arith.constant 1.000000e+00 : f32
    %716 = vector.broadcast %cst_123 : f32 to vector<8x32xf32>
    %717 = arith.addf %716, %715 : vector<8x32xf32>
    %718 = arith.divf %716, %717 : vector<8x32xf32>
    %719 = arith.mulf %710, %691 : vector<8x32xf32>
    %720 = arith.mulf %704, %712 : vector<8x32xf32>
    %721 = arith.addf %719, %720 : vector<8x32xf32>
    %722 = math.tanh %721 : vector<8x32xf32>
    %723 = arith.mulf %718, %722 : vector<8x32xf32>
    %724 = vector.extract_strided_slice %567 {offsets = [40, 0], sizes = [8, 128], strides = [1, 1]} : vector<64x128xf32> to vector<8x128xf32>
    %725 = arith.truncf %723 : vector<8x32xf32> to vector<8x32xbf16>
    %cst_124 = arith.constant dense<0.000000e+00> : vector<8x128xf32>
    %726 = tpu.matmul %725, %12, %cst_124 {dimension_numbers = #tpu.dot_dimension_numbers<[1], [0], [0], [1], [0, 0, 1, 1], [], []>} : vector<8x32xbf16>, vector<32x128xbf16>, vector<8x128xf32> -> vector<8x128xf32>
    %727 = arith.addf %724, %726 : vector<8x128xf32>
    %728 = arith.addf %727, %571 : vector<8x128xf32>
    %729 = vector.extract_strided_slice %728 {offsets = [0, 0], sizes = [8, 32], strides = [1, 1]} : vector<8x128xf32> to vector<8x32xf32>
    %730 = arith.negf %729 : vector<8x32xf32>
    %731 = math.exp %730 : vector<8x32xf32>
    %cst_125 = arith.constant 1.000000e+00 : f32
    %732 = vector.broadcast %cst_125 : f32 to vector<8x32xf32>
    %733 = arith.addf %732, %731 : vector<8x32xf32>
    %734 = arith.divf %732, %733 : vector<8x32xf32>
    %735 = vector.extract_strided_slice %728 {offsets = [0, 32], sizes = [8, 32], strides = [1, 1]} : vector<8x128xf32> to vector<8x32xf32>
    %736 = arith.negf %735 : vector<8x32xf32>
    %737 = math.exp %736 : vector<8x32xf32>
    %cst_126 = arith.constant 1.000000e+00 : f32
    %738 = vector.broadcast %cst_126 : f32 to vector<8x32xf32>
    %739 = arith.addf %738, %737 : vector<8x32xf32>
    %740 = arith.divf %738, %739 : vector<8x32xf32>
    %741 = vector.extract_strided_slice %728 {offsets = [0, 64], sizes = [8, 32], strides = [1, 1]} : vector<8x128xf32> to vector<8x32xf32>
    %742 = math.tanh %741 : vector<8x32xf32>
    %743 = vector.extract_strided_slice %728 {offsets = [0, 96], sizes = [8, 32], strides = [1, 1]} : vector<8x128xf32> to vector<8x32xf32>
    %744 = arith.negf %743 : vector<8x32xf32>
    %745 = math.exp %744 : vector<8x32xf32>
    %cst_127 = arith.constant 1.000000e+00 : f32
    %746 = vector.broadcast %cst_127 : f32 to vector<8x32xf32>
    %747 = arith.addf %746, %745 : vector<8x32xf32>
    %748 = arith.divf %746, %747 : vector<8x32xf32>
    %749 = arith.mulf %740, %721 : vector<8x32xf32>
    %750 = arith.mulf %734, %742 : vector<8x32xf32>
    %751 = arith.addf %749, %750 : vector<8x32xf32>
    %752 = math.tanh %751 : vector<8x32xf32>
    %753 = arith.mulf %748, %752 : vector<8x32xf32>
    %754 = vector.extract_strided_slice %567 {offsets = [48, 0], sizes = [8, 128], strides = [1, 1]} : vector<64x128xf32> to vector<8x128xf32>
    %755 = arith.truncf %753 : vector<8x32xf32> to vector<8x32xbf16>
    %cst_128 = arith.constant dense<0.000000e+00> : vector<8x128xf32>
    %756 = tpu.matmul %755, %12, %cst_128 {dimension_numbers = #tpu.dot_dimension_numbers<[1], [0], [0], [1], [0, 0, 1, 1], [], []>} : vector<8x32xbf16>, vector<32x128xbf16>, vector<8x128xf32> -> vector<8x128xf32>
    %757 = arith.addf %754, %756 : vector<8x128xf32>
    %758 = arith.addf %757, %571 : vector<8x128xf32>
    %759 = vector.extract_strided_slice %758 {offsets = [0, 0], sizes = [8, 32], strides = [1, 1]} : vector<8x128xf32> to vector<8x32xf32>
    %760 = arith.negf %759 : vector<8x32xf32>
    %761 = math.exp %760 : vector<8x32xf32>
    %cst_129 = arith.constant 1.000000e+00 : f32
    %762 = vector.broadcast %cst_129 : f32 to vector<8x32xf32>
    %763 = arith.addf %762, %761 : vector<8x32xf32>
    %764 = arith.divf %762, %763 : vector<8x32xf32>
    %765 = vector.extract_strided_slice %758 {offsets = [0, 32], sizes = [8, 32], strides = [1, 1]} : vector<8x128xf32> to vector<8x32xf32>
    %766 = arith.negf %765 : vector<8x32xf32>
    %767 = math.exp %766 : vector<8x32xf32>
    %cst_130 = arith.constant 1.000000e+00 : f32
    %768 = vector.broadcast %cst_130 : f32 to vector<8x32xf32>
    %769 = arith.addf %768, %767 : vector<8x32xf32>
    %770 = arith.divf %768, %769 : vector<8x32xf32>
    %771 = vector.extract_strided_slice %758 {offsets = [0, 64], sizes = [8, 32], strides = [1, 1]} : vector<8x128xf32> to vector<8x32xf32>
    %772 = math.tanh %771 : vector<8x32xf32>
    %773 = vector.extract_strided_slice %758 {offsets = [0, 96], sizes = [8, 32], strides = [1, 1]} : vector<8x128xf32> to vector<8x32xf32>
    %774 = arith.negf %773 : vector<8x32xf32>
    %775 = math.exp %774 : vector<8x32xf32>
    %cst_131 = arith.constant 1.000000e+00 : f32
    %776 = vector.broadcast %cst_131 : f32 to vector<8x32xf32>
    %777 = arith.addf %776, %775 : vector<8x32xf32>
    %778 = arith.divf %776, %777 : vector<8x32xf32>
    %779 = arith.mulf %770, %751 : vector<8x32xf32>
    %780 = arith.mulf %764, %772 : vector<8x32xf32>
    %781 = arith.addf %779, %780 : vector<8x32xf32>
    %782 = math.tanh %781 : vector<8x32xf32>
    %783 = arith.mulf %778, %782 : vector<8x32xf32>
    %784 = vector.extract_strided_slice %567 {offsets = [56, 0], sizes = [8, 128], strides = [1, 1]} : vector<64x128xf32> to vector<8x128xf32>
    %785 = arith.truncf %783 : vector<8x32xf32> to vector<8x32xbf16>
    %cst_132 = arith.constant dense<0.000000e+00> : vector<8x128xf32>
    %786 = tpu.matmul %785, %12, %cst_132 {dimension_numbers = #tpu.dot_dimension_numbers<[1], [0], [0], [1], [0, 0, 1, 1], [], []>} : vector<8x32xbf16>, vector<32x128xbf16>, vector<8x128xf32> -> vector<8x128xf32>
    %787 = arith.addf %784, %786 : vector<8x128xf32>
    %788 = arith.addf %787, %571 : vector<8x128xf32>
    %789 = vector.extract_strided_slice %788 {offsets = [0, 0], sizes = [8, 32], strides = [1, 1]} : vector<8x128xf32> to vector<8x32xf32>
    %790 = arith.negf %789 : vector<8x32xf32>
    %791 = math.exp %790 : vector<8x32xf32>
    %cst_133 = arith.constant 1.000000e+00 : f32
    %792 = vector.broadcast %cst_133 : f32 to vector<8x32xf32>
    %793 = arith.addf %792, %791 : vector<8x32xf32>
    %794 = arith.divf %792, %793 : vector<8x32xf32>
    %795 = vector.extract_strided_slice %788 {offsets = [0, 32], sizes = [8, 32], strides = [1, 1]} : vector<8x128xf32> to vector<8x32xf32>
    %796 = arith.negf %795 : vector<8x32xf32>
    %797 = math.exp %796 : vector<8x32xf32>
    %cst_134 = arith.constant 1.000000e+00 : f32
    %798 = vector.broadcast %cst_134 : f32 to vector<8x32xf32>
    %799 = arith.addf %798, %797 : vector<8x32xf32>
    %800 = arith.divf %798, %799 : vector<8x32xf32>
    %801 = vector.extract_strided_slice %788 {offsets = [0, 64], sizes = [8, 32], strides = [1, 1]} : vector<8x128xf32> to vector<8x32xf32>
    %802 = math.tanh %801 : vector<8x32xf32>
    %803 = vector.extract_strided_slice %788 {offsets = [0, 96], sizes = [8, 32], strides = [1, 1]} : vector<8x128xf32> to vector<8x32xf32>
    %804 = arith.negf %803 : vector<8x32xf32>
    %805 = math.exp %804 : vector<8x32xf32>
    %cst_135 = arith.constant 1.000000e+00 : f32
    %806 = vector.broadcast %cst_135 : f32 to vector<8x32xf32>
    %807 = arith.addf %806, %805 : vector<8x32xf32>
    %808 = arith.divf %806, %807 : vector<8x32xf32>
    %809 = arith.mulf %800, %781 : vector<8x32xf32>
    %810 = arith.mulf %794, %802 : vector<8x32xf32>
    %811 = arith.addf %809, %810 : vector<8x32xf32>
    %812 = math.tanh %811 : vector<8x32xf32>
    %813 = arith.mulf %808, %812 : vector<8x32xf32>
    %814 = arith.truncf %813 : vector<8x32xf32> to vector<8x32xbf16>
    %cst_136 = arith.constant dense<0.000000e+00> : vector<8x1xf32>
    %815 = tpu.matmul %814, %14, %cst_136 {dimension_numbers = #tpu.dot_dimension_numbers<[1], [0], [0], [1], [0, 0, 1, 1], [], []>} : vector<8x32xbf16>, vector<32x1xbf16>, vector<8x1xf32> -> vector<8x1xf32>
    %816 = vector.broadcast %15 : vector<1x1xf32> to vector<8x1xf32>
    %817 = arith.addf %815, %816 : vector<8x1xf32>
    %c0_137 = arith.constant 0 : index
    %c0_138 = arith.constant 0 : index
    %c0_139 = arith.constant 0 : index
    %818 = vector.load %arg16[%c0_137, %c0_138, %c0_139] : memref<1x8x1xf32, #tpu.memory_space<vmem>>, vector<1x8x1xf32>
    %819 = vector.shape_cast %818 : vector<1x8x1xf32> to vector<8x1xf32>
    %820 = vector.shape_cast %817 : vector<8x1xf32> to vector<1x8x1xf32>
    tpu.vector_store %arg16[%c0_137, %c0_138, %c0_139], %820 {strides = array<i32>} : memref<1x8x1xf32, #tpu.memory_space<vmem>>, vector<1x8x1xf32>,
    %821 = tpu.iota {dimensions = array<i32: 1>} : vector<8x128xi32>
    %cst_140 = arith.constant 0.000000e+00 : f32
    %822 = vector.broadcast %cst_140 : f32 to vector<8x128xf32>
    %c0_i32 = arith.constant 0 : i32
    %823 = vector.broadcast %c0_i32 : i32 to vector<8x128xi32>
    %824 = arith.cmpi eq, %821, %823 : vector<8x128xi32>
    %825 = vector.shape_cast %536 : vector<8x1xf32> to vector<8x1xf32>
    %826 = vector.broadcast %825 : vector<8x1xf32> to vector<8x128xf32>
    %827 = arith.select %824, %826, %822 : vector<8x128xi1>, vector<8x128xf32>
    %c1_i32 = arith.constant 1 : i32
    %828 = vector.broadcast %c1_i32 : i32 to vector<8x128xi32>
    %829 = arith.cmpi eq, %821, %828 : vector<8x128xi32>
    %830 = vector.shape_cast %537 : vector<8x1xf32> to vector<8x1xf32>
    %831 = vector.broadcast %830 : vector<8x1xf32> to vector<8x128xf32>
    %832 = arith.select %829, %831, %827 : vector<8x128xi1>, vector<8x128xf32>
    %c2_i32 = arith.constant 2 : i32
    %833 = vector.broadcast %c2_i32 : i32 to vector<8x128xi32>
    %834 = arith.cmpi eq, %821, %833 : vector<8x128xi32>
    %835 = vector.shape_cast %538 : vector<8x1xf32> to vector<8x1xf32>
    %836 = vector.broadcast %835 : vector<8x1xf32> to vector<8x128xf32>
    %837 = arith.select %834, %836, %832 : vector<8x128xi1>, vector<8x128xf32>
    %c3_i32 = arith.constant 3 : i32
    %838 = vector.broadcast %c3_i32 : i32 to vector<8x128xi32>
    %839 = arith.cmpi eq, %821, %838 : vector<8x128xi32>
    %840 = vector.shape_cast %539 : vector<8x1xf32> to vector<8x1xf32>
    %841 = vector.broadcast %840 : vector<8x1xf32> to vector<8x128xf32>
    %842 = arith.select %839, %841, %837 : vector<8x128xi1>, vector<8x128xf32>
    %c4_i32 = arith.constant 4 : i32
    %843 = vector.broadcast %c4_i32 : i32 to vector<8x128xi32>
    %844 = arith.cmpi eq, %821, %843 : vector<8x128xi32>
    %845 = vector.shape_cast %540 : vector<8x1xf32> to vector<8x1xf32>
    %846 = vector.broadcast %845 : vector<8x1xf32> to vector<8x128xf32>
    %847 = arith.select %844, %846, %842 : vector<8x128xi1>, vector<8x128xf32>
    %c5_i32 = arith.constant 5 : i32
    %848 = vector.broadcast %c5_i32 : i32 to vector<8x128xi32>
    %849 = arith.cmpi eq, %821, %848 : vector<8x128xi32>
    %850 = vector.shape_cast %541 : vector<8x1xf32> to vector<8x1xf32>
    %851 = vector.broadcast %850 : vector<8x1xf32> to vector<8x128xf32>
    %852 = arith.select %849, %851, %847 : vector<8x128xi1>, vector<8x128xf32>
    %c6_i32 = arith.constant 6 : i32
    %853 = vector.broadcast %c6_i32 : i32 to vector<8x128xi32>
    %854 = arith.cmpi eq, %821, %853 : vector<8x128xi32>
    %855 = vector.shape_cast %542 : vector<8x1xf32> to vector<8x1xf32>
    %856 = vector.broadcast %855 : vector<8x1xf32> to vector<8x128xf32>
    %857 = arith.select %854, %856, %852 : vector<8x128xi1>, vector<8x128xf32>
    %c7_i32 = arith.constant 7 : i32
    %858 = vector.broadcast %c7_i32 : i32 to vector<8x128xi32>
    %859 = arith.cmpi eq, %821, %858 : vector<8x128xi32>
    %860 = vector.shape_cast %543 : vector<8x1xf32> to vector<8x1xf32>
    %861 = vector.broadcast %860 : vector<8x1xf32> to vector<8x128xf32>
    %862 = arith.select %859, %861, %857 : vector<8x128xi1>, vector<8x128xf32>
    %c0_141 = arith.constant 0 : index
    %c0_142 = arith.constant 0 : index
    %c0_143 = arith.constant 0 : index
    %863 = vector.load %arg17[%c0_141, %c0_142, %c0_143] : memref<1x8x128xf32, #tpu.memory_space<vmem>>, vector<1x8x128xf32>
    %864 = vector.shape_cast %863 : vector<1x8x128xf32> to vector<8x128xf32>
    %865 = vector.shape_cast %862 : vector<8x128xf32> to vector<1x8x128xf32>
    tpu.vector_store %arg17[%c0_141, %c0_142, %c0_143], %865 {strides = array<i32>} : memref<1x8x128xf32, #tpu.memory_space<vmem>>, vector<1x8x128xf32>,
    return
  }
  func.func @transform_0(%arg0: i32) -> (i32, i32, i32) {
    %c0_i32 = arith.constant 0 : i32
    %c0_i32_0 = arith.constant 0 : i32
    %c0_i32_1 = arith.constant 0 : i32
    return %arg0, %c0_i32, %c0_i32_0 : i32, i32, i32
  }
  func.func @transform_1(%arg0: i32) -> (i32, i32) {
    %c0_i32 = arith.constant 0 : i32
    %c0_i32_0 = arith.constant 0 : i32
    %c0_i32_1 = arith.constant 0 : i32
    return %c0_i32, %c0_i32_0 : i32, i32
  }
  func.func @transform_2(%arg0: i32) -> (i32, i32) {
    %c0_i32 = arith.constant 0 : i32
    %c0_i32_0 = arith.constant 0 : i32
    %c0_i32_1 = arith.constant 0 : i32
    return %c0_i32, %c0_i32_0 : i32, i32
  }
  func.func @transform_3(%arg0: i32) -> (i32, i32) {
    %c0_i32 = arith.constant 0 : i32
    %c0_i32_0 = arith.constant 0 : i32
    %c0_i32_1 = arith.constant 0 : i32
    return %c0_i32, %c0_i32_0 : i32, i32
  }
  func.func @transform_4(%arg0: i32) -> (i32, i32) {
    %c0_i32 = arith.constant 0 : i32
    %c0_i32_0 = arith.constant 0 : i32
    %c0_i32_1 = arith.constant 0 : i32
    return %c0_i32, %c0_i32_0 : i32, i32
  }
  func.func @transform_5(%arg0: i32) -> (i32, i32) {
    %c0_i32 = arith.constant 0 : i32
    %c0_i32_0 = arith.constant 0 : i32
    %c0_i32_1 = arith.constant 0 : i32
    return %c0_i32, %c0_i32_0 : i32, i32
  }
  func.func @transform_6(%arg0: i32) -> (i32, i32) {
    %c0_i32 = arith.constant 0 : i32
    %c0_i32_0 = arith.constant 0 : i32
    %c0_i32_1 = arith.constant 0 : i32
    return %c0_i32, %c0_i32_0 : i32, i32
  }
  func.func @transform_7(%arg0: i32) -> (i32, i32) {
    %c0_i32 = arith.constant 0 : i32
    %c0_i32_0 = arith.constant 0 : i32
    %c0_i32_1 = arith.constant 0 : i32
    return %c0_i32, %c0_i32_0 : i32, i32
  }
  func.func @transform_8(%arg0: i32) -> (i32, i32) {
    %c0_i32 = arith.constant 0 : i32
    %c0_i32_0 = arith.constant 0 : i32
    %c0_i32_1 = arith.constant 0 : i32
    return %c0_i32, %c0_i32_0 : i32, i32
  }
  func.func @transform_9(%arg0: i32) -> (i32, i32) {
    %c0_i32 = arith.constant 0 : i32
    %c0_i32_0 = arith.constant 0 : i32
    %c0_i32_1 = arith.constant 0 : i32
    return %c0_i32, %c0_i32_0 : i32, i32
  }
  func.func @transform_10(%arg0: i32) -> (i32, i32) {
    %c0_i32 = arith.constant 0 : i32
    %c0_i32_0 = arith.constant 0 : i32
    %c0_i32_1 = arith.constant 0 : i32
    return %c0_i32, %c0_i32_0 : i32, i32
  }
  func.func @transform_11(%arg0: i32) -> (i32, i32) {
    %c0_i32 = arith.constant 0 : i32
    %c0_i32_0 = arith.constant 0 : i32
    %c0_i32_1 = arith.constant 0 : i32
    return %c0_i32, %c0_i32_0 : i32, i32
  }
  func.func @transform_12(%arg0: i32) -> (i32, i32) {
    %c0_i32 = arith.constant 0 : i32
    %c0_i32_0 = arith.constant 0 : i32
    %c0_i32_1 = arith.constant 0 : i32
    return %c0_i32, %c0_i32_0 : i32, i32
  }
  func.func @transform_13(%arg0: i32) -> (i32, i32) {
    %c0_i32 = arith.constant 0 : i32
    %c0_i32_0 = arith.constant 0 : i32
    %c0_i32_1 = arith.constant 0 : i32
    return %c0_i32, %c0_i32_0 : i32, i32
  }
  func.func @transform_14(%arg0: i32) -> (i32, i32) {
    %c0_i32 = arith.constant 0 : i32
    %c0_i32_0 = arith.constant 0 : i32
    %c0_i32_1 = arith.constant 0 : i32
    return %c0_i32, %c0_i32_0 : i32, i32
  }
  func.func @transform_15(%arg0: i32) -> (i32, i32, i32) {
    %c0_i32 = arith.constant 0 : i32
    %c0_i32_0 = arith.constant 0 : i32
    %c0_i32_1 = arith.constant 0 : i32
    return %arg0, %c0_i32, %c0_i32_0 : i32, i32, i32
  }
  func.func @transform_16(%arg0: i32) -> (i32, i32, i32) {
    %c0_i32 = arith.constant 0 : i32
    %c0_i32_0 = arith.constant 0 : i32
    %c0_i32_1 = arith.constant 0 : i32
    return %arg0, %c0_i32, %c0_i32_0 : i32, i32, i32
  }
}

</mosaic_0001>

<llo_original>
// kernel: stacked_lstm_forward.1
$region0: #{stacked_lstm_forward.1}
  #allocation0 [shape = 'u32[]', space=smem, size = 0x4, offset = 0x4, fixed_abs, tag = 'smem constant byte address 0x4 - core index']
  #allocation1 [shape = 'u32[72,128]{1,0:T(1,128)}', space=vmem, size = 0x9000, scoped, tag = 'internal scratch']
  #allocation2 [shape = 'f32[1,1]{1,0:T(1,128)S(1)}', space=vmem, size = 0x200, scoped, tag = 'scoped memory for stacked_lstm_forward.1']
  #allocation3 [shape = 'f32[1,1]{1,0:T(1,128)S(1)}', space=vmem, size = 0x200, scoped, tag = 'scoped memory for stacked_lstm_forward.1']
  %s0 = inlined_call_operand.vmem [shape: bf16[1,64,8], index: 0, kind: input, shape index: {}]
  %s1 = inlined_call_operand.vmem [shape: bf16[8,512], index: 1, kind: input, shape index: {}]
  %s2 = inlined_call_operand.vmem [shape: bf16[128,512], index: 2, kind: input, shape index: {}]
  %s3 = inlined_call_operand.vmem [shape: f32[1,512], index: 3, kind: input, shape index: {}]
  %s4 = inlined_call_operand.vmem [shape: bf16[128,256], index: 4, kind: input, shape index: {}]
  %s5 = inlined_call_operand.vmem [shape: bf16[64,256], index: 5, kind: input, shape index: {}]
  %s6 = inlined_call_operand.vmem [shape: f32[1,256], index: 6, kind: input, shape index: {}]
  %s7 = inlined_call_operand.vmem [shape: bf16[64,1], index: 7, kind: input, shape index: {}]
  %s8 = inlined_call_operand.<no memory space> [shape: f32[1,1], index: 8, kind: input, shape index: {}]
  %s9 = inlined_call_operand.vmem [shape: bf16[64,128], index: 9, kind: input, shape index: {}]
  %s10 = inlined_call_operand.vmem [shape: bf16[64,128], index: 10, kind: input, shape index: {}]
  %s11 = inlined_call_operand.vmem [shape: bf16[32,128], index: 11, kind: input, shape index: {}]
  %s12 = inlined_call_operand.vmem [shape: f32[1,128], index: 12, kind: input, shape index: {}]
  %s13 = inlined_call_operand.vmem [shape: bf16[32,1], index: 13, kind: input, shape index: {}]
  %s14 = inlined_call_operand.<no memory space> [shape: f32[1,1], index: 14, kind: input, shape index: {}]
  %s15 = inlined_call_operand.vmem [shape: f32[1,8,1], index: 15, kind: output, shape index: {0}]
  %s16 = inlined_call_operand.vmem [shape: f32[1,8,128], index: 16, kind: output, shape index: {1}]
  %17 = xla_tuple %s15, %s16
  %s18 = sld [smem:[#allocation0]]
  $region78: #{stacked_lstm_forward.1} parent=0
    _
  %s20 = ssub.s32 1, %s18
  %s21 = scalar_select 0, %s20, %s18
  %v22 = vstv %s8
  %23 = vst [vmem:[#allocation2] sm:$0x1] %v22
  %v24 = vstv %s14
  %25 = vst [vmem:[#allocation3] sm:$0x1] %v24
  // Predicated region
  $region2: #{stacked_lstm_forward.1} parent=0 // pred_check
    _
  $region3: #{stacked_lstm_forward.1} parent=0 // pred_check_branch
    %27 = sbr.rel (0) target = $region5
  $region4: #{stacked_lstm_forward.1} parent=0 // pred_region
    _
  $region5: #{stacked_lstm_forward.1} parent=0 // pred_fallthru
    _
  // Predicated region
  $region6: #{stacked_lstm_forward.1} parent=0 // pred_check
    _
  $region7: #{stacked_lstm_forward.1} parent=0 // pred_check_branch
    %29 = sbr.rel (0) target = $region9
  $region8: #{stacked_lstm_forward.1} parent=0 // pred_region
    _
  $region9: #{stacked_lstm_forward.1} parent=0 // pred_fallthru
    _
  // Predicated region
  $region10: #{stacked_lstm_forward.1} parent=0 // pred_check
    _
  $region11: #{stacked_lstm_forward.1} parent=0 // pred_check_branch
    %31 = sbr.rel (0) target = $region13
  $region12: #{stacked_lstm_forward.1} parent=0 // pred_region
    _
  $region13: #{stacked_lstm_forward.1} parent=0 // pred_fallthru
    _
  // Predicated region
  $region14: #{stacked_lstm_forward.1} parent=0 // pred_check
    _
  $region15: #{stacked_lstm_forward.1} parent=0 // pred_check_branch
    %33 = sbr.rel (0) target = $region17
  $region16: #{stacked_lstm_forward.1} parent=0 // pred_region
    _
  $region17: #{stacked_lstm_forward.1} parent=0 // pred_fallthru
    _
  // Predicated region
  $region18: #{stacked_lstm_forward.1} parent=0 // pred_check
    _
  $region19: #{stacked_lstm_forward.1} parent=0 // pred_check_branch
    %35 = sbr.rel (0) target = $region21
  $region20: #{stacked_lstm_forward.1} parent=0 // pred_region
    _
  $region21: #{stacked_lstm_forward.1} parent=0 // pred_fallthru
    _
  // Predicated region
  $region22: #{stacked_lstm_forward.1} parent=0 // pred_check
    _
  $region23: #{stacked_lstm_forward.1} parent=0 // pred_check_branch
    %37 = sbr.rel (0) target = $region25
  $region24: #{stacked_lstm_forward.1} parent=0 // pred_region
    _
  $region25: #{stacked_lstm_forward.1} parent=0 // pred_fallthru
    _
  // Predicated region
  $region26: #{stacked_lstm_forward.1} parent=0 // pred_check
    _
  $region27: #{stacked_lstm_forward.1} parent=0 // pred_check_branch
    %39 = sbr.rel (0) target = $region29
  $region28: #{stacked_lstm_forward.1} parent=0 // pred_region
    _
  $region29: #{stacked_lstm_forward.1} parent=0 // pred_fallthru
    _
  // Predicated region
  $region30: #{stacked_lstm_forward.1} parent=0 // pred_check
    _
  $region31: #{stacked_lstm_forward.1} parent=0 // pred_check_branch
    %41 = sbr.rel (0) target = $region33
  $region32: #{stacked_lstm_forward.1} parent=0 // pred_region
    _
  $region33: #{stacked_lstm_forward.1} parent=0 // pred_fallthru
    _
  // Predicated region
  $region34: #{stacked_lstm_forward.1} parent=0 // pred_check
    _
  $region35: #{stacked_lstm_forward.1} parent=0 // pred_check_branch
    %43 = sbr.rel (0) target = $region37
  $region36: #{stacked_lstm_forward.1} parent=0 // pred_region
    _
  $region37: #{stacked_lstm_forward.1} parent=0 // pred_fallthru
    _
  // Predicated region
  $region38: #{stacked_lstm_forward.1} parent=0 // pred_check
    _
  $region39: #{stacked_lstm_forward.1} parent=0 // pred_check_branch
    %45 = sbr.rel (0) target = $region41
  $region40: #{stacked_lstm_forward.1} parent=0 // pred_region
    _
  $region41: #{stacked_lstm_forward.1} parent=0 // pred_fallthru
    _
  // Predicated region
  $region42: #{stacked_lstm_forward.1} parent=0 // pred_check
    _
  $region43: #{stacked_lstm_forward.1} parent=0 // pred_check_branch
    %47 = sbr.rel (0) target = $region45
  $region44: #{stacked_lstm_forward.1} parent=0 // pred_region
    _
  $region45: #{stacked_lstm_forward.1} parent=0 // pred_fallthru
    _
  // Predicated region
  $region46: #{stacked_lstm_forward.1} parent=0 // pred_check
    _
  $region47: #{stacked_lstm_forward.1} parent=0 // pred_check_branch
    %49 = sbr.rel (0) target = $region49
  $region48: #{stacked_lstm_forward.1} parent=0 // pred_region
    _
  $region49: #{stacked_lstm_forward.1} parent=0 // pred_fallthru
    _
  // Predicated region
  $region50: #{stacked_lstm_forward.1} parent=0 // pred_check
    _
  $region51: #{stacked_lstm_forward.1} parent=0 // pred_check_branch
    %51 = sbr.rel (0) target = $region53
  $region52: #{stacked_lstm_forward.1} parent=0 // pred_region
    _
  $region53: #{stacked_lstm_forward.1} parent=0 // pred_fallthru
    _
  // Predicated region
  $region54: #{stacked_lstm_forward.1} parent=0 // pred_check
    _
  $region55: #{stacked_lstm_forward.1} parent=0 // pred_check_branch
    %53 = sbr.rel (0) target = $region57
  $region56: #{stacked_lstm_forward.1} parent=0 // pred_region
    _
  $region57: #{stacked_lstm_forward.1} parent=0 // pred_fallthru
    _
  // Predicated region
  $region58: #{stacked_lstm_forward.1} parent=0 // pred_check
    _
  $region59: #{stacked_lstm_forward.1} parent=0 // pred_check_branch
    %55 = sbr.rel (0) target = $region61
  $region60: #{stacked_lstm_forward.1} parent=0 // pred_region
    _
  $region61: #{stacked_lstm_forward.1} parent=0 // pred_fallthru
    _
  %v57 = vld [vmem:[%s0] sm:$0xf]
  %v58 = vld [vmem:[%s0 + $0x4] sm:$0xf]
  %v59 = vld [vmem:[%s0 + $0x8] sm:$0xf]
  %v60 = vld [vmem:[%s0 + $0xc] sm:$0xf]
  %v61 = vld [vmem:[%s0 + $0x10] sm:$0xf]
  %v62 = vld [vmem:[%s0 + $0x14] sm:$0xf]
  %v63 = vld [vmem:[%s0 + $0x18] sm:$0xf]
  %v64 = vld [vmem:[%s0 + $0x1c] sm:$0xf]
  %v65 = vld [vmem:[%s1] sm:$0xff]
  %v66 = vld [vmem:[%s1 + $0x8] sm:$0xff]
  %v67 = vld [vmem:[%s2] sm:$0xff]
  %v68 = vld [vmem:[%s2 + $0x8] sm:$0xff]
  %v69 = vld [vmem:[%s2 + $0x10] sm:$0xff]
  %v70 = vld [vmem:[%s2 + $0x18] sm:$0xff]
  %v71 = vld [vmem:[%s2 + $0x20] sm:$0xff]
  %v72 = vld [vmem:[%s2 + $0x28] sm:$0xff]
  %v73 = vld [vmem:[%s2 + $0x30] sm:$0xff]
  %v74 = vld [vmem:[%s2 + $0x38] sm:$0xff]
  %v75 = vld [vmem:[%s2 + $0x40] sm:$0xff]
  %v76 = vld [vmem:[%s2 + $0x48] sm:$0xff]
  %v77 = vld [vmem:[%s2 + $0x50] sm:$0xff]
  %v78 = vld [vmem:[%s2 + $0x58] sm:$0xff]
  %v79 = vld [vmem:[%s2 + $0x60] sm:$0xff]
  %v80 = vld [vmem:[%s2 + $0x68] sm:$0xff]
  %v81 = vld [vmem:[%s2 + $0x70] sm:$0xff]
  %v82 = vld [vmem:[%s2 + $0x78] sm:$0xff]
  %v83 = vld [vmem:[%s2 + $0x80] sm:$0xff]
  %v84 = vld [vmem:[%s2 + $0x88] sm:$0xff]
  %v85 = vld [vmem:[%s2 + $0x90] sm:$0xff]
  %v86 = vld [vmem:[%s2 + $0x98] sm:$0xff]
  %v87 = vld [vmem:[%s2 + $0xa0] sm:$0xff]
  %v88 = vld [vmem:[%s2 + $0xa8] sm:$0xff]
  %v89 = vld [vmem:[%s2 + $0xb0] sm:$0xff]
  %v90 = vld [vmem:[%s2 + $0xb8] sm:$0xff]
  %v91 = vld [vmem:[%s2 + $0xc0] sm:$0xff]
  %v92 = vld [vmem:[%s2 + $0xc8] sm:$0xff]
  %v93 = vld [vmem:[%s2 + $0xd0] sm:$0xff]
  %v94 = vld [vmem:[%s2 + $0xd8] sm:$0xff]
  %v95 = vld [vmem:[%s2 + $0xe0] sm:$0xff]
  %v96 = vld [vmem:[%s2 + $0xe8] sm:$0xff]
  %v97 = vld [vmem:[%s2 + $0xf0] sm:$0xff]
  %v98 = vld [vmem:[%s2 + $0xf8] sm:$0xff]
  %v99 = vld [vmem:[%s3] sm:$0xf]
  %v100 = vld [vmem:[%s4] sm:$0xff]
  %v101 = vld [vmem:[%s4 + $0x8] sm:$0xff]
  %v102 = vld [vmem:[%s4 + $0x10] sm:$0xff]
  %v103 = vld [vmem:[%s4 + $0x18] sm:$0xff]
  %v104 = vld [vmem:[%s4 + $0x20] sm:$0xff]
  %v105 = vld [vmem:[%s4 + $0x28] sm:$0xff]
  %v106 = vld [vmem:[%s4 + $0x30] sm:$0xff]
  %v107 = vld [vmem:[%s4 + $0x38] sm:$0xff]
  %v108 = vld [vmem:[%s4 + $0x40] sm:$0xff]
  %v109 = vld [vmem:[%s4 + $0x48] sm:$0xff]
  %v110 = vld [vmem:[%s4 + $0x50] sm:$0xff]
  %v111 = vld [vmem:[%s4 + $0x58] sm:$0xff]
  %v112 = vld [vmem:[%s4 + $0x60] sm:$0xff]
  %v113 = vld [vmem:[%s4 + $0x68] sm:$0xff]
  %v114 = vld [vmem:[%s4 + $0x70] sm:$0xff]
  %v115 = vld [vmem:[%s4 + $0x78] sm:$0xff]
  %v116 = vld [vmem:[%s5] sm:$0xff]
  %v117 = vld [vmem:[%s5 + $0x8] sm:$0xff]
  %v118 = vld [vmem:[%s5 + $0x10] sm:$0xff]
  %v119 = vld [vmem:[%s5 + $0x18] sm:$0xff]
  %v120 = vld [vmem:[%s5 + $0x20] sm:$0xff]
  %v121 = vld [vmem:[%s5 + $0x28] sm:$0xff]
  %v122 = vld [vmem:[%s5 + $0x30] sm:$0xff]
  %v123 = vld [vmem:[%s5 + $0x38] sm:$0xff]
  %v124 = vld [vmem:[%s6] sm:$0x3]
  %v125 = vld [vmem:[%s7] sm:$0xf]
  %v126 = vld [vmem:[%s7 + $0x4] sm:$0xf]
  %v127 = vld [vmem:[%s7 + $0x8] sm:$0xf]
  %v128 = vld [vmem:[%s7 + $0xc] sm:$0xf]
  %v129 = vld [vmem:[%s7 + $0x10] sm:$0xf]
  %v130 = vld [vmem:[%s7 + $0x14] sm:$0xf]
  %v131 = vld [vmem:[%s7 + $0x18] sm:$0xf]
  %v132 = vld [vmem:[%s7 + $0x1c] sm:$0xf]
  %v133 = vld [vmem:[#allocation2] sm:$0x1]
  %v134 = vld [vmem:[%s9] sm:$0xf]
  %v135 = vld [vmem:[%s9 + $0x4] sm:$0xf]
  %v136 = vld [vmem:[%s9 + $0x8] sm:$0xf]
  %v137 = vld [vmem:[%s9 + $0xc] sm:$0xf]
  %v138 = vld [vmem:[%s9 + $0x10] sm:$0xf]
  %v139 = vld [vmem:[%s9 + $0x14] sm:$0xf]
  %v140 = vld [vmem:[%s9 + $0x18] sm:$0xf]
  %v141 = vld [vmem:[%s9 + $0x1c] sm:$0xf]
  %v142 = vld [vmem:[%s10] sm:$0xf]
  %v143 = vld [vmem:[%s10 + $0x4] sm:$0xf]
  %v144 = vld [vmem:[%s10 + $0x8] sm:$0xf]
  %v145 = vld [vmem:[%s10 + $0xc] sm:$0xf]
  %v146 = vld [vmem:[%s10 + $0x10] sm:$0xf]
  %v147 = vld [vmem:[%s10 + $0x14] sm:$0xf]
  %v148 = vld [vmem:[%s10 + $0x18] sm:$0xf]
  %v149 = vld [vmem:[%s10 + $0x1c] sm:$0xf]
  %v150 = vld [vmem:[%s11] sm:$0xf]
  %v151 = vld [vmem:[%s11 + $0x4] sm:$0xf]
  %v152 = vld [vmem:[%s11 + $0x8] sm:$0xf]
  %v153 = vld [vmem:[%s11 + $0xc] sm:$0xf]
  %v154 = vld [vmem:[%s12] sm:$0x1]
  %v155 = vld [vmem:[%s13] sm:$0xf]
  %v156 = vld [vmem:[%s13 + $0x4] sm:$0xf]
  %v157 = vld [vmem:[%s13 + $0x8] sm:$0xf]
  %v158 = vld [vmem:[%s13 + $0xc] sm:$0xf]
  %v159 = vld [vmem:[#allocation3] sm:$0x1]
  %v161 = vperm.slane %v99, 0
  %v162 = vperm.slane %v99, 1
  %v163 = vperm.slane %v99, 2
  %v164 = vperm.slane %v99, 3
  %v177 = vunpack.c.l.b16 %v57
  %v178 = vunpack.c.l.b16 %v58
  %v179 = vunpack.c.l.b16 %v59
  %v180 = vunpack.c.l.b16 %v60
  %v181 = vunpack.c.l.b16 %v61
  %v182 = vunpack.c.l.b16 %v62
  %v183 = vunpack.c.l.b16 %v63
  %v184 = vunpack.c.l.b16 %v64
  %v185 = vpack.c.b16 %v178, %v177
  %v186 = vpack.c.b16 %v180, %v179
  %v187 = vpack.c.b16 %v182, %v181
  %v188 = vpack.c.b16 %v184, %v183
  %v191 = vunpack.c.l.b16 %v65
  %v192 = vunpack.c.h.b16 %v65
  %v193 = vunpack.c.l.b16 %v66
  %v194 = vunpack.c.h.b16 %v66
  %v195 = vpack.c.b16 %v191, %v191
  %v196 = vpack.c.b16 %v192, %v192
  %v197 = vpack.c.b16 %v193, %v193
  %v198 = vpack.c.b16 %v194, %v194
  %vm199 = vcmask 64512
  %v201 = vsel %vm199, %v185, 0
  %v204 = vsel %vm199, %v186, 0
  %v207 = vsel %vm199, %v187, 0
  %v210 = vsel %vm199, %v188, 0
  %vm212 = vcmask 1043456
  %v214 = vsel %vm212, %v195, 0
  %v217 = vsel %vm212, %v196, 0
  %v220 = vsel %vm212, %v197, 0
  %v223 = vsel %vm212, %v198, 0
  %225 = vmatpush.bf16.msra.mxu0 0
  %226 = vmatpush.bf16.msra.mxu0 0
  %227 = vmatpush.bf16.msra.mxu0 0
  %228 = vmatpush.bf16.msra.mxu0 0
  %229 = vmatpush.bf16.msra.mxu0 0
  %230 = vmatpush.bf16.msra.mxu0 0
  %231 = vmatpush.bf16.msra.mxu0 0
  %232 = vmatpush.bf16.msra.mxu0 %v214
  %233 = vmatmul.bf16.gmra.mxu0 %v201
  %v234 = vpop.f32.mrf.mxu0
  %v235 = vadd.f32 %v161, %v234
  %v236 = vpop.f32.mrf.mxu0
  %v237 = vadd.f32 %v161, %v236
  %238 = vmatmul.bf16.gmra.mxu0 %v204
  %v239 = vpop.f32.mrf.mxu0
  %v240 = vadd.f32 %v161, %v239
  %v241 = vpop.f32.mrf.mxu0
  %v242 = vadd.f32 %v161, %v241
  %243 = vmatmul.bf16.gmra.mxu0 %v207
  %v244 = vpop.f32.mrf.mxu0
  %v245 = vadd.f32 %v161, %v244
  %v246 = vpop.f32.mrf.mxu0
  %v247 = vadd.f32 %v161, %v246
  %248 = vmatmul.bf16.gmra.mxu0 %v210
  %v249 = vpop.f32.mrf.mxu0
  %v250 = vadd.f32 %v161, %v249
  %v251 = vpop.f32.mrf.mxu0
  %v252 = vadd.f32 %v161, %v251
  %253 = vdwg.mxu0
  %254 = vmatpush.bf16.msra.mxu0 0
  %255 = vmatpush.bf16.msra.mxu0 0
  %256 = vmatpush.bf16.msra.mxu0 0
  %257 = vmatpush.bf16.msra.mxu0 0
  %258 = vmatpush.bf16.msra.mxu0 0
  %259 = vmatpush.bf16.msra.mxu0 0
  %260 = vmatpush.bf16.msra.mxu0 0
  %261 = vmatpush.bf16.msra.mxu0 %v217
  %262 = vmatmul.bf16.gmra.mxu0 %v201
  %v263 = vpop.f32.mrf.mxu0
  %v264 = vadd.f32 %v162, %v263
  %v265 = vpop.f32.mrf.mxu0
  %v266 = vadd.f32 %v162, %v265
  %267 = vmatmul.bf16.gmra.mxu0 %v204
  %v268 = vpop.f32.mrf.mxu0
  %v269 = vadd.f32 %v162, %v268
  %v270 = vpop.f32.mrf.mxu0
  %v271 = vadd.f32 %v162, %v270
  %272 = vmatmul.bf16.gmra.mxu0 %v207
  %v273 = vpop.f32.mrf.mxu0
  %v274 = vadd.f32 %v162, %v273
  %v275 = vpop.f32.mrf.mxu0
  %v276 = vadd.f32 %v162, %v275
  %277 = vmatmul.bf16.gmra.mxu0 %v210
  %v278 = vpop.f32.mrf.mxu0
  %v279 = vadd.f32 %v162, %v278
  %v280 = vpop.f32.mrf.mxu0
  %v281 = vadd.f32 %v162, %v280
  %282 = vdwg.mxu0
  %283 = vmatpush.bf16.msra.mxu0 0
  %284 = vmatpush.bf16.msra.mxu0 0
  %285 = vmatpush.bf16.msra.mxu0 0
  %286 = vmatpush.bf16.msra.mxu0 0
  %287 = vmatpush.bf16.msra.mxu0 0
  %288 = vmatpush.bf16.msra.mxu0 0
  %289 = vmatpush.bf16.msra.mxu0 0
  %290 = vmatpush.bf16.msra.mxu0 %v220
  %291 = vmatmul.bf16.gmra.mxu0 %v201
  %v292 = vpop.f32.mrf.mxu0
  %v293 = vadd.f32 %v163, %v292
  %v294 = vpop.f32.mrf.mxu0
  %v295 = vadd.f32 %v163, %v294
  %296 = vmatmul.bf16.gmra.mxu0 %v204
  %v297 = vpop.f32.mrf.mxu0
  %v298 = vadd.f32 %v163, %v297
  %v299 = vpop.f32.mrf.mxu0
  %v300 = vadd.f32 %v163, %v299
  %301 = vmatmul.bf16.gmra.mxu0 %v207
  %v302 = vpop.f32.mrf.mxu0
  %v303 = vadd.f32 %v163, %v302
  %v304 = vpop.f32.mrf.mxu0
  %v305 = vadd.f32 %v163, %v304
  %306 = vmatmul.bf16.gmra.mxu0 %v210
  %v307 = vpop.f32.mrf.mxu0
  %v308 = vadd.f32 %v163, %v307
  %v309 = vpop.f32.mrf.mxu0
  %v310 = vadd.f32 %v163, %v309
  %311 = vdwg.mxu0
  %312 = vmatpush.bf16.msra.mxu0 0
  %313 = vmatpush.bf16.msra.mxu0 0
  %314 = vmatpush.bf16.msra.mxu0 0
  %315 = vmatpush.bf16.msra.mxu0 0
  %316 = vmatpush.bf16.msra.mxu0 0
  %317 = vmatpush.bf16.msra.mxu0 0
  %318 = vmatpush.bf16.msra.mxu0 0
  %319 = vmatpush.bf16.msra.mxu0 %v223
  %320 = vmatmul.bf16.gmra.mxu0 %v201
  %v321 = vpop.f32.mrf.mxu0
  %v322 = vadd.f32 %v164, %v321
  %v323 = vpop.f32.mrf.mxu0
  %v324 = vadd.f32 %v164, %v323
  %325 = vmatmul.bf16.gmra.mxu0 %v204
  %v326 = vpop.f32.mrf.mxu0
  %v327 = vadd.f32 %v164, %v326
  %v328 = vpop.f32.mrf.mxu0
  %v329 = vadd.f32 %v164, %v328
  %330 = vmatmul.bf16.gmra.mxu0 %v207
  %v331 = vpop.f32.mrf.mxu0
  %v332 = vadd.f32 %v164, %v331
  %v333 = vpop.f32.mrf.mxu0
  %v334 = vadd.f32 %v164, %v333
  %335 = vmatmul.bf16.gmra.mxu0 %v210
  %v336 = vpop.f32.mrf.mxu0
  %v337 = vadd.f32 %v164, %v336
  %v338 = vpop.f32.mrf.mxu0
  %v339 = vadd.f32 %v164, %v338
  %340 = vdwg.mxu0
  %v373 = vunpack.c.l.b16 %v67
  %v374 = vunpack.c.h.b16 %v67
  %v375 = vunpack.c.l.b16 %v68
  %v376 = vunpack.c.h.b16 %v68
  %v377 = vunpack.c.l.b16 %v69
  %v378 = vunpack.c.h.b16 %v69
  %v379 = vunpack.c.l.b16 %v70
  %v380 = vunpack.c.h.b16 %v70
  %v381 = vunpack.c.l.b16 %v71
  %v382 = vunpack.c.h.b16 %v71
  %v383 = vunpack.c.l.b16 %v72
  %v384 = vunpack.c.h.b16 %v72
  %v385 = vunpack.c.l.b16 %v73
  %v386 = vunpack.c.h.b16 %v73
  %v387 = vunpack.c.l.b16 %v74
  %v388 = vunpack.c.h.b16 %v74
  %v389 = vunpack.c.l.b16 %v75
  %v390 = vunpack.c.h.b16 %v75
  %v391 = vunpack.c.l.b16 %v76
  %v392 = vunpack.c.h.b16 %v76
  %v393 = vunpack.c.l.b16 %v77
  %v394 = vunpack.c.h.b16 %v77
  %v395 = vunpack.c.l.b16 %v78
  %v396 = vunpack.c.h.b16 %v78
  %v397 = vunpack.c.l.b16 %v79
  %v398 = vunpack.c.h.b16 %v79
  %v399 = vunpack.c.l.b16 %v80
  %v400 = vunpack.c.h.b16 %v80
  %v401 = vunpack.c.l.b16 %v81
  %v402 = vunpack.c.h.b16 %v81
  %v403 = vunpack.c.l.b16 %v82
  %v404 = vunpack.c.h.b16 %v82
  %v405 = vunpack.c.l.b16 %v83
  %v406 = vunpack.c.h.b16 %v83
  %v407 = vunpack.c.l.b16 %v84
  %v408 = vunpack.c.h.b16 %v84
  %v409 = vunpack.c.l.b16 %v85
  %v410 = vunpack.c.h.b16 %v85
  %v411 = vunpack.c.l.b16 %v86
  %v412 = vunpack.c.h.b16 %v86
  %v413 = vunpack.c.l.b16 %v87
  %v414 = vunpack.c.h.b16 %v87
  %v415 = vunpack.c.l.b16 %v88
  %v416 = vunpack.c.h.b16 %v88
  %v417 = vunpack.c.l.b16 %v89
  %v418 = vunpack.c.h.b16 %v89
  %v419 = vunpack.c.l.b16 %v90
  %v420 = vunpack.c.h.b16 %v90
  %v421 = vunpack.c.l.b16 %v91
  %v422 = vunpack.c.h.b16 %v91
  %v423 = vunpack.c.l.b16 %v92
  %v424 = vunpack.c.h.b16 %v92
  %v425 = vunpack.c.l.b16 %v93
  %v426 = vunpack.c.h.b16 %v93
  %v427 = vunpack.c.l.b16 %v94
  %v428 = vunpack.c.h.b16 %v94
  %v429 = vunpack.c.l.b16 %v95
  %v430 = vunpack.c.h.b16 %v95
  %v431 = vunpack.c.l.b16 %v96
  %v432 = vunpack.c.h.b16 %v96
  %v433 = vunpack.c.l.b16 %v97
  %v434 = vunpack.c.h.b16 %v97
  %v435 = vunpack.c.l.b16 %v98
  %v436 = vunpack.c.h.b16 %v98
  %v437 = vpack.c.b16 %v377, %v373
  %v438 = vpack.c.b16 %v378, %v374
  %v439 = vpack.c.b16 %v379, %v375
  %v440 = vpack.c.b16 %v380, %v376
  %v441 = vpack.c.b16 %v385, %v381
  %v442 = vpack.c.b16 %v386, %v382
  %v443 = vpack.c.b16 %v387, %v383
  %v444 = vpack.c.b16 %v388, %v384
  %v445 = vpack.c.b16 %v393, %v389
  %v446 = vpack.c.b16 %v394, %v390
  %v447 = vpack.c.b16 %v395, %v391
  %v448 = vpack.c.b16 %v396, %v392
  %v449 = vpack.c.b16 %v401, %v397
  %v450 = vpack.c.b16 %v402, %v398
  %v451 = vpack.c.b16 %v403, %v399
  %v452 = vpack.c.b16 %v404, %v400
  %v453 = vpack.c.b16 %v409, %v405
  %v454 = vpack.c.b16 %v410, %v406
  %v455 = vpack.c.b16 %v411, %v407
  %v456 = vpack.c.b16 %v412, %v408
  %v457 = vpack.c.b16 %v417, %v413
  %v458 = vpack.c.b16 %v418, %v414
  %v459 = vpack.c.b16 %v419, %v415
  %v460 = vpack.c.b16 %v420, %v416
  %v461 = vpack.c.b16 %v425, %v421
  %v462 = vpack.c.b16 %v426, %v422
  %v463 = vpack.c.b16 %v427, %v423
  %v464 = vpack.c.b16 %v428, %v424
  %v465 = vpack.c.b16 %v433, %v429
  %v466 = vpack.c.b16 %v434, %v430
  %v467 = vpack.c.b16 %v435, %v431
  %v468 = vpack.c.b16 %v436, %v432
  %501 = vmatpush.bf16.msra.mxu0 %v465
  %502 = vmatpush.bf16.msra.mxu0 %v461
  %503 = vmatpush.bf16.msra.mxu0 %v457
  %504 = vmatpush.bf16.msra.mxu0 %v453
  %505 = vmatpush.bf16.msra.mxu0 %v449
  %506 = vmatpush.bf16.msra.mxu0 %v445
  %507 = vmatpush.bf16.msra.mxu0 %v441
  %508 = vmatpush.bf16.msra.mxu0 %v437
  %509 = vmatmul.bf16.gmra.mxu0 0
  %v510 = vpop.f32.mrf.mxu0
  %v511 = vadd.f32 0.0, %v510
  %v512 = vpop.f32.mrf.mxu0
  %513 = vdwg.mxu0
  %514 = vmatpush.bf16.msra.mxu0 %v466
  %515 = vmatpush.bf16.msra.mxu0 %v462
  %516 = vmatpush.bf16.msra.mxu0 %v458
  %517 = vmatpush.bf16.msra.mxu0 %v454
  %518 = vmatpush.bf16.msra.mxu0 %v450
  %519 = vmatpush.bf16.msra.mxu0 %v446
  %520 = vmatpush.bf16.msra.mxu0 %v442
  %521 = vmatpush.bf16.msra.mxu0 %v438
  %522 = vmatmul.bf16.gmra.mxu0 0
  %v523 = vpop.f32.mrf.mxu0
  %v524 = vadd.f32 0.0, %v523
  %v525 = vpop.f32.mrf.mxu0
  %526 = vdwg.mxu0
  %527 = vmatpush.bf16.msra.mxu0 %v467
  %528 = vmatpush.bf16.msra.mxu0 %v463
  %529 = vmatpush.bf16.msra.mxu0 %v459
  %530 = vmatpush.bf16.msra.mxu0 %v455
  %531 = vmatpush.bf16.msra.mxu0 %v451
  %532 = vmatpush.bf16.msra.mxu0 %v447
  %533 = vmatpush.bf16.msra.mxu0 %v443
  %534 = vmatpush.bf16.msra.mxu0 %v439
  %535 = vmatmul.bf16.gmra.mxu0 0
  %v536 = vpop.f32.mrf.mxu0
  %v537 = vadd.f32 0.0, %v536
  %v538 = vpop.f32.mrf.mxu0
  %539 = vdwg.mxu0
  %540 = vmatpush.bf16.msra.mxu0 %v468
  %541 = vmatpush.bf16.msra.mxu0 %v464
  %542 = vmatpush.bf16.msra.mxu0 %v460
  %543 = vmatpush.bf16.msra.mxu0 %v456
  %544 = vmatpush.bf16.msra.mxu0 %v452
  %545 = vmatpush.bf16.msra.mxu0 %v448
  %546 = vmatpush.bf16.msra.mxu0 %v444
  %547 = vmatpush.bf16.msra.mxu0 %v440
  %548 = vmatmul.bf16.gmra.mxu0 0
  %v549 = vpop.f32.mrf.mxu0
  %v550 = vadd.f32 0.0, %v549
  %v551 = vpop.f32.mrf.mxu0
  %552 = vdwg.mxu0
  %v553 = vadd.f32 %v235, %v511
  %v554 = vadd.f32 %v264, %v524
  %v555 = vadd.f32 %v293, %v537
  %v556 = vadd.f32 %v322, %v550
  %v557 = vxor.u32 %v553, 2147483648
  %v558 = vmul.f32 %v557, 1.442695
  %v559 = vpow.pop %v558
  %v560 = vadd.f32 %v559, 1.0
  %v561 = vrcp.pop %v560
  %v562 = vmul.f32 %v560, %v561
  %v563 = vsub.f32 1.0, %v562
  %v564 = vmul.f32 %v561, %v563
  %v565 = vadd.f32 %v561, %v564
  %vm566 = vweird.f32 %v560
  %vm567 = vweird.f32 %v561
  %vm568 = vmor %vm566, %vm567
  %v569 = vsel %vm568, %v561, %v565
  %v570 = vand.u32 2147483647, %v560
  %vm571 = vcmp.eq.f32.partialorder %v570, 8.507059e+37
  %v572 = vand.u32 %v560, 2147483648
  %v573 = vor.u32 1.1754944e-38, %v572
  %v574 = vsel %vm571, %v573, %v569
  %v575 = vmul.f32 1.0, %v574
  %v576 = vxor.u32 %v554, 2147483648
  %v577 = vmul.f32 %v576, 1.442695
  %v578 = vpow.pop %v577
  %v579 = vadd.f32 %v578, 1.0
  %v580 = vrcp.pop %v579
  %v581 = vmul.f32 %v579, %v580
  %v582 = vsub.f32 1.0, %v581
  %v583 = vmul.f32 %v580, %v582
  %v584 = vadd.f32 %v580, %v583
  %vm585 = vweird.f32 %v579
  %vm586 = vweird.f32 %v580
  %vm587 = vmor %vm585, %vm586
  %v588 = vsel %vm587, %v580, %v584
  %v589 = vand.u32 2147483647, %v579
  %vm590 = vcmp.eq.f32.partialorder %v589, 8.507059e+37
  %v591 = vand.u32 %v579, 2147483648
  %v592 = vor.u32 1.1754944e-38, %v591
  %v593 = vsel %vm590, %v592, %v588
  %v594 = vmul.f32 1.0, %v593
  %v595 = vtanh.pop %v555
  %v596 = vxor.u32 %v556, 2147483648
  %v597 = vmul.f32 %v596, 1.442695
  %v598 = vpow.pop %v597
  %v599 = vadd.f32 %v598, 1.0
  %v600 = vrcp.pop %v599
  %v601 = vmul.f32 %v599, %v600
  %v602 = vsub.f32 1.0, %v601
  %v603 = vmul.f32 %v600, %v602
  %v604 = vadd.f32 %v600, %v603
  %vm605 = vweird.f32 %v599
  %vm606 = vweird.f32 %v600
  %vm607 = vmor %vm605, %vm606
  %v608 = vsel %vm607, %v600, %v604
  %v609 = vand.u32 2147483647, %v599
  %vm610 = vcmp.eq.f32.partialorder %v609, 8.507059e+37
  %v611 = vand.u32 %v599, 2147483648
  %v612 = vor.u32 1.1754944e-38, %v611
  %v613 = vsel %vm610, %v612, %v608
  %v614 = vmul.f32 1.0, %v613
  %v615 = vmul.f32 %v594, 0.0
  %v616 = vmul.f32 %v575, %v595
  %v617 = vadd.f32 %v615, %v616
  %v618 = vtanh.pop %v617
  %v619 = vmul.f32 %v614, %v618
  %v620 = vpack.c.bf16 %v619, %v619
  %621 = vmatpush.bf16.msra.mxu0 %v465
  %622 = vmatpush.bf16.msra.mxu0 %v461
  %623 = vmatpush.bf16.msra.mxu0 %v457
  %624 = vmatpush.bf16.msra.mxu0 %v453
  %625 = vmatpush.bf16.msra.mxu0 %v449
  %626 = vmatpush.bf16.msra.mxu0 %v445
  %627 = vmatpush.bf16.msra.mxu0 %v441
  %628 = vmatpush.bf16.msra.mxu0 %v437
  %629 = vmatmul.bf16.gmra.mxu0 %v620
  %v630 = vpop.f32.mrf.mxu0
  %v631 = vadd.f32 0.0, %v630
  %v632 = vpop.f32.mrf.mxu0
  %633 = vdwg.mxu0
  %634 = vmatpush.bf16.msra.mxu0 %v466
  %635 = vmatpush.bf16.msra.mxu0 %v462
  %636 = vmatpush.bf16.msra.mxu0 %v458
  %637 = vmatpush.bf16.msra.mxu0 %v454
  %638 = vmatpush.bf16.msra.mxu0 %v450
  %639 = vmatpush.bf16.msra.mxu0 %v446
  %640 = vmatpush.bf16.msra.mxu0 %v442
  %641 = vmatpush.bf16.msra.mxu0 %v438
  %642 = vmatmul.bf16.gmra.mxu0 %v620
  %v643 = vpop.f32.mrf.mxu0
  %v644 = vadd.f32 0.0, %v643
  %v645 = vpop.f32.mrf.mxu0
  %646 = vdwg.mxu0
  %647 = vmatpush.bf16.msra.mxu0 %v467
  %648 = vmatpush.bf16.msra.mxu0 %v463
  %649 = vmatpush.bf16.msra.mxu0 %v459
  %650 = vmatpush.bf16.msra.mxu0 %v455
  %651 = vmatpush.bf16.msra.mxu0 %v451
  %652 = vmatpush.bf16.msra.mxu0 %v447
  %653 = vmatpush.bf16.msra.mxu0 %v443
  %654 = vmatpush.bf16.msra.mxu0 %v439
  %655 = vmatmul.bf16.gmra.mxu0 %v620
  %v656 = vpop.f32.mrf.mxu0
  %v657 = vadd.f32 0.0, %v656
  %v658 = vpop.f32.mrf.mxu0
  %659 = vdwg.mxu0
  %660 = vmatpush.bf16.msra.mxu0 %v468
  %661 = vmatpush.bf16.msra.mxu0 %v464
  %662 = vmatpush.bf16.msra.mxu0 %v460
  %663 = vmatpush.bf16.msra.mxu0 %v456
  %664 = vmatpush.bf16.msra.mxu0 %v452
  %665 = vmatpush.bf16.msra.mxu0 %v448
  %666 = vmatpush.bf16.msra.mxu0 %v444
  %667 = vmatpush.bf16.msra.mxu0 %v440
  %668 = vmatmul.bf16.gmra.mxu0 %v620
  %v669 = vpop.f32.mrf.mxu0
  %v670 = vadd.f32 0.0, %v669
  %v671 = vpop.f32.mrf.mxu0
  %672 = vdwg.mxu0
  %v673 = vadd.f32 %v237, %v631
  %v674 = vadd.f32 %v266, %v644
  %v675 = vadd.f32 %v295, %v657
  %v676 = vadd.f32 %v324, %v670
  %v677 = vxor.u32 %v673, 2147483648
  %v678 = vmul.f32 %v677, 1.442695
  %v679 = vpow.pop %v678
  %v680 = vadd.f32 %v679, 1.0
  %v681 = vrcp.pop %v680
  %v682 = vmul.f32 %v680, %v681
  %v683 = vsub.f32 1.0, %v682
  %v684 = vmul.f32 %v681, %v683
  %v685 = vadd.f32 %v681, %v684
  %vm686 = vweird.f32 %v680
  %vm687 = vweird.f32 %v681
  %vm688 = vmor %vm686, %vm687
  %v689 = vsel %vm688, %v681, %v685
  %v690 = vand.u32 2147483647, %v680
  %vm691 = vcmp.eq.f32.partialorder %v690, 8.507059e+37
  %v692 = vand.u32 %v680, 2147483648
  %v693 = vor.u32 1.1754944e-38, %v692
  %v694 = vsel %vm691, %v693, %v689
  %v695 = vmul.f32 1.0, %v694
  %v696 = vxor.u32 %v674, 2147483648
  %v697 = vmul.f32 %v696, 1.442695
  %v698 = vpow.pop %v697
  %v699 = vadd.f32 %v698, 1.0
  %v700 = vrcp.pop %v699
  %v701 = vmul.f32 %v699, %v700
  %v702 = vsub.f32 1.0, %v701
  %v703 = vmul.f32 %v700, %v702
  %v704 = vadd.f32 %v700, %v703
  %vm705 = vweird.f32 %v699
  %vm706 = vweird.f32 %v700
  %vm707 = vmor %vm705, %vm706
  %v708 = vsel %vm707, %v700, %v704
  %v709 = vand.u32 2147483647, %v699
  %vm710 = vcmp.eq.f32.partialorder %v709, 8.507059e+37
  %v711 = vand.u32 %v699, 2147483648
  %v712 = vor.u32 1.1754944e-38, %v711
  %v713 = vsel %vm710, %v712, %v708
  %v714 = vmul.f32 1.0, %v713
  %v715 = vtanh.pop %v675
  %v716 = vxor.u32 %v676, 2147483648
  %v717 = vmul.f32 %v716, 1.442695
  %v718 = vpow.pop %v717
  %v719 = vadd.f32 %v718, 1.0
  %v720 = vrcp.pop %v719
  %v721 = vmul.f32 %v719, %v720
  %v722 = vsub.f32 1.0, %v721
  %v723 = vmul.f32 %v720, %v722
  %v724 = vadd.f32 %v720, %v723
  %vm725 = vweird.f32 %v719
  %vm726 = vweird.f32 %v720
  %vm727 = vmor %vm725, %vm726
  %v728 = vsel %vm727, %v720, %v724
  %v729 = vand.u32 2147483647, %v719
  %vm730 = vcmp.eq.f32.partialorder %v729, 8.507059e+37
  %v731 = vand.u32 %v719, 2147483648
  %v732 = vor.u32 1.1754944e-38, %v731
  %v733 = vsel %vm730, %v732, %v728
  %v734 = vmul.f32 1.0, %v733
  %v735 = vmul.f32 %v714, %v617
  %v736 = vmul.f32 %v695, %v715
  %v737 = vadd.f32 %v735, %v736
  %v738 = vtanh.pop %v737
  %v739 = vmul.f32 %v734, %v738
  %v740 = vpack.c.bf16 %v739, %v739
  %741 = vmatpush.bf16.msra.mxu0 %v465
  %742 = vmatpush.bf16.msra.mxu0 %v461
  %743 = vmatpush.bf16.msra.mxu0 %v457
  %744 = vmatpush.bf16.msra.mxu0 %v453
  %745 = vmatpush.bf16.msra.mxu0 %v449
  %746 = vmatpush.bf16.msra.mxu0 %v445
  %747 = vmatpush.bf16.msra.mxu0 %v441
  %748 = vmatpush.bf16.msra.mxu0 %v437
  %749 = vmatmul.bf16.gmra.mxu0 %v740
  %v750 = vpop.f32.mrf.mxu0
  %v751 = vadd.f32 0.0, %v750
  %v752 = vpop.f32.mrf.mxu0
  %753 = vdwg.mxu0
  %754 = vmatpush.bf16.msra.mxu0 %v466
  %755 = vmatpush.bf16.msra.mxu0 %v462
  %756 = vmatpush.bf16.msra.mxu0 %v458
  %757 = vmatpush.bf16.msra.mxu0 %v454
  %758 = vmatpush.bf16.msra.mxu0 %v450
  %759 = vmatpush.bf16.msra.mxu0 %v446
  %760 = vmatpush.bf16.msra.mxu0 %v442
  %761 = vmatpush.bf16.msra.mxu0 %v438
  %762 = vmatmul.bf16.gmra.mxu0 %v740
  %v763 = vpop.f32.mrf.mxu0
  %v764 = vadd.f32 0.0, %v763
  %v765 = vpop.f32.mrf.mxu0
  %766 = vdwg.mxu0
  %767 = vmatpush.bf16.msra.mxu0 %v467
  %768 = vmatpush.bf16.msra.mxu0 %v463
  %769 = vmatpush.bf16.msra.mxu0 %v459
  %770 = vmatpush.bf16.msra.mxu0 %v455
  %771 = vmatpush.bf16.msra.mxu0 %v451
  %772 = vmatpush.bf16.msra.mxu0 %v447
  %773 = vmatpush.bf16.msra.mxu0 %v443
  %774 = vmatpush.bf16.msra.mxu0 %v439
  %775 = vmatmul.bf16.gmra.mxu0 %v740
  %v776 = vpop.f32.mrf.mxu0
  %v777 = vadd.f32 0.0, %v776
  %v778 = vpop.f32.mrf.mxu0
  %779 = vdwg.mxu0
  %780 = vmatpush.bf16.msra.mxu0 %v468
  %781 = vmatpush.bf16.msra.mxu0 %v464
  %782 = vmatpush.bf16.msra.mxu0 %v460
  %783 = vmatpush.bf16.msra.mxu0 %v456
  %784 = vmatpush.bf16.msra.mxu0 %v452
  %785 = vmatpush.bf16.msra.mxu0 %v448
  %786 = vmatpush.bf16.msra.mxu0 %v444
  %787 = vmatpush.bf16.msra.mxu0 %v440
  %788 = vmatmul.bf16.gmra.mxu0 %v740
  %v789 = vpop.f32.mrf.mxu0
  %v790 = vadd.f32 0.0, %v789
  %v791 = vpop.f32.mrf.mxu0
  %792 = vdwg.mxu0
  %v793 = vadd.f32 %v240, %v751
  %v794 = vadd.f32 %v269, %v764
  %v795 = vadd.f32 %v298, %v777
  %v796 = vadd.f32 %v327, %v790
  %v797 = vxor.u32 %v793, 2147483648
  %v798 = vmul.f32 %v797, 1.442695
  %v799 = vpow.pop %v798
  %v800 = vadd.f32 %v799, 1.0
  %v801 = vrcp.pop %v800
  %v802 = vmul.f32 %v800, %v801
  %v803 = vsub.f32 1.0, %v802
  %v804 = vmul.f32 %v801, %v803
  %v805 = vadd.f32 %v801, %v804
  %vm806 = vweird.f32 %v800
  %vm807 = vweird.f32 %v801
  %vm808 = vmor %vm806, %vm807
  %v809 = vsel %vm808, %v801, %v805
  %v810 = vand.u32 2147483647, %v800
  %vm811 = vcmp.eq.f32.partialorder %v810, 8.507059e+37
  %v812 = vand.u32 %v800, 2147483648
  %v813 = vor.u32 1.1754944e-38, %v812
  %v814 = vsel %vm811, %v813, %v809
  %v815 = vmul.f32 1.0, %v814
  %v816 = vxor.u32 %v794, 2147483648
  %v817 = vmul.f32 %v816, 1.442695
  %v818 = vpow.pop %v817
  %v819 = vadd.f32 %v818, 1.0
  %v820 = vrcp.pop %v819
  %v821 = vmul.f32 %v819, %v820
  %v822 = vsub.f32 1.0, %v821
  %v823 = vmul.f32 %v820, %v822
  %v824 = vadd.f32 %v820, %v823
  %vm825 = vweird.f32 %v819
  %vm826 = vweird.f32 %v820
  %vm827 = vmor %vm825, %vm826
  %v828 = vsel %vm827, %v820, %v824
  %v829 = vand.u32 2147483647, %v819
  %vm830 = vcmp.eq.f32.partialorder %v829, 8.507059e+37
  %v831 = vand.u32 %v819, 2147483648
  %v832 = vor.u32 1.1754944e-38, %v831
  %v833 = vsel %vm830, %v832, %v828
  %v834 = vmul.f32 1.0, %v833
  %v835 = vtanh.pop %v795
  %v836 = vxor.u32 %v796, 2147483648
  %v837 = vmul.f32 %v836, 1.442695
  %v838 = vpow.pop %v837
  %v839 = vadd.f32 %v838, 1.0
  %v840 = vrcp.pop %v839
  %v841 = vmul.f32 %v839, %v840
  %v842 = vsub.f32 1.0, %v841
  %v843 = vmul.f32 %v840, %v842
  %v844 = vadd.f32 %v840, %v843
  %vm845 = vweird.f32 %v839
  %vm846 = vweird.f32 %v840
  %vm847 = vmor %vm845, %vm846
  %v848 = vsel %vm847, %v840, %v844
  %v849 = vand.u32 2147483647, %v839
  %vm850 = vcmp.eq.f32.partialorder %v849, 8.507059e+37
  %v851 = vand.u32 %v839, 2147483648
  %v852 = vor.u32 1.1754944e-38, %v851
  %v853 = vsel %vm850, %v852, %v848
  %v854 = vmul.f32 1.0, %v853
  %v855 = vmul.f32 %v834, %v737
  %v856 = vmul.f32 %v815, %v835
  %v857 = vadd.f32 %v855, %v856
  %v858 = vtanh.pop %v857
  %v859 = vmul.f32 %v854, %v858
  %v860 = vpack.c.bf16 %v859, %v859
  %861 = vmatpush.bf16.msra.mxu0 %v465
  %862 = vmatpush.bf16.msra.mxu0 %v461
  %863 = vmatpush.bf16.msra.mxu0 %v457
  %864 = vmatpush.bf16.msra.mxu0 %v453
  %865 = vmatpush.bf16.msra.mxu0 %v449
  %866 = vmatpush.bf16.msra.mxu0 %v445
  %867 = vmatpush.bf16.msra.mxu0 %v441
  %868 = vmatpush.bf16.msra.mxu0 %v437
  %869 = vmatmul.bf16.gmra.mxu0 %v860
  %v870 = vpop.f32.mrf.mxu0
  %v871 = vadd.f32 0.0, %v870
  %v872 = vpop.f32.mrf.mxu0
  %873 = vdwg.mxu0
  %874 = vmatpush.bf16.msra.mxu0 %v466
  %875 = vmatpush.bf16.msra.mxu0 %v462
  %876 = vmatpush.bf16.msra.mxu0 %v458
  %877 = vmatpush.bf16.msra.mxu0 %v454
  %878 = vmatpush.bf16.msra.mxu0 %v450
  %879 = vmatpush.bf16.msra.mxu0 %v446
  %880 = vmatpush.bf16.msra.mxu0 %v442
  %881 = vmatpush.bf16.msra.mxu0 %v438
  %882 = vmatmul.bf16.gmra.mxu0 %v860
  %v883 = vpop.f32.mrf.mxu0
  %v884 = vadd.f32 0.0, %v883
  %v885 = vpop.f32.mrf.mxu0
  %886 = vdwg.mxu0
  %887 = vmatpush.bf16.msra.mxu0 %v467
  %888 = vmatpush.bf16.msra.mxu0 %v463
  %889 = vmatpush.bf16.msra.mxu0 %v459
  %890 = vmatpush.bf16.msra.mxu0 %v455
  %891 = vmatpush.bf16.msra.mxu0 %v451
  %892 = vmatpush.bf16.msra.mxu0 %v447
  %893 = vmatpush.bf16.msra.mxu0 %v443
  %894 = vmatpush.bf16.msra.mxu0 %v439
  %895 = vmatmul.bf16.gmra.mxu0 %v860
  %v896 = vpop.f32.mrf.mxu0
  %v897 = vadd.f32 0.0, %v896
  %v898 = vpop.f32.mrf.mxu0
  %899 = vdwg.mxu0
  %900 = vmatpush.bf16.msra.mxu0 %v468
  %901 = vmatpush.bf16.msra.mxu0 %v464
  %902 = vmatpush.bf16.msra.mxu0 %v460
  %903 = vmatpush.bf16.msra.mxu0 %v456
  %904 = vmatpush.bf16.msra.mxu0 %v452
  %905 = vmatpush.bf16.msra.mxu0 %v448
  %906 = vmatpush.bf16.msra.mxu0 %v444
  %907 = vmatpush.bf16.msra.mxu0 %v440
  %908 = vmatmul.bf16.gmra.mxu0 %v860
  %v909 = vpop.f32.mrf.mxu0
  %v910 = vadd.f32 0.0, %v909
  %v911 = vpop.f32.mrf.mxu0
  %912 = vdwg.mxu0
  %v913 = vadd.f32 %v242, %v871
  %v914 = vadd.f32 %v271, %v884
  %v915 = vadd.f32 %v300, %v897
  %v916 = vadd.f32 %v329, %v910
  %v917 = vxor.u32 %v913, 2147483648
  %v918 = vmul.f32 %v917, 1.442695
  %v919 = vpow.pop %v918
  %v920 = vadd.f32 %v919, 1.0
  %v921 = vrcp.pop %v920
  %v922 = vmul.f32 %v920, %v921
  %v923 = vsub.f32 1.0, %v922
  %v924 = vmul.f32 %v921, %v923
  %v925 = vadd.f32 %v921, %v924
  %vm926 = vweird.f32 %v920
  %vm927 = vweird.f32 %v921
  %vm928 = vmor %vm926, %vm927
  %v929 = vsel %vm928, %v921, %v925
  %v930 = vand.u32 2147483647, %v920
  %vm931 = vcmp.eq.f32.partialorder %v930, 8.507059e+37
  %v932 = vand.u32 %v920, 2147483648
  %v933 = vor.u32 1.1754944e-38, %v932
  %v934 = vsel %vm931, %v933, %v929
  %v935 = vmul.f32 1.0, %v934
  %v936 = vxor.u32 %v914, 2147483648
  %v937 = vmul.f32 %v936, 1.442695
  %v938 = vpow.pop %v937
  %v939 = vadd.f32 %v938, 1.0
  %v940 = vrcp.pop %v939
  %v941 = vmul.f32 %v939, %v940
  %v942 = vsub.f32 1.0, %v941
  %v943 = vmul.f32 %v940, %v942
  %v944 = vadd.f32 %v940, %v943
  %vm945 = vweird.f32 %v939
  %vm946 = vweird.f32 %v940
  %vm947 = vmor %vm945, %vm946
  %v948 = vsel %vm947, %v940, %v944
  %v949 = vand.u32 2147483647, %v939
  %vm950 = vcmp.eq.f32.partialorder %v949, 8.507059e+37
  %v951 = vand.u32 %v939, 2147483648
  %v952 = vor.u32 1.1754944e-38, %v951
  %v953 = vsel %vm950, %v952, %v948
  %v954 = vmul.f32 1.0, %v953
  %v955 = vtanh.pop %v915
  %v956 = vxor.u32 %v916, 2147483648
  %v957 = vmul.f32 %v956, 1.442695
  %v958 = vpow.pop %v957
  %v959 = vadd.f32 %v958, 1.0
  %v960 = vrcp.pop %v959
  %v961 = vmul.f32 %v959, %v960
  %v962 = vsub.f32 1.0, %v961
  %v963 = vmul.f32 %v960, %v962
  %v964 = vadd.f32 %v960, %v963
  %vm965 = vweird.f32 %v959
  %vm966 = vweird.f32 %v960
  %vm967 = vmor %vm965, %vm966
  %v968 = vsel %vm967, %v960, %v964
  %v969 = vand.u32 2147483647, %v959
  %vm970 = vcmp.eq.f32.partialorder %v969, 8.507059e+37
  %v971 = vand.u32 %v959, 2147483648
  %v972 = vor.u32 1.1754944e-38, %v971
  %v973 = vsel %vm970, %v972, %v968
  %v974 = vmul.f32 1.0, %v973
  %v975 = vmul.f32 %v954, %v857
  %v976 = vmul.f32 %v935, %v955
  %v977 = vadd.f32 %v975, %v976
  %v978 = vtanh.pop %v977
  %v979 = vmul.f32 %v974, %v978
  %v980 = vpack.c.bf16 %v979, %v979
  %981 = vmatpush.bf16.msra.mxu0 %v465
  %982 = vmatpush.bf16.msra.mxu0 %v461
  %983 = vmatpush.bf16.msra.mxu0 %v457
  %984 = vmatpush.bf16.msra.mxu0 %v453
  %985 = vmatpush.bf16.msra.mxu0 %v449
  %986 = vmatpush.bf16.msra.mxu0 %v445
  %987 = vmatpush.bf16.msra.mxu0 %v441
  %988 = vmatpush.bf16.msra.mxu0 %v437
  %989 = vmatmul.bf16.gmra.mxu0 %v980
  %v990 = vpop.f32.mrf.mxu0
  %v991 = vadd.f32 0.0, %v990
  %v992 = vpop.f32.mrf.mxu0
  %993 = vdwg.mxu0
  %994 = vmatpush.bf16.msra.mxu0 %v466
  %995 = vmatpush.bf16.msra.mxu0 %v462
  %996 = vmatpush.bf16.msra.mxu0 %v458
  %997 = vmatpush.bf16.msra.mxu0 %v454
  %998 = vmatpush.bf16.msra.mxu0 %v450
  %999 = vmatpush.bf16.msra.mxu0 %v446
  %1000 = vmatpush.bf16.msra.mxu0 %v442
  %1001 = vmatpush.bf16.msra.mxu0 %v438
  %1002 = vmatmul.bf16.gmra.mxu0 %v980
  %v1003 = vpop.f32.mrf.mxu0
  %v1004 = vadd.f32 0.0, %v1003
  %v1005 = vpop.f32.mrf.mxu0
  %1006 = vdwg.mxu0
  %1007 = vmatpush.bf16.msra.mxu0 %v467
  %1008 = vmatpush.bf16.msra.mxu0 %v463
  %1009 = vmatpush.bf16.msra.mxu0 %v459
  %1010 = vmatpush.bf16.msra.mxu0 %v455
  %1011 = vmatpush.bf16.msra.mxu0 %v451
  %1012 = vmatpush.bf16.msra.mxu0 %v447
  %1013 = vmatpush.bf16.msra.mxu0 %v443
  %1014 = vmatpush.bf16.msra.mxu0 %v439
  %1015 = vmatmul.bf16.gmra.mxu0 %v980
  %v1016 = vpop.f32.mrf.mxu0
  %v1017 = vadd.f32 0.0, %v1016
  %v1018 = vpop.f32.mrf.mxu0
  %1019 = vdwg.mxu0
  %1020 = vmatpush.bf16.msra.mxu0 %v468
  %1021 = vmatpush.bf16.msra.mxu0 %v464
  %1022 = vmatpush.bf16.msra.mxu0 %v460
  %1023 = vmatpush.bf16.msra.mxu0 %v456
  %1024 = vmatpush.bf16.msra.mxu0 %v452
  %1025 = vmatpush.bf16.msra.mxu0 %v448
  %1026 = vmatpush.bf16.msra.mxu0 %v444
  %1027 = vmatpush.bf16.msra.mxu0 %v440
  %1028 = vmatmul.bf16.gmra.mxu0 %v980
  %v1029 = vpop.f32.mrf.mxu0
  %v1030 = vadd.f32 0.0, %v1029
  %v1031 = vpop.f32.mrf.mxu0
  %1032 = vdwg.mxu0
  %v1033 = vadd.f32 %v245, %v991
  %v1034 = vadd.f32 %v274, %v1004
  %v1035 = vadd.f32 %v303, %v1017
  %v1036 = vadd.f32 %v332, %v1030
  %v1037 = vxor.u32 %v1033, 2147483648
  %v1038 = vmul.f32 %v1037, 1.442695
  %v1039 = vpow.pop %v1038
  %v1040 = vadd.f32 %v1039, 1.0
  %v1041 = vrcp.pop %v1040
  %v1042 = vmul.f32 %v1040, %v1041
  %v1043 = vsub.f32 1.0, %v1042
  %v1044 = vmul.f32 %v1041, %v1043
  %v1045 = vadd.f32 %v1041, %v1044
  %vm1046 = vweird.f32 %v1040
  %vm1047 = vweird.f32 %v1041
  %vm1048 = vmor %vm1046, %vm1047
  %v1049 = vsel %vm1048, %v1041, %v1045
  %v1050 = vand.u32 2147483647, %v1040
  %vm1051 = vcmp.eq.f32.partialorder %v1050, 8.507059e+37
  %v1052 = vand.u32 %v1040, 2147483648
  %v1053 = vor.u32 1.1754944e-38, %v1052
  %v1054 = vsel %vm1051, %v1053, %v1049
  %v1055 = vmul.f32 1.0, %v1054
  %v1056 = vxor.u32 %v1034, 2147483648
  %v1057 = vmul.f32 %v1056, 1.442695
  %v1058 = vpow.pop %v1057
  %v1059 = vadd.f32 %v1058, 1.0
  %v1060 = vrcp.pop %v1059
  %v1061 = vmul.f32 %v1059, %v1060
  %v1062 = vsub.f32 1.0, %v1061
  %v1063 = vmul.f32 %v1060, %v1062
  %v1064 = vadd.f32 %v1060, %v1063
  %vm1065 = vweird.f32 %v1059
  %vm1066 = vweird.f32 %v1060
  %vm1067 = vmor %vm1065, %vm1066
  %v1068 = vsel %vm1067, %v1060, %v1064
  %v1069 = vand.u32 2147483647, %v1059
  %vm1070 = vcmp.eq.f32.partialorder %v1069, 8.507059e+37
  %v1071 = vand.u32 %v1059, 2147483648
  %v1072 = vor.u32 1.1754944e-38, %v1071
  %v1073 = vsel %vm1070, %v1072, %v1068
  %v1074 = vmul.f32 1.0, %v1073
  %v1075 = vtanh.pop %v1035
  %v1076 = vxor.u32 %v1036, 2147483648
  %v1077 = vmul.f32 %v1076, 1.442695
  %v1078 = vpow.pop %v1077
  %v1079 = vadd.f32 %v1078, 1.0
  %v1080 = vrcp.pop %v1079
  %v1081 = vmul.f32 %v1079, %v1080
  %v1082 = vsub.f32 1.0, %v1081
  %v1083 = vmul.f32 %v1080, %v1082
  %v1084 = vadd.f32 %v1080, %v1083
  %vm1085 = vweird.f32 %v1079
  %vm1086 = vweird.f32 %v1080
  %vm1087 = vmor %vm1085, %vm1086
  %v1088 = vsel %vm1087, %v1080, %v1084
  %v1089 = vand.u32 2147483647, %v1079
  %vm1090 = vcmp.eq.f32.partialorder %v1089, 8.507059e+37
  %v1091 = vand.u32 %v1079, 2147483648
  %v1092 = vor.u32 1.1754944e-38, %v1091
  %v1093 = vsel %vm1090, %v1092, %v1088
  %v1094 = vmul.f32 1.0, %v1093
  %v1095 = vmul.f32 %v1074, %v977
  %v1096 = vmul.f32 %v1055, %v1075
  %v1097 = vadd.f32 %v1095, %v1096
  %v1098 = vtanh.pop %v1097
  %v1099 = vmul.f32 %v1094, %v1098
  %v1100 = vpack.c.bf16 %v1099, %v1099
  %1101 = vmatpush.bf16.msra.mxu0 %v465
  %1102 = vmatpush.bf16.msra.mxu0 %v461
  %1103 = vmatpush.bf16.msra.mxu0 %v457
  %1104 = vmatpush.bf16.msra.mxu0 %v453
  %1105 = vmatpush.bf16.msra.mxu0 %v449
  %1106 = vmatpush.bf16.msra.mxu0 %v445
  %1107 = vmatpush.bf16.msra.mxu0 %v441
  %1108 = vmatpush.bf16.msra.mxu0 %v437
  %1109 = vmatmul.bf16.gmra.mxu0 %v1100
  %v1110 = vpop.f32.mrf.mxu0
  %v1111 = vadd.f32 0.0, %v1110
  %v1112 = vpop.f32.mrf.mxu0
  %1113 = vdwg.mxu0
  %1114 = vmatpush.bf16.msra.mxu0 %v466
  %1115 = vmatpush.bf16.msra.mxu0 %v462
  %1116 = vmatpush.bf16.msra.mxu0 %v458
  %1117 = vmatpush.bf16.msra.mxu0 %v454
  %1118 = vmatpush.bf16.msra.mxu0 %v450
  %1119 = vmatpush.bf16.msra.mxu0 %v446
  %1120 = vmatpush.bf16.msra.mxu0 %v442
  %1121 = vmatpush.bf16.msra.mxu0 %v438
  %1122 = vmatmul.bf16.gmra.mxu0 %v1100
  %v1123 = vpop.f32.mrf.mxu0
  %v1124 = vadd.f32 0.0, %v1123
  %v1125 = vpop.f32.mrf.mxu0
  %1126 = vdwg.mxu0
  %1127 = vmatpush.bf16.msra.mxu0 %v467
  %1128 = vmatpush.bf16.msra.mxu0 %v463
  %1129 = vmatpush.bf16.msra.mxu0 %v459
  %1130 = vmatpush.bf16.msra.mxu0 %v455
  %1131 = vmatpush.bf16.msra.mxu0 %v451
  %1132 = vmatpush.bf16.msra.mxu0 %v447
  %1133 = vmatpush.bf16.msra.mxu0 %v443
  %1134 = vmatpush.bf16.msra.mxu0 %v439
  %1135 = vmatmul.bf16.gmra.mxu0 %v1100
  %v1136 = vpop.f32.mrf.mxu0
  %v1137 = vadd.f32 0.0, %v1136
  %v1138 = vpop.f32.mrf.mxu0
  %1139 = vdwg.mxu0
  %1140 = vmatpush.bf16.msra.mxu0 %v468
  %1141 = vmatpush.bf16.msra.mxu0 %v464
  %1142 = vmatpush.bf16.msra.mxu0 %v460
  %1143 = vmatpush.bf16.msra.mxu0 %v456
  %1144 = vmatpush.bf16.msra.mxu0 %v452
  %1145 = vmatpush.bf16.msra.mxu0 %v448
  %1146 = vmatpush.bf16.msra.mxu0 %v444
  %1147 = vmatpush.bf16.msra.mxu0 %v440
  %1148 = vmatmul.bf16.gmra.mxu0 %v1100
  %v1149 = vpop.f32.mrf.mxu0
  %v1150 = vadd.f32 0.0, %v1149
  %v1151 = vpop.f32.mrf.mxu0
  %1152 = vdwg.mxu0
  %v1153 = vadd.f32 %v247, %v1111
  %v1154 = vadd.f32 %v276, %v1124
  %v1155 = vadd.f32 %v305, %v1137
  %v1156 = vadd.f32 %v334, %v1150
  %v1157 = vxor.u32 %v1153, 2147483648
  %v1158 = vmul.f32 %v1157, 1.442695
  %v1159 = vpow.pop %v1158
  %v1160 = vadd.f32 %v1159, 1.0
  %v1161 = vrcp.pop %v1160
  %v1162 = vmul.f32 %v1160, %v1161
  %v1163 = vsub.f32 1.0, %v1162
  %v1164 = vmul.f32 %v1161, %v1163
  %v1165 = vadd.f32 %v1161, %v1164
  %vm1166 = vweird.f32 %v1160
  %vm1167 = vweird.f32 %v1161
  %vm1168 = vmor %vm1166, %vm1167
  %v1169 = vsel %vm1168, %v1161, %v1165
  %v1170 = vand.u32 2147483647, %v1160
  %vm1171 = vcmp.eq.f32.partialorder %v1170, 8.507059e+37
  %v1172 = vand.u32 %v1160, 2147483648
  %v1173 = vor.u32 1.1754944e-38, %v1172
  %v1174 = vsel %vm1171, %v1173, %v1169
  %v1175 = vmul.f32 1.0, %v1174
  %v1176 = vxor.u32 %v1154, 2147483648
  %v1177 = vmul.f32 %v1176, 1.442695
  %v1178 = vpow.pop %v1177
  %v1179 = vadd.f32 %v1178, 1.0
  %v1180 = vrcp.pop %v1179
  %v1181 = vmul.f32 %v1179, %v1180
  %v1182 = vsub.f32 1.0, %v1181
  %v1183 = vmul.f32 %v1180, %v1182
  %v1184 = vadd.f32 %v1180, %v1183
  %vm1185 = vweird.f32 %v1179
  %vm1186 = vweird.f32 %v1180
  %vm1187 = vmor %vm1185, %vm1186
  %v1188 = vsel %vm1187, %v1180, %v1184
  %v1189 = vand.u32 2147483647, %v1179
  %vm1190 = vcmp.eq.f32.partialorder %v1189, 8.507059e+37
  %v1191 = vand.u32 %v1179, 2147483648
  %v1192 = vor.u32 1.1754944e-38, %v1191
  %v1193 = vsel %vm1190, %v1192, %v1188
  %v1194 = vmul.f32 1.0, %v1193
  %v1195 = vtanh.pop %v1155
  %v1196 = vxor.u32 %v1156, 2147483648
  %v1197 = vmul.f32 %v1196, 1.442695
  %v1198 = vpow.pop %v1197
  %v1199 = vadd.f32 %v1198, 1.0
  %v1200 = vrcp.pop %v1199
  %v1201 = vmul.f32 %v1199, %v1200
  %v1202 = vsub.f32 1.0, %v1201
  %v1203 = vmul.f32 %v1200, %v1202
  %v1204 = vadd.f32 %v1200, %v1203
  %vm1205 = vweird.f32 %v1199
  %vm1206 = vweird.f32 %v1200
  %vm1207 = vmor %vm1205, %vm1206
  %v1208 = vsel %vm1207, %v1200, %v1204
  %v1209 = vand.u32 2147483647, %v1199
  %vm1210 = vcmp.eq.f32.partialorder %v1209, 8.507059e+37
  %v1211 = vand.u32 %v1199, 2147483648
  %v1212 = vor.u32 1.1754944e-38, %v1211
  %v1213 = vsel %vm1210, %v1212, %v1208
  %v1214 = vmul.f32 1.0, %v1213
  %v1215 = vmul.f32 %v1194, %v1097
  %v1216 = vmul.f32 %v1175, %v1195
  %v1217 = vadd.f32 %v1215, %v1216
  %v1218 = vtanh.pop %v1217
  %v1219 = vmul.f32 %v1214, %v1218
  %v1220 = vpack.c.bf16 %v1219, %v1219
  %1221 = vmatpush.bf16.msra.mxu0 %v465
  %1222 = vmatpush.bf16.msra.mxu0 %v461
  %1223 = vmatpush.bf16.msra.mxu0 %v457
  %1224 = vmatpush.bf16.msra.mxu0 %v453
  %1225 = vmatpush.bf16.msra.mxu0 %v449
  %1226 = vmatpush.bf16.msra.mxu0 %v445
  %1227 = vmatpush.bf16.msra.mxu0 %v441
  %1228 = vmatpush.bf16.msra.mxu0 %v437
  %1229 = vmatmul.bf16.gmra.mxu0 %v1220
  %v1230 = vpop.f32.mrf.mxu0
  %v1231 = vadd.f32 0.0, %v1230
  %v1232 = vpop.f32.mrf.mxu0
  %1233 = vdwg.mxu0
  %1234 = vmatpush.bf16.msra.mxu0 %v466
  %1235 = vmatpush.bf16.msra.mxu0 %v462
  %1236 = vmatpush.bf16.msra.mxu0 %v458
  %1237 = vmatpush.bf16.msra.mxu0 %v454
  %1238 = vmatpush.bf16.msra.mxu0 %v450
  %1239 = vmatpush.bf16.msra.mxu0 %v446
  %1240 = vmatpush.bf16.msra.mxu0 %v442
  %1241 = vmatpush.bf16.msra.mxu0 %v438
  %1242 = vmatmul.bf16.gmra.mxu0 %v1220
  %v1243 = vpop.f32.mrf.mxu0
  %v1244 = vadd.f32 0.0, %v1243
  %v1245 = vpop.f32.mrf.mxu0
  %1246 = vdwg.mxu0
  %1247 = vmatpush.bf16.msra.mxu0 %v467
  %1248 = vmatpush.bf16.msra.mxu0 %v463
  %1249 = vmatpush.bf16.msra.mxu0 %v459
  %1250 = vmatpush.bf16.msra.mxu0 %v455
  %1251 = vmatpush.bf16.msra.mxu0 %v451
  %1252 = vmatpush.bf16.msra.mxu0 %v447
  %1253 = vmatpush.bf16.msra.mxu0 %v443
  %1254 = vmatpush.bf16.msra.mxu0 %v439
  %1255 = vmatmul.bf16.gmra.mxu0 %v1220
  %v1256 = vpop.f32.mrf.mxu0
  %v1257 = vadd.f32 0.0, %v1256
  %v1258 = vpop.f32.mrf.mxu0
  %1259 = vdwg.mxu0
  %1260 = vmatpush.bf16.msra.mxu0 %v468
  %1261 = vmatpush.bf16.msra.mxu0 %v464
  %1262 = vmatpush.bf16.msra.mxu0 %v460
  %1263 = vmatpush.bf16.msra.mxu0 %v456
  %1264 = vmatpush.bf16.msra.mxu0 %v452
  %1265 = vmatpush.bf16.msra.mxu0 %v448
  %1266 = vmatpush.bf16.msra.mxu0 %v444
  %1267 = vmatpush.bf16.msra.mxu0 %v440
  %1268 = vmatmul.bf16.gmra.mxu0 %v1220
  %v1269 = vpop.f32.mrf.mxu0
  %v1270 = vadd.f32 0.0, %v1269
  %v1271 = vpop.f32.mrf.mxu0
  %1272 = vdwg.mxu0
  %v1273 = vadd.f32 %v250, %v1231
  %v1274 = vadd.f32 %v279, %v1244
  %v1275 = vadd.f32 %v308, %v1257
  %v1276 = vadd.f32 %v337, %v1270
  %v1277 = vxor.u32 %v1273, 2147483648
  %v1278 = vmul.f32 %v1277, 1.442695
  %v1279 = vpow.pop %v1278
  %v1280 = vadd.f32 %v1279, 1.0
  %v1281 = vrcp.pop %v1280
  %v1282 = vmul.f32 %v1280, %v1281
  %v1283 = vsub.f32 1.0, %v1282
  %v1284 = vmul.f32 %v1281, %v1283
  %v1285 = vadd.f32 %v1281, %v1284
  %vm1286 = vweird.f32 %v1280
  %vm1287 = vweird.f32 %v1281
  %vm1288 = vmor %vm1286, %vm1287
  %v1289 = vsel %vm1288, %v1281, %v1285
  %v1290 = vand.u32 2147483647, %v1280
  %vm1291 = vcmp.eq.f32.partialorder %v1290, 8.507059e+37
  %v1292 = vand.u32 %v1280, 2147483648
  %v1293 = vor.u32 1.1754944e-38, %v1292
  %v1294 = vsel %vm1291, %v1293, %v1289
  %v1295 = vmul.f32 1.0, %v1294
  %v1296 = vxor.u32 %v1274, 2147483648
  %v1297 = vmul.f32 %v1296, 1.442695
  %v1298 = vpow.pop %v1297
  %v1299 = vadd.f32 %v1298, 1.0
  %v1300 = vrcp.pop %v1299
  %v1301 = vmul.f32 %v1299, %v1300
  %v1302 = vsub.f32 1.0, %v1301
  %v1303 = vmul.f32 %v1300, %v1302
  %v1304 = vadd.f32 %v1300, %v1303
  %vm1305 = vweird.f32 %v1299
  %vm1306 = vweird.f32 %v1300
  %vm1307 = vmor %vm1305, %vm1306
  %v1308 = vsel %vm1307, %v1300, %v1304
  %v1309 = vand.u32 2147483647, %v1299
  %vm1310 = vcmp.eq.f32.partialorder %v1309, 8.507059e+37
  %v1311 = vand.u32 %v1299, 2147483648
  %v1312 = vor.u32 1.1754944e-38, %v1311
  %v1313 = vsel %vm1310, %v1312, %v1308
  %v1314 = vmul.f32 1.0, %v1313
  %v1315 = vtanh.pop %v1275
  %v1316 = vxor.u32 %v1276, 2147483648
  %v1317 = vmul.f32 %v1316, 1.442695
  %v1318 = vpow.pop %v1317
  %v1319 = vadd.f32 %v1318, 1.0
  %v1320 = vrcp.pop %v1319
  %v1321 = vmul.f32 %v1319, %v1320
  %v1322 = vsub.f32 1.0, %v1321
  %v1323 = vmul.f32 %v1320, %v1322
  %v1324 = vadd.f32 %v1320, %v1323
  %vm1325 = vweird.f32 %v1319
  %vm1326 = vweird.f32 %v1320
  %vm1327 = vmor %vm1325, %vm1326
  %v1328 = vsel %vm1327, %v1320, %v1324
  %v1329 = vand.u32 2147483647, %v1319
  %vm1330 = vcmp.eq.f32.partialorder %v1329, 8.507059e+37
  %v1331 = vand.u32 %v1319, 2147483648
  %v1332 = vor.u32 1.1754944e-38, %v1331
  %v1333 = vsel %vm1330, %v1332, %v1328
  %v1334 = vmul.f32 1.0, %v1333
  %v1335 = vmul.f32 %v1314, %v1217
  %v1336 = vmul.f32 %v1295, %v1315
  %v1337 = vadd.f32 %v1335, %v1336
  %v1338 = vtanh.pop %v1337
  %v1339 = vmul.f32 %v1334, %v1338
  %v1340 = vpack.c.bf16 %v1339, %v1339
  %1341 = vmatpush.bf16.msra.mxu0 %v465
  %1342 = vmatpush.bf16.msra.mxu0 %v461
  %1343 = vmatpush.bf16.msra.mxu0 %v457
  %1344 = vmatpush.bf16.msra.mxu0 %v453
  %1345 = vmatpush.bf16.msra.mxu0 %v449
  %1346 = vmatpush.bf16.msra.mxu0 %v445
  %1347 = vmatpush.bf16.msra.mxu0 %v441
  %1348 = vmatpush.bf16.msra.mxu0 %v437
  %1349 = vmatmul.bf16.gmra.mxu0 %v1340
  %v1350 = vpop.f32.mrf.mxu0
  %v1351 = vadd.f32 0.0, %v1350
  %v1352 = vpop.f32.mrf.mxu0
  %1353 = vdwg.mxu0
  %1354 = vmatpush.bf16.msra.mxu0 %v466
  %1355 = vmatpush.bf16.msra.mxu0 %v462
  %1356 = vmatpush.bf16.msra.mxu0 %v458
  %1357 = vmatpush.bf16.msra.mxu0 %v454
  %1358 = vmatpush.bf16.msra.mxu0 %v450
  %1359 = vmatpush.bf16.msra.mxu0 %v446
  %1360 = vmatpush.bf16.msra.mxu0 %v442
  %1361 = vmatpush.bf16.msra.mxu0 %v438
  %1362 = vmatmul.bf16.gmra.mxu0 %v1340
  %v1363 = vpop.f32.mrf.mxu0
  %v1364 = vadd.f32 0.0, %v1363
  %v1365 = vpop.f32.mrf.mxu0
  %1366 = vdwg.mxu0
  %1367 = vmatpush.bf16.msra.mxu0 %v467
  %1368 = vmatpush.bf16.msra.mxu0 %v463
  %1369 = vmatpush.bf16.msra.mxu0 %v459
  %1370 = vmatpush.bf16.msra.mxu0 %v455
  %1371 = vmatpush.bf16.msra.mxu0 %v451
  %1372 = vmatpush.bf16.msra.mxu0 %v447
  %1373 = vmatpush.bf16.msra.mxu0 %v443
  %1374 = vmatpush.bf16.msra.mxu0 %v439
  %1375 = vmatmul.bf16.gmra.mxu0 %v1340
  %v1376 = vpop.f32.mrf.mxu0
  %v1377 = vadd.f32 0.0, %v1376
  %v1378 = vpop.f32.mrf.mxu0
  %1379 = vdwg.mxu0
  %1380 = vmatpush.bf16.msra.mxu0 %v468
  %1381 = vmatpush.bf16.msra.mxu0 %v464
  %1382 = vmatpush.bf16.msra.mxu0 %v460
  %1383 = vmatpush.bf16.msra.mxu0 %v456
  %1384 = vmatpush.bf16.msra.mxu0 %v452
  %1385 = vmatpush.bf16.msra.mxu0 %v448
  %1386 = vmatpush.bf16.msra.mxu0 %v444
  %1387 = vmatpush.bf16.msra.mxu0 %v440
  %1388 = vmatmul.bf16.gmra.mxu0 %v1340
  %v1389 = vpop.f32.mrf.mxu0
  %v1390 = vadd.f32 0.0, %v1389
  %v1391 = vpop.f32.mrf.mxu0
  %1392 = vdwg.mxu0
  %v1393 = vadd.f32 %v252, %v1351
  %v1394 = vadd.f32 %v281, %v1364
  %v1395 = vadd.f32 %v310, %v1377
  %v1396 = vadd.f32 %v339, %v1390
  %v1397 = vxor.u32 %v1393, 2147483648
  %v1398 = vmul.f32 %v1397, 1.442695
  %v1399 = vpow.pop %v1398
  %v1400 = vadd.f32 %v1399, 1.0
  %v1401 = vrcp.pop %v1400
  %v1402 = vmul.f32 %v1400, %v1401
  %v1403 = vsub.f32 1.0, %v1402
  %v1404 = vmul.f32 %v1401, %v1403
  %v1405 = vadd.f32 %v1401, %v1404
  %vm1406 = vweird.f32 %v1400
  %vm1407 = vweird.f32 %v1401
  %vm1408 = vmor %vm1406, %vm1407
  %v1409 = vsel %vm1408, %v1401, %v1405
  %v1410 = vand.u32 2147483647, %v1400
  %vm1411 = vcmp.eq.f32.partialorder %v1410, 8.507059e+37
  %v1412 = vand.u32 %v1400, 2147483648
  %v1413 = vor.u32 1.1754944e-38, %v1412
  %v1414 = vsel %vm1411, %v1413, %v1409
  %v1415 = vmul.f32 1.0, %v1414
  %v1416 = vxor.u32 %v1394, 2147483648
  %v1417 = vmul.f32 %v1416, 1.442695
  %v1418 = vpow.pop %v1417
  %v1419 = vadd.f32 %v1418, 1.0
  %v1420 = vrcp.pop %v1419
  %v1421 = vmul.f32 %v1419, %v1420
  %v1422 = vsub.f32 1.0, %v1421
  %v1423 = vmul.f32 %v1420, %v1422
  %v1424 = vadd.f32 %v1420, %v1423
  %vm1425 = vweird.f32 %v1419
  %vm1426 = vweird.f32 %v1420
  %vm1427 = vmor %vm1425, %vm1426
  %v1428 = vsel %vm1427, %v1420, %v1424
  %v1429 = vand.u32 2147483647, %v1419
  %vm1430 = vcmp.eq.f32.partialorder %v1429, 8.507059e+37
  %v1431 = vand.u32 %v1419, 2147483648
  %v1432 = vor.u32 1.1754944e-38, %v1431
  %v1433 = vsel %vm1430, %v1432, %v1428
  %v1434 = vmul.f32 1.0, %v1433
  %v1435 = vtanh.pop %v1395
  %v1436 = vxor.u32 %v1396, 2147483648
  %v1437 = vmul.f32 %v1436, 1.442695
  %v1438 = vpow.pop %v1437
  %v1439 = vadd.f32 %v1438, 1.0
  %v1440 = vrcp.pop %v1439
  %v1441 = vmul.f32 %v1439, %v1440
  %v1442 = vsub.f32 1.0, %v1441
  %v1443 = vmul.f32 %v1440, %v1442
  %v1444 = vadd.f32 %v1440, %v1443
  %vm1445 = vweird.f32 %v1439
  %vm1446 = vweird.f32 %v1440
  %vm1447 = vmor %vm1445, %vm1446
  %v1448 = vsel %vm1447, %v1440, %v1444
  %v1449 = vand.u32 2147483647, %v1439
  %vm1450 = vcmp.eq.f32.partialorder %v1449, 8.507059e+37
  %v1451 = vand.u32 %v1439, 2147483648
  %v1452 = vor.u32 1.1754944e-38, %v1451
  %v1453 = vsel %vm1450, %v1452, %v1448
  %v1454 = vmul.f32 1.0, %v1453
  %v1455 = vmul.f32 %v1434, %v1337
  %v1456 = vmul.f32 %v1415, %v1435
  %v1457 = vadd.f32 %v1455, %v1456
  %v1458 = vtanh.pop %v1457
  %v1459 = vmul.f32 %v1454, %v1458
  %v1460 = vpack.c.bf16 %v739, %v619
  %v1461 = vpack.c.bf16 %v979, %v859
  %v1462 = vpack.c.bf16 %v1219, %v1099
  %v1463 = vpack.c.bf16 %v1459, %v1339
  %v1465 = vperm.slane %v124, 0
  %v1466 = vperm.slane %v124, 1
  %v1485 = vunpack.c.l.b16 %v100
  %v1486 = vunpack.c.h.b16 %v100
  %v1487 = vunpack.c.l.b16 %v101
  %v1488 = vunpack.c.h.b16 %v101
  %v1489 = vunpack.c.l.b16 %v102
  %v1490 = vunpack.c.h.b16 %v102
  %v1491 = vunpack.c.l.b16 %v103
  %v1492 = vunpack.c.h.b16 %v103
  %v1493 = vunpack.c.l.b16 %v104
  %v1494 = vunpack.c.h.b16 %v104
  %v1495 = vunpack.c.l.b16 %v105
  %v1496 = vunpack.c.h.b16 %v105
  %v1497 = vunpack.c.l.b16 %v106
  %v1498 = vunpack.c.h.b16 %v106
  %v1499 = vunpack.c.l.b16 %v107
  %v1500 = vunpack.c.h.b16 %v107
  %v1501 = vunpack.c.l.b16 %v108
  %v1502 = vunpack.c.h.b16 %v108
  %v1503 = vunpack.c.l.b16 %v109
  %v1504 = vunpack.c.h.b16 %v109
  %v1505 = vunpack.c.l.b16 %v110
  %v1506 = vunpack.c.h.b16 %v110
  %v1507 = vunpack.c.l.b16 %v111
  %v1508 = vunpack.c.h.b16 %v111
  %v1509 = vunpack.c.l.b16 %v112
  %v1510 = vunpack.c.h.b16 %v112
  %v1511 = vunpack.c.l.b16 %v113
  %v1512 = vunpack.c.h.b16 %v113
  %v1513 = vunpack.c.l.b16 %v114
  %v1514 = vunpack.c.h.b16 %v114
  %v1515 = vunpack.c.l.b16 %v115
  %v1516 = vunpack.c.h.b16 %v115
  %v1517 = vpack.c.b16 %v1487, %v1485
  %v1518 = vpack.c.b16 %v1488, %v1486
  %v1519 = vpack.c.b16 %v1491, %v1489
  %v1520 = vpack.c.b16 %v1492, %v1490
  %v1521 = vpack.c.b16 %v1495, %v1493
  %v1522 = vpack.c.b16 %v1496, %v1494
  %v1523 = vpack.c.b16 %v1499, %v1497
  %v1524 = vpack.c.b16 %v1500, %v1498
  %v1525 = vpack.c.b16 %v1503, %v1501
  %v1526 = vpack.c.b16 %v1504, %v1502
  %v1527 = vpack.c.b16 %v1507, %v1505
  %v1528 = vpack.c.b16 %v1508, %v1506
  %v1529 = vpack.c.b16 %v1511, %v1509
  %v1530 = vpack.c.b16 %v1512, %v1510
  %v1531 = vpack.c.b16 %v1515, %v1513
  %v1532 = vpack.c.b16 %v1516, %v1514
  %1549 = vmatpush.bf16.msra.mxu0 %v1531
  %1550 = vmatpush.bf16.msra.mxu0 %v1529
  %1551 = vmatpush.bf16.msra.mxu0 %v1527
  %1552 = vmatpush.bf16.msra.mxu0 %v1525
  %1553 = vmatpush.bf16.msra.mxu0 %v1523
  %1554 = vmatpush.bf16.msra.mxu0 %v1521
  %1555 = vmatpush.bf16.msra.mxu0 %v1519
  %1556 = vmatpush.bf16.msra.mxu0 %v1517
  %1557 = vmatmul.bf16.gmra.mxu0 %v1460
  %v1558 = vpop.f32.mrf.mxu0
  %v1559 = vadd.f32 %v1465, %v1558
  %v1560 = vpop.f32.mrf.mxu0
  %v1561 = vadd.f32 %v1465, %v1560
  %1562 = vmatmul.bf16.gmra.mxu0 %v1461
  %v1563 = vpop.f32.mrf.mxu0
  %v1564 = vadd.f32 %v1465, %v1563
  %v1565 = vpop.f32.mrf.mxu0
  %v1566 = vadd.f32 %v1465, %v1565
  %1567 = vmatmul.bf16.gmra.mxu0 %v1462
  %v1568 = vpop.f32.mrf.mxu0
  %v1569 = vadd.f32 %v1465, %v1568
  %v1570 = vpop.f32.mrf.mxu0
  %v1571 = vadd.f32 %v1465, %v1570
  %1572 = vmatmul.bf16.gmra.mxu0 %v1463
  %v1573 = vpop.f32.mrf.mxu0
  %v1574 = vadd.f32 %v1465, %v1573
  %v1575 = vpop.f32.mrf.mxu0
  %v1576 = vadd.f32 %v1465, %v1575
  %1577 = vdwg.mxu0
  %1578 = vmatpush.bf16.msra.mxu0 %v1532
  %1579 = vmatpush.bf16.msra.mxu0 %v1530
  %1580 = vmatpush.bf16.msra.mxu0 %v1528
  %1581 = vmatpush.bf16.msra.mxu0 %v1526
  %1582 = vmatpush.bf16.msra.mxu0 %v1524
  %1583 = vmatpush.bf16.msra.mxu0 %v1522
  %1584 = vmatpush.bf16.msra.mxu0 %v1520
  %1585 = vmatpush.bf16.msra.mxu0 %v1518
  %1586 = vmatmul.bf16.gmra.mxu0 %v1460
  %v1587 = vpop.f32.mrf.mxu0
  %v1588 = vadd.f32 %v1466, %v1587
  %v1589 = vpop.f32.mrf.mxu0
  %v1590 = vadd.f32 %v1466, %v1589
  %1591 = vmatmul.bf16.gmra.mxu0 %v1461
  %v1592 = vpop.f32.mrf.mxu0
  %v1593 = vadd.f32 %v1466, %v1592
  %v1594 = vpop.f32.mrf.mxu0
  %v1595 = vadd.f32 %v1466, %v1594
  %1596 = vmatmul.bf16.gmra.mxu0 %v1462
  %v1597 = vpop.f32.mrf.mxu0
  %v1598 = vadd.f32 %v1466, %v1597
  %v1599 = vpop.f32.mrf.mxu0
  %v1600 = vadd.f32 %v1466, %v1599
  %1601 = vmatmul.bf16.gmra.mxu0 %v1463
  %v1602 = vpop.f32.mrf.mxu0
  %v1603 = vadd.f32 %v1466, %v1602
  %v1604 = vpop.f32.mrf.mxu0
  %v1605 = vadd.f32 %v1466, %v1604
  %1606 = vdwg.mxu0
  %v1615 = vunpack.c.l.b16 %v116
  %v1616 = vunpack.c.h.b16 %v116
  %v1617 = vunpack.c.l.b16 %v117
  %v1618 = vunpack.c.h.b16 %v117
  %v1619 = vunpack.c.l.b16 %v118
  %v1620 = vunpack.c.h.b16 %v118
  %v1621 = vunpack.c.l.b16 %v119
  %v1622 = vunpack.c.h.b16 %v119
  %v1623 = vunpack.c.l.b16 %v120
  %v1624 = vunpack.c.h.b16 %v120
  %v1625 = vunpack.c.l.b16 %v121
  %v1626 = vunpack.c.h.b16 %v121
  %v1627 = vunpack.c.l.b16 %v122
  %v1628 = vunpack.c.h.b16 %v122
  %v1629 = vunpack.c.l.b16 %v123
  %v1630 = vunpack.c.h.b16 %v123
  %v1631 = vpack.c.b16 %v1617, %v1615
  %v1632 = vpack.c.b16 %v1618, %v1616
  %v1633 = vpack.c.b16 %v1621, %v1619
  %v1634 = vpack.c.b16 %v1622, %v1620
  %v1635 = vpack.c.b16 %v1625, %v1623
  %v1636 = vpack.c.b16 %v1626, %v1624
  %v1637 = vpack.c.b16 %v1629, %v1627
  %v1638 = vpack.c.b16 %v1630, %v1628
  %vm1647 = vcmask 523264
  %v1649 = vsel %vm1647, 0, 0
  %1651 = vmatpush.bf16.msra.mxu0 0
  %1652 = vmatpush.bf16.msra.mxu0 0
  %1653 = vmatpush.bf16.msra.mxu0 0
  %1654 = vmatpush.bf16.msra.mxu0 0
  %1655 = vmatpush.bf16.msra.mxu0 %v1637
  %1656 = vmatpush.bf16.msra.mxu0 %v1635
  %1657 = vmatpush.bf16.msra.mxu0 %v1633
  %1658 = vmatpush.bf16.msra.mxu0 %v1631
  %1659 = vmatmul.bf16.gmra.mxu0 %v1649
  %v1660 = vpop.f32.mrf.mxu0
  %v1661 = vadd.f32 0.0, %v1660
  %v1662 = vpop.f32.mrf.mxu0
  %1663 = vdwg.mxu0
  %1664 = vmatpush.bf16.msra.mxu0 0
  %1665 = vmatpush.bf16.msra.mxu0 0
  %1666 = vmatpush.bf16.msra.mxu0 0
  %1667 = vmatpush.bf16.msra.mxu0 0
  %1668 = vmatpush.bf16.msra.mxu0 %v1638
  %1669 = vmatpush.bf16.msra.mxu0 %v1636
  %1670 = vmatpush.bf16.msra.mxu0 %v1634
  %1671 = vmatpush.bf16.msra.mxu0 %v1632
  %1672 = vmatmul.bf16.gmra.mxu0 %v1649
  %v1673 = vpop.f32.mrf.mxu0
  %v1674 = vadd.f32 0.0, %v1673
  %v1675 = vpop.f32.mrf.mxu0
  %1676 = vdwg.mxu0
  %v1677 = vadd.f32 %v1559, %v1661
  %v1678 = vadd.f32 %v1588, %v1674
  %v1679 = vxor.u32 %v1677, 2147483648
  %v1680 = vmul.f32 %v1679, 1.442695
  %v1681 = vpow.pop %v1680
  %v1682 = vadd.f32 %v1681, 1.0
  %v1683 = vrcp.pop %v1682
  %v1684 = vmul.f32 %v1682, %v1683
  %v1685 = vsub.f32 1.0, %v1684
  %v1686 = vmul.f32 %v1683, %v1685
  %v1687 = vadd.f32 %v1683, %v1686
  %vm1688 = vweird.f32 %v1682
  %vm1689 = vweird.f32 %v1683
  %vm1690 = vmor %vm1688, %vm1689
  %v1691 = vsel %vm1690, %v1683, %v1687
  %v1692 = vand.u32 2147483647, %v1682
  %vm1693 = vcmp.eq.f32.partialorder %v1692, 8.507059e+37
  %v1694 = vand.u32 %v1682, 2147483648
  %v1695 = vor.u32 1.1754944e-38, %v1694
  %v1696 = vsel %vm1693, %v1695, %v1691
  %v1697 = vmul.f32 1.0, %v1696
  %v1698 = vtanh.pop %v1678
  %v1699 = vxor.u32 %v1678, 2147483648
  %v1700 = vmul.f32 %v1699, 1.442695
  %v1701 = vpow.pop %v1700
  %v1702 = vadd.f32 %v1701, 1.0
  %v1703 = vrcp.pop %v1702
  %v1704 = vmul.f32 %v1702, %v1703
  %v1705 = vsub.f32 1.0, %v1704
  %v1706 = vmul.f32 %v1703, %v1705
  %v1707 = vadd.f32 %v1703, %v1706
  %vm1708 = vweird.f32 %v1702
  %vm1709 = vweird.f32 %v1703
  %vm1710 = vmor %vm1708, %vm1709
  %v1711 = vsel %vm1710, %v1703, %v1707
  %v1712 = vand.u32 2147483647, %v1702
  %vm1713 = vcmp.eq.f32.partialorder %v1712, 8.507059e+37
  %v1714 = vand.u32 %v1702, 2147483648
  %v1715 = vor.u32 1.1754944e-38, %v1714
  %v1716 = vsel %vm1713, %v1715, %v1711
  %v1717 = vmul.f32 1.0, %v1716
  %v1718 = vmul.f32 %v1697, 0.0
  %v1719 = vmul.f32 %v1697, %v1698
  %1721 = vrot.lane.b32.xlu0 %v1719, 64
  %v1722 = vpop.permute.xlu0 %1721
  %v1724 = vadd.f32 %v1718, %v1722
  %v1725 = vtanh.pop %v1724
  %v1726 = vmul.f32 %v1717, %v1725
  %v1727 = vpack.c.bf16 %v1726, %v1726
  %1729 = vrot.lane.b32.xlu0 %v1727, 64
  %v1730 = vpop.permute.xlu0 %1729
  %v1732 = vsel %vm1647, %v1730, 0
  %1734 = vmatpush.bf16.msra.mxu0 0
  %1735 = vmatpush.bf16.msra.mxu0 0
  %1736 = vmatpush.bf16.msra.mxu0 0
  %1737 = vmatpush.bf16.msra.mxu0 0
  %1738 = vmatpush.bf16.msra.mxu0 %v1637
  %1739 = vmatpush.bf16.msra.mxu0 %v1635
  %1740 = vmatpush.bf16.msra.mxu0 %v1633
  %1741 = vmatpush.bf16.msra.mxu0 %v1631
  %1742 = vmatmul.bf16.gmra.mxu0 %v1732
  %v1743 = vpop.f32.mrf.mxu0
  %v1744 = vadd.f32 0.0, %v1743
  %v1745 = vpop.f32.mrf.mxu0
  %1746 = vdwg.mxu0
  %1747 = vmatpush.bf16.msra.mxu0 0
  %1748 = vmatpush.bf16.msra.mxu0 0
  %1749 = vmatpush.bf16.msra.mxu0 0
  %1750 = vmatpush.bf16.msra.mxu0 0
  %1751 = vmatpush.bf16.msra.mxu0 %v1638
  %1752 = vmatpush.bf16.msra.mxu0 %v1636
  %1753 = vmatpush.bf16.msra.mxu0 %v1634
  %1754 = vmatpush.bf16.msra.mxu0 %v1632
  %1755 = vmatmul.bf16.gmra.mxu0 %v1732
  %v1756 = vpop.f32.mrf.mxu0
  %v1757 = vadd.f32 0.0, %v1756
  %v1758 = vpop.f32.mrf.mxu0
  %1759 = vdwg.mxu0
  %v1760 = vadd.f32 %v1561, %v1744
  %v1761 = vadd.f32 %v1590, %v1757
  %v1762 = vxor.u32 %v1760, 2147483648
  %v1763 = vmul.f32 %v1762, 1.442695
  %v1764 = vpow.pop %v1763
  %v1765 = vadd.f32 %v1764, 1.0
  %v1766 = vrcp.pop %v1765
  %v1767 = vmul.f32 %v1765, %v1766
  %v1768 = vsub.f32 1.0, %v1767
  %v1769 = vmul.f32 %v1766, %v1768
  %v1770 = vadd.f32 %v1766, %v1769
  %vm1771 = vweird.f32 %v1765
  %vm1772 = vweird.f32 %v1766
  %vm1773 = vmor %vm1771, %vm1772
  %v1774 = vsel %vm1773, %v1766, %v1770
  %v1775 = vand.u32 2147483647, %v1765
  %vm1776 = vcmp.eq.f32.partialorder %v1775, 8.507059e+37
  %v1777 = vand.u32 %v1765, 2147483648
  %v1778 = vor.u32 1.1754944e-38, %v1777
  %v1779 = vsel %vm1776, %v1778, %v1774
  %v1780 = vmul.f32 1.0, %v1779
  %v1781 = vtanh.pop %v1761
  %v1782 = vxor.u32 %v1761, 2147483648
  %v1783 = vmul.f32 %v1782, 1.442695
  %v1784 = vpow.pop %v1783
  %v1785 = vadd.f32 %v1784, 1.0
  %v1786 = vrcp.pop %v1785
  %v1787 = vmul.f32 %v1785, %v1786
  %v1788 = vsub.f32 1.0, %v1787
  %v1789 = vmul.f32 %v1786, %v1788
  %v1790 = vadd.f32 %v1786, %v1789
  %vm1791 = vweird.f32 %v1785
  %vm1792 = vweird.f32 %v1786
  %vm1793 = vmor %vm1791, %vm1792
  %v1794 = vsel %vm1793, %v1786, %v1790
  %v1795 = vand.u32 2147483647, %v1785
  %vm1796 = vcmp.eq.f32.partialorder %v1795, 8.507059e+37
  %v1797 = vand.u32 %v1785, 2147483648
  %v1798 = vor.u32 1.1754944e-38, %v1797
  %v1799 = vsel %vm1796, %v1798, %v1794
  %v1800 = vmul.f32 1.0, %v1799
  %v1801 = vmul.f32 %v1780, %v1724
  %v1802 = vmul.f32 %v1780, %v1781
  %1804 = vrot.lane.b32.xlu0 %v1802, 64
  %v1805 = vpop.permute.xlu0 %1804
  %v1807 = vadd.f32 %v1801, %v1805
  %v1808 = vtanh.pop %v1807
  %v1809 = vmul.f32 %v1800, %v1808
  %v1810 = vpack.c.bf16 %v1809, %v1809
  %1812 = vrot.lane.b32.xlu0 %v1810, 64
  %v1813 = vpop.permute.xlu0 %1812
  %v1815 = vsel %vm1647, %v1813, 0
  %1817 = vmatpush.bf16.msra.mxu0 0
  %1818 = vmatpush.bf16.msra.mxu0 0
  %1819 = vmatpush.bf16.msra.mxu0 0
  %1820 = vmatpush.bf16.msra.mxu0 0
  %1821 = vmatpush.bf16.msra.mxu0 %v1637
  %1822 = vmatpush.bf16.msra.mxu0 %v1635
  %1823 = vmatpush.bf16.msra.mxu0 %v1633
  %1824 = vmatpush.bf16.msra.mxu0 %v1631
  %1825 = vmatmul.bf16.gmra.mxu0 %v1815
  %v1826 = vpop.f32.mrf.mxu0
  %v1827 = vadd.f32 0.0, %v1826
  %v1828 = vpop.f32.mrf.mxu0
  %1829 = vdwg.mxu0
  %1830 = vmatpush.bf16.msra.mxu0 0
  %1831 = vmatpush.bf16.msra.mxu0 0
  %1832 = vmatpush.bf16.msra.mxu0 0
  %1833 = vmatpush.bf16.msra.mxu0 0
  %1834 = vmatpush.bf16.msra.mxu0 %v1638
  %1835 = vmatpush.bf16.msra.mxu0 %v1636
  %1836 = vmatpush.bf16.msra.mxu0 %v1634
  %1837 = vmatpush.bf16.msra.mxu0 %v1632
  %1838 = vmatmul.bf16.gmra.mxu0 %v1815
  %v1839 = vpop.f32.mrf.mxu0
  %v1840 = vadd.f32 0.0, %v1839
  %v1841 = vpop.f32.mrf.mxu0
  %1842 = vdwg.mxu0
  %v1843 = vadd.f32 %v1564, %v1827
  %v1844 = vadd.f32 %v1593, %v1840
  %v1845 = vxor.u32 %v1843, 2147483648
  %v1846 = vmul.f32 %v1845, 1.442695
  %v1847 = vpow.pop %v1846
  %v1848 = vadd.f32 %v1847, 1.0
  %v1849 = vrcp.pop %v1848
  %v1850 = vmul.f32 %v1848, %v1849
  %v1851 = vsub.f32 1.0, %v1850
  %v1852 = vmul.f32 %v1849, %v1851
  %v1853 = vadd.f32 %v1849, %v1852
  %vm1854 = vweird.f32 %v1848
  %vm1855 = vweird.f32 %v1849
  %vm1856 = vmor %vm1854, %vm1855
  %v1857 = vsel %vm1856, %v1849, %v1853
  %v1858 = vand.u32 2147483647, %v1848
  %vm1859 = vcmp.eq.f32.partialorder %v1858, 8.507059e+37
  %v1860 = vand.u32 %v1848, 2147483648
  %v1861 = vor.u32 1.1754944e-38, %v1860
  %v1862 = vsel %vm1859, %v1861, %v1857
  %v1863 = vmul.f32 1.0, %v1862
  %v1864 = vtanh.pop %v1844
  %v1865 = vxor.u32 %v1844, 2147483648
  %v1866 = vmul.f32 %v1865, 1.442695
  %v1867 = vpow.pop %v1866
  %v1868 = vadd.f32 %v1867, 1.0
  %v1869 = vrcp.pop %v1868
  %v1870 = vmul.f32 %v1868, %v1869
  %v1871 = vsub.f32 1.0, %v1870
  %v1872 = vmul.f32 %v1869, %v1871
  %v1873 = vadd.f32 %v1869, %v1872
  %vm1874 = vweird.f32 %v1868
  %vm1875 = vweird.f32 %v1869
  %vm1876 = vmor %vm1874, %vm1875
  %v1877 = vsel %vm1876, %v1869, %v1873
  %v1878 = vand.u32 2147483647, %v1868
  %vm1879 = vcmp.eq.f32.partialorder %v1878, 8.507059e+37
  %v1880 = vand.u32 %v1868, 2147483648
  %v1881 = vor.u32 1.1754944e-38, %v1880
  %v1882 = vsel %vm1879, %v1881, %v1877
  %v1883 = vmul.f32 1.0, %v1882
  %v1884 = vmul.f32 %v1863, %v1807
  %v1885 = vmul.f32 %v1863, %v1864
  %1887 = vrot.lane.b32.xlu0 %v1885, 64
  %v1888 = vpop.permute.xlu0 %1887
  %v1890 = vadd.f32 %v1884, %v1888
  %v1891 = vtanh.pop %v1890
  %v1892 = vmul.f32 %v1883, %v1891
  %v1893 = vpack.c.bf16 %v1892, %v1892
  %1895 = vrot.lane.b32.xlu0 %v1893, 64
  %v1896 = vpop.permute.xlu0 %1895
  %v1898 = vsel %vm1647, %v1896, 0
  %1900 = vmatpush.bf16.msra.mxu0 0
  %1901 = vmatpush.bf16.msra.mxu0 0
  %1902 = vmatpush.bf16.msra.mxu0 0
  %1903 = vmatpush.bf16.msra.mxu0 0
  %1904 = vmatpush.bf16.msra.mxu0 %v1637
  %1905 = vmatpush.bf16.msra.mxu0 %v1635
  %1906 = vmatpush.bf16.msra.mxu0 %v1633
  %1907 = vmatpush.bf16.msra.mxu0 %v1631
  %1908 = vmatmul.bf16.gmra.mxu0 %v1898
  %v1909 = vpop.f32.mrf.mxu0
  %v1910 = vadd.f32 0.0, %v1909
  %v1911 = vpop.f32.mrf.mxu0
  %1912 = vdwg.mxu0
  %1913 = vmatpush.bf16.msra.mxu0 0
  %1914 = vmatpush.bf16.msra.mxu0 0
  %1915 = vmatpush.bf16.msra.mxu0 0
  %1916 = vmatpush.bf16.msra.mxu0 0
  %1917 = vmatpush.bf16.msra.mxu0 %v1638
  %1918 = vmatpush.bf16.msra.mxu0 %v1636
  %1919 = vmatpush.bf16.msra.mxu0 %v1634
  %1920 = vmatpush.bf16.msra.mxu0 %v1632
  %1921 = vmatmul.bf16.gmra.mxu0 %v1898
  %v1922 = vpop.f32.mrf.mxu0
  %v1923 = vadd.f32 0.0, %v1922
  %v1924 = vpop.f32.mrf.mxu0
  %1925 = vdwg.mxu0
  %v1926 = vadd.f32 %v1566, %v1910
  %v1927 = vadd.f32 %v1595, %v1923
  %v1928 = vxor.u32 %v1926, 2147483648
  %v1929 = vmul.f32 %v1928, 1.442695
  %v1930 = vpow.pop %v1929
  %v1931 = vadd.f32 %v1930, 1.0
  %v1932 = vrcp.pop %v1931
  %v1933 = vmul.f32 %v1931, %v1932
  %v1934 = vsub.f32 1.0, %v1933
  %v1935 = vmul.f32 %v1932, %v1934
  %v1936 = vadd.f32 %v1932, %v1935
  %vm1937 = vweird.f32 %v1931
  %vm1938 = vweird.f32 %v1932
  %vm1939 = vmor %vm1937, %vm1938
  %v1940 = vsel %vm1939, %v1932, %v1936
  %v1941 = vand.u32 2147483647, %v1931
  %vm1942 = vcmp.eq.f32.partialorder %v1941, 8.507059e+37
  %v1943 = vand.u32 %v1931, 2147483648
  %v1944 = vor.u32 1.1754944e-38, %v1943
  %v1945 = vsel %vm1942, %v1944, %v1940
  %v1946 = vmul.f32 1.0, %v1945
  %v1947 = vtanh.pop %v1927
  %v1948 = vxor.u32 %v1927, 2147483648
  %v1949 = vmul.f32 %v1948, 1.442695
  %v1950 = vpow.pop %v1949
  %v1951 = vadd.f32 %v1950, 1.0
  %v1952 = vrcp.pop %v1951
  %v1953 = vmul.f32 %v1951, %v1952
  %v1954 = vsub.f32 1.0, %v1953
  %v1955 = vmul.f32 %v1952, %v1954
  %v1956 = vadd.f32 %v1952, %v1955
  %vm1957 = vweird.f32 %v1951
  %vm1958 = vweird.f32 %v1952
  %vm1959 = vmor %vm1957, %vm1958
  %v1960 = vsel %vm1959, %v1952, %v1956
  %v1961 = vand.u32 2147483647, %v1951
  %vm1962 = vcmp.eq.f32.partialorder %v1961, 8.507059e+37
  %v1963 = vand.u32 %v1951, 2147483648
  %v1964 = vor.u32 1.1754944e-38, %v1963
  %v1965 = vsel %vm1962, %v1964, %v1960
  %v1966 = vmul.f32 1.0, %v1965
  %v1967 = vmul.f32 %v1946, %v1890
  %v1968 = vmul.f32 %v1946, %v1947
  %1970 = vrot.lane.b32.xlu0 %v1968, 64
  %v1971 = vpop.permute.xlu0 %1970
  %v1973 = vadd.f32 %v1967, %v1971
  %v1974 = vtanh.pop %v1973
  %v1975 = vmul.f32 %v1966, %v1974
  %v1976 = vpack.c.bf16 %v1975, %v1975
  %1978 = vrot.lane.b32.xlu0 %v1976, 64
  %v1979 = vpop.permute.xlu0 %1978
  %v1981 = vsel %vm1647, %v1979, 0
  %1983 = vmatpush.bf16.msra.mxu0 0
  %1984 = vmatpush.bf16.msra.mxu0 0
  %1985 = vmatpush.bf16.msra.mxu0 0
  %1986 = vmatpush.bf16.msra.mxu0 0
  %1987 = vmatpush.bf16.msra.mxu0 %v1637
  %1988 = vmatpush.bf16.msra.mxu0 %v1635
  %1989 = vmatpush.bf16.msra.mxu0 %v1633
  %1990 = vmatpush.bf16.msra.mxu0 %v1631
  %1991 = vmatmul.bf16.gmra.mxu0 %v1981
  %v1992 = vpop.f32.mrf.mxu0
  %v1993 = vadd.f32 0.0, %v1992
  %v1994 = vpop.f32.mrf.mxu0
  %1995 = vdwg.mxu0
  %1996 = vmatpush.bf16.msra.mxu0 0
  %1997 = vmatpush.bf16.msra.mxu0 0
  %1998 = vmatpush.bf16.msra.mxu0 0
  %1999 = vmatpush.bf16.msra.mxu0 0
  %2000 = vmatpush.bf16.msra.mxu0 %v1638
  %2001 = vmatpush.bf16.msra.mxu0 %v1636
  %2002 = vmatpush.bf16.msra.mxu0 %v1634
  %2003 = vmatpush.bf16.msra.mxu0 %v1632
  %2004 = vmatmul.bf16.gmra.mxu0 %v1981
  %v2005 = vpop.f32.mrf.mxu0
  %v2006 = vadd.f32 0.0, %v2005
  %v2007 = vpop.f32.mrf.mxu0
  %2008 = vdwg.mxu0
  %v2009 = vadd.f32 %v1569, %v1993
  %v2010 = vadd.f32 %v1598, %v2006
  %v2011 = vxor.u32 %v2009, 2147483648
  %v2012 = vmul.f32 %v2011, 1.442695
  %v2013 = vpow.pop %v2012
  %v2014 = vadd.f32 %v2013, 1.0
  %v2015 = vrcp.pop %v2014
  %v2016 = vmul.f32 %v2014, %v2015
  %v2017 = vsub.f32 1.0, %v2016
  %v2018 = vmul.f32 %v2015, %v2017
  %v2019 = vadd.f32 %v2015, %v2018
  %vm2020 = vweird.f32 %v2014
  %vm2021 = vweird.f32 %v2015
  %vm2022 = vmor %vm2020, %vm2021
  %v2023 = vsel %vm2022, %v2015, %v2019
  %v2024 = vand.u32 2147483647, %v2014
  %vm2025 = vcmp.eq.f32.partialorder %v2024, 8.507059e+37
  %v2026 = vand.u32 %v2014, 2147483648
  %v2027 = vor.u32 1.1754944e-38, %v2026
  %v2028 = vsel %vm2025, %v2027, %v2023
  %v2029 = vmul.f32 1.0, %v2028
  %v2030 = vtanh.pop %v2010
  %v2031 = vxor.u32 %v2010, 2147483648
  %v2032 = vmul.f32 %v2031, 1.442695
  %v2033 = vpow.pop %v2032
  %v2034 = vadd.f32 %v2033, 1.0
  %v2035 = vrcp.pop %v2034
  %v2036 = vmul.f32 %v2034, %v2035
  %v2037 = vsub.f32 1.0, %v2036
  %v2038 = vmul.f32 %v2035, %v2037
  %v2039 = vadd.f32 %v2035, %v2038
  %vm2040 = vweird.f32 %v2034
  %vm2041 = vweird.f32 %v2035
  %vm2042 = vmor %vm2040, %vm2041
  %v2043 = vsel %vm2042, %v2035, %v2039
  %v2044 = vand.u32 2147483647, %v2034
  %vm2045 = vcmp.eq.f32.partialorder %v2044, 8.507059e+37
  %v2046 = vand.u32 %v2034, 2147483648
  %v2047 = vor.u32 1.1754944e-38, %v2046
  %v2048 = vsel %vm2045, %v2047, %v2043
  %v2049 = vmul.f32 1.0, %v2048
  %v2050 = vmul.f32 %v2029, %v1973
  %v2051 = vmul.f32 %v2029, %v2030
  %2053 = vrot.lane.b32.xlu0 %v2051, 64
  %v2054 = vpop.permute.xlu0 %2053
  %v2056 = vadd.f32 %v2050, %v2054
  %v2057 = vtanh.pop %v2056
  %v2058 = vmul.f32 %v2049, %v2057
  %v2059 = vpack.c.bf16 %v2058, %v2058
  %2061 = vrot.lane.b32.xlu0 %v2059, 64
  %v2062 = vpop.permute.xlu0 %2061
  %v2064 = vsel %vm1647, %v2062, 0
  %2066 = vmatpush.bf16.msra.mxu0 0
  %2067 = vmatpush.bf16.msra.mxu0 0
  %2068 = vmatpush.bf16.msra.mxu0 0
  %2069 = vmatpush.bf16.msra.mxu0 0
  %2070 = vmatpush.bf16.msra.mxu0 %v1637
  %2071 = vmatpush.bf16.msra.mxu0 %v1635
  %2072 = vmatpush.bf16.msra.mxu0 %v1633
  %2073 = vmatpush.bf16.msra.mxu0 %v1631
  %2074 = vmatmul.bf16.gmra.mxu0 %v2064
  %v2075 = vpop.f32.mrf.mxu0
  %v2076 = vadd.f32 0.0, %v2075
  %v2077 = vpop.f32.mrf.mxu0
  %2078 = vdwg.mxu0
  %2079 = vmatpush.bf16.msra.mxu0 0
  %2080 = vmatpush.bf16.msra.mxu0 0
  %2081 = vmatpush.bf16.msra.mxu0 0
  %2082 = vmatpush.bf16.msra.mxu0 0
  %2083 = vmatpush.bf16.msra.mxu0 %v1638
  %2084 = vmatpush.bf16.msra.mxu0 %v1636
  %2085 = vmatpush.bf16.msra.mxu0 %v1634
  %2086 = vmatpush.bf16.msra.mxu0 %v1632
  %2087 = vmatmul.bf16.gmra.mxu0 %v2064
  %v2088 = vpop.f32.mrf.mxu0
  %v2089 = vadd.f32 0.0, %v2088
  %v2090 = vpop.f32.mrf.mxu0
  %2091 = vdwg.mxu0
  %v2092 = vadd.f32 %v1571, %v2076
  %v2093 = vadd.f32 %v1600, %v2089
  %v2094 = vxor.u32 %v2092, 2147483648
  %v2095 = vmul.f32 %v2094, 1.442695
  %v2096 = vpow.pop %v2095
  %v2097 = vadd.f32 %v2096, 1.0
  %v2098 = vrcp.pop %v2097
  %v2099 = vmul.f32 %v2097, %v2098
  %v2100 = vsub.f32 1.0, %v2099
  %v2101 = vmul.f32 %v2098, %v2100
  %v2102 = vadd.f32 %v2098, %v2101
  %vm2103 = vweird.f32 %v2097
  %vm2104 = vweird.f32 %v2098
  %vm2105 = vmor %vm2103, %vm2104
  %v2106 = vsel %vm2105, %v2098, %v2102
  %v2107 = vand.u32 2147483647, %v2097
  %vm2108 = vcmp.eq.f32.partialorder %v2107, 8.507059e+37
  %v2109 = vand.u32 %v2097, 2147483648
  %v2110 = vor.u32 1.1754944e-38, %v2109
  %v2111 = vsel %vm2108, %v2110, %v2106
  %v2112 = vmul.f32 1.0, %v2111
  %v2113 = vtanh.pop %v2093
  %v2114 = vxor.u32 %v2093, 2147483648
  %v2115 = vmul.f32 %v2114, 1.442695
  %v2116 = vpow.pop %v2115
  %v2117 = vadd.f32 %v2116, 1.0
  %v2118 = vrcp.pop %v2117
  %v2119 = vmul.f32 %v2117, %v2118
  %v2120 = vsub.f32 1.0, %v2119
  %v2121 = vmul.f32 %v2118, %v2120
  %v2122 = vadd.f32 %v2118, %v2121
  %vm2123 = vweird.f32 %v2117
  %vm2124 = vweird.f32 %v2118
  %vm2125 = vmor %vm2123, %vm2124
  %v2126 = vsel %vm2125, %v2118, %v2122
  %v2127 = vand.u32 2147483647, %v2117
  %vm2128 = vcmp.eq.f32.partialorder %v2127, 8.507059e+37
  %v2129 = vand.u32 %v2117, 2147483648
  %v2130 = vor.u32 1.1754944e-38, %v2129
  %v2131 = vsel %vm2128, %v2130, %v2126
  %v2132 = vmul.f32 1.0, %v2131
  %v2133 = vmul.f32 %v2112, %v2056
  %v2134 = vmul.f32 %v2112, %v2113
  %2136 = vrot.lane.b32.xlu0 %v2134, 64
  %v2137 = vpop.permute.xlu0 %2136
  %v2139 = vadd.f32 %v2133, %v2137
  %v2140 = vtanh.pop %v2139
  %v2141 = vmul.f32 %v2132, %v2140
  %v2142 = vpack.c.bf16 %v2141, %v2141
  %2144 = vrot.lane.b32.xlu0 %v2142, 64
  %v2145 = vpop.permute.xlu0 %2144
  %v2147 = vsel %vm1647, %v2145, 0
  %2149 = vmatpush.bf16.msra.mxu0 0
  %2150 = vmatpush.bf16.msra.mxu0 0
  %2151 = vmatpush.bf16.msra.mxu0 0
  %2152 = vmatpush.bf16.msra.mxu0 0
  %2153 = vmatpush.bf16.msra.mxu0 %v1637
  %2154 = vmatpush.bf16.msra.mxu0 %v1635
  %2155 = vmatpush.bf16.msra.mxu0 %v1633
  %2156 = vmatpush.bf16.msra.mxu0 %v1631
  %2157 = vmatmul.bf16.gmra.mxu0 %v2147
  %v2158 = vpop.f32.mrf.mxu0
  %v2159 = vadd.f32 0.0, %v2158
  %v2160 = vpop.f32.mrf.mxu0
  %2161 = vdwg.mxu0
  %2162 = vmatpush.bf16.msra.mxu0 0
  %2163 = vmatpush.bf16.msra.mxu0 0
  %2164 = vmatpush.bf16.msra.mxu0 0
  %2165 = vmatpush.bf16.msra.mxu0 0
  %2166 = vmatpush.bf16.msra.mxu0 %v1638
  %2167 = vmatpush.bf16.msra.mxu0 %v1636
  %2168 = vmatpush.bf16.msra.mxu0 %v1634
  %2169 = vmatpush.bf16.msra.mxu0 %v1632
  %2170 = vmatmul.bf16.gmra.mxu0 %v2147
  %v2171 = vpop.f32.mrf.mxu0
  %v2172 = vadd.f32 0.0, %v2171
  %v2173 = vpop.f32.mrf.mxu0
  %2174 = vdwg.mxu0
  %v2175 = vadd.f32 %v1574, %v2159
  %v2176 = vadd.f32 %v1603, %v2172
  %v2177 = vxor.u32 %v2175, 2147483648
  %v2178 = vmul.f32 %v2177, 1.442695
  %v2179 = vpow.pop %v2178
  %v2180 = vadd.f32 %v2179, 1.0
  %v2181 = vrcp.pop %v2180
  %v2182 = vmul.f32 %v2180, %v2181
  %v2183 = vsub.f32 1.0, %v2182
  %v2184 = vmul.f32 %v2181, %v2183
  %v2185 = vadd.f32 %v2181, %v2184
  %vm2186 = vweird.f32 %v2180
  %vm2187 = vweird.f32 %v2181
  %vm2188 = vmor %vm2186, %vm2187
  %v2189 = vsel %vm2188, %v2181, %v2185
  %v2190 = vand.u32 2147483647, %v2180
  %vm2191 = vcmp.eq.f32.partialorder %v2190, 8.507059e+37
  %v2192 = vand.u32 %v2180, 2147483648
  %v2193 = vor.u32 1.1754944e-38, %v2192
  %v2194 = vsel %vm2191, %v2193, %v2189
  %v2195 = vmul.f32 1.0, %v2194
  %v2196 = vtanh.pop %v2176
  %v2197 = vxor.u32 %v2176, 2147483648
  %v2198 = vmul.f32 %v2197, 1.442695
  %v2199 = vpow.pop %v2198
  %v2200 = vadd.f32 %v2199, 1.0
  %v2201 = vrcp.pop %v2200
  %v2202 = vmul.f32 %v2200, %v2201
  %v2203 = vsub.f32 1.0, %v2202
  %v2204 = vmul.f32 %v2201, %v2203
  %v2205 = vadd.f32 %v2201, %v2204
  %vm2206 = vweird.f32 %v2200
  %vm2207 = vweird.f32 %v2201
  %vm2208 = vmor %vm2206, %vm2207
  %v2209 = vsel %vm2208, %v2201, %v2205
  %v2210 = vand.u32 2147483647, %v2200
  %vm2211 = vcmp.eq.f32.partialorder %v2210, 8.507059e+37
  %v2212 = vand.u32 %v2200, 2147483648
  %v2213 = vor.u32 1.1754944e-38, %v2212
  %v2214 = vsel %vm2211, %v2213, %v2209
  %v2215 = vmul.f32 1.0, %v2214
  %v2216 = vmul.f32 %v2195, %v2139
  %v2217 = vmul.f32 %v2195, %v2196
  %2219 = vrot.lane.b32.xlu0 %v2217, 64
  %v2220 = vpop.permute.xlu0 %2219
  %v2222 = vadd.f32 %v2216, %v2220
  %v2223 = vtanh.pop %v2222
  %v2224 = vmul.f32 %v2215, %v2223
  %v2225 = vpack.c.bf16 %v2224, %v2224
  %2227 = vrot.lane.b32.xlu0 %v2225, 64
  %v2228 = vpop.permute.xlu0 %2227
  %v2230 = vsel %vm1647, %v2228, 0
  %2232 = vmatpush.bf16.msra.mxu0 0
  %2233 = vmatpush.bf16.msra.mxu0 0
  %2234 = vmatpush.bf16.msra.mxu0 0
  %2235 = vmatpush.bf16.msra.mxu0 0
  %2236 = vmatpush.bf16.msra.mxu0 %v1637
  %2237 = vmatpush.bf16.msra.mxu0 %v1635
  %2238 = vmatpush.bf16.msra.mxu0 %v1633
  %2239 = vmatpush.bf16.msra.mxu0 %v1631
  %2240 = vmatmul.bf16.gmra.mxu0 %v2230
  %v2241 = vpop.f32.mrf.mxu0
  %v2242 = vadd.f32 0.0, %v2241
  %v2243 = vpop.f32.mrf.mxu0
  %2244 = vdwg.mxu0
  %2245 = vmatpush.bf16.msra.mxu0 0
  %2246 = vmatpush.bf16.msra.mxu0 0
  %2247 = vmatpush.bf16.msra.mxu0 0
  %2248 = vmatpush.bf16.msra.mxu0 0
  %2249 = vmatpush.bf16.msra.mxu0 %v1638
  %2250 = vmatpush.bf16.msra.mxu0 %v1636
  %2251 = vmatpush.bf16.msra.mxu0 %v1634
  %2252 = vmatpush.bf16.msra.mxu0 %v1632
  %2253 = vmatmul.bf16.gmra.mxu0 %v2230
  %v2254 = vpop.f32.mrf.mxu0
  %v2255 = vadd.f32 0.0, %v2254
  %v2256 = vpop.f32.mrf.mxu0
  %2257 = vdwg.mxu0
  %v2258 = vadd.f32 %v1576, %v2242
  %v2259 = vadd.f32 %v1605, %v2255
  %v2260 = vxor.u32 %v2258, 2147483648
  %v2261 = vmul.f32 %v2260, 1.442695
  %v2262 = vpow.pop %v2261
  %v2263 = vadd.f32 %v2262, 1.0
  %v2264 = vrcp.pop %v2263
  %v2265 = vmul.f32 %v2263, %v2264
  %v2266 = vsub.f32 1.0, %v2265
  %v2267 = vmul.f32 %v2264, %v2266
  %v2268 = vadd.f32 %v2264, %v2267
  %vm2269 = vweird.f32 %v2263
  %vm2270 = vweird.f32 %v2264
  %vm2271 = vmor %vm2269, %vm2270
  %v2272 = vsel %vm2271, %v2264, %v2268
  %v2273 = vand.u32 2147483647, %v2263
  %vm2274 = vcmp.eq.f32.partialorder %v2273, 8.507059e+37
  %v2275 = vand.u32 %v2263, 2147483648
  %v2276 = vor.u32 1.1754944e-38, %v2275
  %v2277 = vsel %vm2274, %v2276, %v2272
  %v2278 = vmul.f32 1.0, %v2277
  %v2279 = vtanh.pop %v2259
  %v2280 = vxor.u32 %v2259, 2147483648
  %v2281 = vmul.f32 %v2280, 1.442695
  %v2282 = vpow.pop %v2281
  %v2283 = vadd.f32 %v2282, 1.0
  %v2284 = vrcp.pop %v2283
  %v2285 = vmul.f32 %v2283, %v2284
  %v2286 = vsub.f32 1.0, %v2285
  %v2287 = vmul.f32 %v2284, %v2286
  %v2288 = vadd.f32 %v2284, %v2287
  %vm2289 = vweird.f32 %v2283
  %vm2290 = vweird.f32 %v2284
  %vm2291 = vmor %vm2289, %vm2290
  %v2292 = vsel %vm2291, %v2284, %v2288
  %v2293 = vand.u32 2147483647, %v2283
  %vm2294 = vcmp.eq.f32.partialorder %v2293, 8.507059e+37
  %v2295 = vand.u32 %v2283, 2147483648
  %v2296 = vor.u32 1.1754944e-38, %v2295
  %v2297 = vsel %vm2294, %v2296, %v2292
  %v2298 = vmul.f32 1.0, %v2297
  %v2299 = vmul.f32 %v2278, %v2222
  %v2300 = vmul.f32 %v2278, %v2279
  %2302 = vrot.lane.b32.xlu0 %v2300, 64
  %v2303 = vpop.permute.xlu0 %2302
  %v2305 = vadd.f32 %v2299, %v2303
  %v2306 = vtanh.pop %v2305
  %v2307 = vmul.f32 %v2298, %v2306
  %v2308 = vpack.c.bf16 %v1809, %v1726
  %v2309 = vpack.c.bf16 %v1975, %v1892
  %v2310 = vpack.c.bf16 %v2141, %v2058
  %v2311 = vpack.c.bf16 %v2307, %v2224
  %v2313 = vperm.slane %v133, 0
  %2319 = vrot.lane.b32.xlu0 %v2308, 64
  %v2320 = vpop.permute.xlu0 %2319
  %2321 = vrot.lane.b32.xlu0 %v2309, 64
  %v2322 = vpop.permute.xlu0 %2321
  %2323 = vrot.lane.b32.xlu0 %v2310, 64
  %v2324 = vpop.permute.xlu0 %2323
  %2325 = vrot.lane.b32.xlu0 %v2311, 64
  %v2326 = vpop.permute.xlu0 %2325
  %v2335 = vunpack.c.l.b16 %v125
  %v2336 = vunpack.c.l.b16 %v126
  %v2337 = vunpack.c.l.b16 %v127
  %v2338 = vunpack.c.l.b16 %v128
  %v2339 = vunpack.c.l.b16 %v129
  %v2340 = vunpack.c.l.b16 %v130
  %v2341 = vunpack.c.l.b16 %v131
  %v2342 = vunpack.c.l.b16 %v132
  %v2343 = vpack.c.b16 %v2336, %v2335
  %v2344 = vpack.c.b16 %v2338, %v2337
  %v2345 = vpack.c.b16 %v2340, %v2339
  %v2346 = vpack.c.b16 %v2342, %v2341
  %v2352 = vsel %vm1647, %v2320, 0
  %v2355 = vsel %vm1647, %v2322, 0
  %v2358 = vsel %vm1647, %v2324, 0
  %v2361 = vsel %vm1647, %v2326, 0
  %2363 = vmatpush.bf16.msra.mxu0 0
  %2364 = vmatpush.bf16.msra.mxu0 0
  %2365 = vmatpush.bf16.msra.mxu0 0
  %2366 = vmatpush.bf16.msra.mxu0 0
  %2367 = vmatpush.bf16.msra.mxu0 %v2346
  %2368 = vmatpush.bf16.msra.mxu0 %v2345
  %2369 = vmatpush.bf16.msra.mxu0 %v2344
  %2370 = vmatpush.bf16.msra.mxu0 %v2343
  %2371 = vmatmul.bf16.gmra.mxu0 %v2352
  %v2372 = vpop.f32.mrf.mxu0
  %v2373 = vadd.f32 %v2313, %v2372
  %v2374 = vpop.f32.mrf.mxu0
  %v2375 = vadd.f32 %v2313, %v2374
  %2376 = vmatmul.bf16.gmra.mxu0 %v2355
  %v2377 = vpop.f32.mrf.mxu0
  %v2378 = vadd.f32 %v2313, %v2377
  %v2379 = vpop.f32.mrf.mxu0
  %v2380 = vadd.f32 %v2313, %v2379
  %2381 = vmatmul.bf16.gmra.mxu0 %v2358
  %v2382 = vpop.f32.mrf.mxu0
  %v2383 = vadd.f32 %v2313, %v2382
  %v2384 = vpop.f32.mrf.mxu0
  %v2385 = vadd.f32 %v2313, %v2384
  %2386 = vmatmul.bf16.gmra.mxu0 %v2361
  %v2387 = vpop.f32.mrf.mxu0
  %v2388 = vadd.f32 %v2313, %v2387
  %v2389 = vpop.f32.mrf.mxu0
  %v2390 = vadd.f32 %v2313, %v2389
  %2391 = vdwg.mxu0
  %v2392 = vmax.f32 %v2373, %v2375
  %v2393 = vmax.f32 %v2392, %v2378
  %v2394 = vmax.f32 %v2393, %v2380
  %v2395 = vmax.f32 %v2394, %v2383
  %v2396 = vmax.f32 %v2395, %v2385
  %v2397 = vmax.f32 %v2396, %v2388
  %v2398 = vmax.f32 %v2397, %v2390
  %v2399 = vsub.f32 %v2373, %v2398
  %v2400 = vmul.f32 %v2399, 1.442695
  %v2401 = vpow.pop %v2400
  %v2402 = vsub.f32 %v2375, %v2398
  %v2403 = vmul.f32 %v2402, 1.442695
  %v2404 = vpow.pop %v2403
  %v2405 = vsub.f32 %v2378, %v2398
  %v2406 = vmul.f32 %v2405, 1.442695
  %v2407 = vpow.pop %v2406
  %v2408 = vsub.f32 %v2380, %v2398
  %v2409 = vmul.f32 %v2408, 1.442695
  %v2410 = vpow.pop %v2409
  %v2411 = vsub.f32 %v2383, %v2398
  %v2412 = vmul.f32 %v2411, 1.442695
  %v2413 = vpow.pop %v2412
  %v2414 = vsub.f32 %v2385, %v2398
  %v2415 = vmul.f32 %v2414, 1.442695
  %v2416 = vpow.pop %v2415
  %v2417 = vsub.f32 %v2388, %v2398
  %v2418 = vmul.f32 %v2417, 1.442695
  %v2419 = vpow.pop %v2418
  %v2420 = vsub.f32 %v2390, %v2398
  %v2421 = vmul.f32 %v2420, 1.442695
  %v2422 = vpow.pop %v2421
  %v2423 = vadd.f32 %v2401, %v2404
  %v2424 = vadd.f32 %v2423, %v2407
  %v2425 = vadd.f32 %v2424, %v2410
  %v2426 = vadd.f32 %v2425, %v2413
  %v2427 = vadd.f32 %v2426, %v2416
  %v2428 = vadd.f32 %v2427, %v2419
  %v2429 = vadd.f32 %v2428, %v2422
  %v2430 = vrcp.pop %v2429
  %v2431 = vmul.f32 %v2401, %v2430
  %v2432 = vmul.f32 %v2404, %v2430
  %v2433 = vmul.f32 %v2407, %v2430
  %v2434 = vmul.f32 %v2410, %v2430
  %v2435 = vmul.f32 %v2413, %v2430
  %v2436 = vmul.f32 %v2416, %v2430
  %v2437 = vmul.f32 %v2419, %v2430
  %v2438 = vmul.f32 %v2422, %v2430
  %2440 = vset.pattern.permute.xlu0 0
  %2441 = vperm.xlu0 %2440, %v2431
  %v2442 = vpop.permute.xlu0 %2441
  %v2444 = vmul.f32 %v2442, %v1726
  %2446 = vset.pattern.permute.xlu0 0
  %2447 = vperm.xlu0 %2446, %v2432
  %v2448 = vpop.permute.xlu0 %2447
  %v2450 = vmul.f32 %v2448, %v1809
  %v2451 = vadd.f32 %v2444, %v2450
  %2453 = vset.pattern.permute.xlu0 0
  %2454 = vperm.xlu0 %2453, %v2433
  %v2455 = vpop.permute.xlu0 %2454
  %v2457 = vmul.f32 %v2455, %v1892
  %v2458 = vadd.f32 %v2451, %v2457
  %2460 = vset.pattern.permute.xlu0 0
  %2461 = vperm.xlu0 %2460, %v2434
  %v2462 = vpop.permute.xlu0 %2461
  %v2464 = vmul.f32 %v2462, %v1975
  %v2465 = vadd.f32 %v2458, %v2464
  %2467 = vset.pattern.permute.xlu0 0
  %2468 = vperm.xlu0 %2467, %v2435
  %v2469 = vpop.permute.xlu0 %2468
  %v2471 = vmul.f32 %v2469, %v2058
  %v2472 = vadd.f32 %v2465, %v2471
  %2474 = vset.pattern.permute.xlu0 0
  %2475 = vperm.xlu0 %2474, %v2436
  %v2476 = vpop.permute.xlu0 %2475
  %v2478 = vmul.f32 %v2476, %v2141
  %v2479 = vadd.f32 %v2472, %v2478
  %2481 = vset.pattern.permute.xlu0 0
  %2482 = vperm.xlu0 %2481, %v2437
  %v2483 = vpop.permute.xlu0 %2482
  %v2485 = vmul.f32 %v2483, %v2224
  %v2486 = vadd.f32 %v2479, %v2485
  %2488 = vset.pattern.permute.xlu0 0
  %2489 = vperm.xlu0 %2488, %v2438
  %v2490 = vpop.permute.xlu0 %2489
  %v2492 = vmul.f32 %v2490, %v2307
  %v2493 = vadd.f32 %v2486, %v2492
  %v2502 = vunpack.c.l.b16 %v134
  %v2503 = vunpack.c.l.b16 %v135
  %v2504 = vunpack.c.l.b16 %v136
  %v2505 = vunpack.c.l.b16 %v137
  %v2506 = vunpack.c.l.b16 %v138
  %v2507 = vunpack.c.l.b16 %v139
  %v2508 = vunpack.c.l.b16 %v140
  %v2509 = vunpack.c.l.b16 %v141
  %v2510 = vpack.c.b16 %v2503, %v2502
  %v2511 = vpack.c.b16 %v2505, %v2504
  %v2512 = vpack.c.b16 %v2507, %v2506
  %v2513 = vpack.c.b16 %v2509, %v2508
  %2518 = vmatpush.bf16.msra.mxu0 0
  %2519 = vmatpush.bf16.msra.mxu0 0
  %2520 = vmatpush.bf16.msra.mxu0 0
  %2521 = vmatpush.bf16.msra.mxu0 0
  %2522 = vmatpush.bf16.msra.mxu0 %v2513
  %2523 = vmatpush.bf16.msra.mxu0 %v2512
  %2524 = vmatpush.bf16.msra.mxu0 %v2511
  %2525 = vmatpush.bf16.msra.mxu0 %v2510
  %2526 = vmatmul.bf16.gmra.mxu0 %v2352
  %v2527 = vpop.f32.mrf.mxu0
  %v2528 = vadd.f32 0.0, %v2527
  %v2529 = vpop.f32.mrf.mxu0
  %v2530 = vadd.f32 0.0, %v2529
  %2531 = vmatmul.bf16.gmra.mxu0 %v2355
  %v2532 = vpop.f32.mrf.mxu0
  %v2533 = vadd.f32 0.0, %v2532
  %v2534 = vpop.f32.mrf.mxu0
  %v2535 = vadd.f32 0.0, %v2534
  %2536 = vmatmul.bf16.gmra.mxu0 %v2358
  %v2537 = vpop.f32.mrf.mxu0
  %v2538 = vadd.f32 0.0, %v2537
  %v2539 = vpop.f32.mrf.mxu0
  %v2540 = vadd.f32 0.0, %v2539
  %2541 = vmatmul.bf16.gmra.mxu0 %v2361
  %v2542 = vpop.f32.mrf.mxu0
  %v2543 = vadd.f32 0.0, %v2542
  %v2544 = vpop.f32.mrf.mxu0
  %v2545 = vadd.f32 0.0, %v2544
  %2546 = vdwg.mxu0
  %v2547 = vpack.c.bf16 %v2493, %v2493
  %2549 = vrot.lane.b32.xlu0 %v2547, 64
  %v2550 = vpop.permute.xlu0 %2549
  %v2559 = vunpack.c.l.b16 %v142
  %v2560 = vunpack.c.l.b16 %v143
  %v2561 = vunpack.c.l.b16 %v144
  %v2562 = vunpack.c.l.b16 %v145
  %v2563 = vunpack.c.l.b16 %v146
  %v2564 = vunpack.c.l.b16 %v147
  %v2565 = vunpack.c.l.b16 %v148
  %v2566 = vunpack.c.l.b16 %v149
  %v2567 = vpack.c.b16 %v2560, %v2559
  %v2568 = vpack.c.b16 %v2562, %v2561
  %v2569 = vpack.c.b16 %v2564, %v2563
  %v2570 = vpack.c.b16 %v2566, %v2565
  %v2576 = vsel %vm1647, %v2550, 0
  %2578 = vmatpush.bf16.msra.mxu0 0
  %2579 = vmatpush.bf16.msra.mxu0 0
  %2580 = vmatpush.bf16.msra.mxu0 0
  %2581 = vmatpush.bf16.msra.mxu0 0
  %2582 = vmatpush.bf16.msra.mxu0 %v2570
  %2583 = vmatpush.bf16.msra.mxu0 %v2569
  %2584 = vmatpush.bf16.msra.mxu0 %v2568
  %2585 = vmatpush.bf16.msra.mxu0 %v2567
  %2586 = vmatmul.bf16.gmra.mxu0 %v2576
  %v2587 = vpop.f32.mrf.mxu0
  %v2588 = vadd.f32 0.0, %v2587
  %v2589 = vpop.f32.mrf.mxu0
  %2590 = vdwg.mxu0
  %v2592 = vperm.slane %v154, 0
  %v2594 = vadd.f32 %v2592, %v2588
  %v2599 = vunpack.c.l.b16 %v150
  %v2600 = vunpack.c.l.b16 %v151
  %v2601 = vunpack.c.l.b16 %v152
  %v2602 = vunpack.c.l.b16 %v153
  %v2603 = vpack.c.b16 %v2600, %v2599
  %v2604 = vpack.c.b16 %v2602, %v2601
  %vm2607 = vcmask 261120
  %v2608 = vsel %vm2607, 0, 0
  %2610 = vmatpush.bf16.msra.mxu0 0
  %2611 = vmatpush.bf16.msra.mxu0 0
  %2612 = vmatpush.bf16.msra.mxu0 0
  %2613 = vmatpush.bf16.msra.mxu0 0
  %2614 = vmatpush.bf16.msra.mxu0 0
  %2615 = vmatpush.bf16.msra.mxu0 0
  %2616 = vmatpush.bf16.msra.mxu0 %v2604
  %2617 = vmatpush.bf16.msra.mxu0 %v2603
  %2618 = vmatmul.bf16.gmra.mxu0 %v2608
  %v2619 = vpop.f32.mrf.mxu0
  %v2620 = vadd.f32 0.0, %v2619
  %v2621 = vpop.f32.mrf.mxu0
  %2622 = vdwg.mxu0
  %v2623 = vadd.f32 %v2528, %v2620
  %v2624 = vadd.f32 %v2623, %v2594
  %v2625 = vxor.u32 %v2624, 2147483648
  %v2626 = vmul.f32 %v2625, 1.442695
  %v2627 = vpow.pop %v2626
  %v2628 = vadd.f32 %v2627, 1.0
  %v2629 = vrcp.pop %v2628
  %v2630 = vmul.f32 %v2628, %v2629
  %v2631 = vsub.f32 1.0, %v2630
  %v2632 = vmul.f32 %v2629, %v2631
  %v2633 = vadd.f32 %v2629, %v2632
  %vm2634 = vweird.f32 %v2628
  %vm2635 = vweird.f32 %v2629
  %vm2636 = vmor %vm2634, %vm2635
  %v2637 = vsel %vm2636, %v2629, %v2633
  %v2638 = vand.u32 2147483647, %v2628
  %vm2639 = vcmp.eq.f32.partialorder %v2638, 8.507059e+37
  %v2640 = vand.u32 %v2628, 2147483648
  %v2641 = vor.u32 1.1754944e-38, %v2640
  %v2642 = vsel %vm2639, %v2641, %v2637
  %v2643 = vmul.f32 1.0, %v2642
  %v2644 = vtanh.pop %v2624
  %v2645 = vmul.f32 %v2643, 0.0
  %2647 = vrot.lane.b32.xlu0 %v2644, 64
  %v2648 = vpop.permute.xlu0 %2647
  %v2650 = vmul.f32 %v2643, %v2648
  %2652 = vrot.lane.b32.xlu0 %v2650, 32
  %v2653 = vpop.permute.xlu0 %2652
  %v2655 = vadd.f32 %v2645, %v2653
  %v2656 = vtanh.pop %v2655
  %2658 = vrot.lane.b32.xlu0 %v2656, 64
  %v2659 = vpop.permute.xlu0 %2658
  %v2661 = vmul.f32 %v2643, %v2659
  %v2662 = vpack.c.bf16 %v2661, %v2661
  %2664 = vrot.lane.b32.xlu0 %v2662, 32
  %v2665 = vpop.permute.xlu0 %2664
  %v2667 = vsel %vm2607, %v2665, 0
  %2669 = vmatpush.bf16.msra.mxu0 0
  %2670 = vmatpush.bf16.msra.mxu0 0
  %2671 = vmatpush.bf16.msra.mxu0 0
  %2672 = vmatpush.bf16.msra.mxu0 0
  %2673 = vmatpush.bf16.msra.mxu0 0
  %2674 = vmatpush.bf16.msra.mxu0 0
  %2675 = vmatpush.bf16.msra.mxu0 %v2604
  %2676 = vmatpush.bf16.msra.mxu0 %v2603
  %2677 = vmatmul.bf16.gmra.mxu0 %v2667
  %v2678 = vpop.f32.mrf.mxu0
  %v2679 = vadd.f32 0.0, %v2678
  %v2680 = vpop.f32.mrf.mxu0
  %2681 = vdwg.mxu0
  %v2682 = vadd.f32 %v2530, %v2679
  %v2683 = vadd.f32 %v2682, %v2594
  %v2684 = vxor.u32 %v2683, 2147483648
  %v2685 = vmul.f32 %v2684, 1.442695
  %v2686 = vpow.pop %v2685
  %v2687 = vadd.f32 %v2686, 1.0
  %v2688 = vrcp.pop %v2687
  %v2689 = vmul.f32 %v2687, %v2688
  %v2690 = vsub.f32 1.0, %v2689
  %v2691 = vmul.f32 %v2688, %v2690
  %v2692 = vadd.f32 %v2688, %v2691
  %vm2693 = vweird.f32 %v2687
  %vm2694 = vweird.f32 %v2688
  %vm2695 = vmor %vm2693, %vm2694
  %v2696 = vsel %vm2695, %v2688, %v2692
  %v2697 = vand.u32 2147483647, %v2687
  %vm2698 = vcmp.eq.f32.partialorder %v2697, 8.507059e+37
  %v2699 = vand.u32 %v2687, 2147483648
  %v2700 = vor.u32 1.1754944e-38, %v2699
  %v2701 = vsel %vm2698, %v2700, %v2696
  %v2702 = vmul.f32 1.0, %v2701
  %v2703 = vtanh.pop %v2683
  %v2704 = vmul.f32 %v2702, %v2655
  %2706 = vrot.lane.b32.xlu0 %v2703, 64
  %v2707 = vpop.permute.xlu0 %2706
  %v2709 = vmul.f32 %v2702, %v2707
  %2711 = vrot.lane.b32.xlu0 %v2709, 32
  %v2712 = vpop.permute.xlu0 %2711
  %v2714 = vadd.f32 %v2704, %v2712
  %v2715 = vtanh.pop %v2714
  %2717 = vrot.lane.b32.xlu0 %v2715, 64
  %v2718 = vpop.permute.xlu0 %2717
  %v2720 = vmul.f32 %v2702, %v2718
  %v2721 = vpack.c.bf16 %v2720, %v2720
  %2723 = vrot.lane.b32.xlu0 %v2721, 32
  %v2724 = vpop.permute.xlu0 %2723
  %v2726 = vsel %vm2607, %v2724, 0
  %2728 = vmatpush.bf16.msra.mxu0 0
  %2729 = vmatpush.bf16.msra.mxu0 0
  %2730 = vmatpush.bf16.msra.mxu0 0
  %2731 = vmatpush.bf16.msra.mxu0 0
  %2732 = vmatpush.bf16.msra.mxu0 0
  %2733 = vmatpush.bf16.msra.mxu0 0
  %2734 = vmatpush.bf16.msra.mxu0 %v2604
  %2735 = vmatpush.bf16.msra.mxu0 %v2603
  %2736 = vmatmul.bf16.gmra.mxu0 %v2726
  %v2737 = vpop.f32.mrf.mxu0
  %v2738 = vadd.f32 0.0, %v2737
  %v2739 = vpop.f32.mrf.mxu0
  %2740 = vdwg.mxu0
  %v2741 = vadd.f32 %v2533, %v2738
  %v2742 = vadd.f32 %v2741, %v2594
  %v2743 = vxor.u32 %v2742, 2147483648
  %v2744 = vmul.f32 %v2743, 1.442695
  %v2745 = vpow.pop %v2744
  %v2746 = vadd.f32 %v2745, 1.0
  %v2747 = vrcp.pop %v2746
  %v2748 = vmul.f32 %v2746, %v2747
  %v2749 = vsub.f32 1.0, %v2748
  %v2750 = vmul.f32 %v2747, %v2749
  %v2751 = vadd.f32 %v2747, %v2750
  %vm2752 = vweird.f32 %v2746
  %vm2753 = vweird.f32 %v2747
  %vm2754 = vmor %vm2752, %vm2753
  %v2755 = vsel %vm2754, %v2747, %v2751
  %v2756 = vand.u32 2147483647, %v2746
  %vm2757 = vcmp.eq.f32.partialorder %v2756, 8.507059e+37
  %v2758 = vand.u32 %v2746, 2147483648
  %v2759 = vor.u32 1.1754944e-38, %v2758
  %v2760 = vsel %vm2757, %v2759, %v2755
  %v2761 = vmul.f32 1.0, %v2760
  %v2762 = vtanh.pop %v2742
  %v2763 = vmul.f32 %v2761, %v2714
  %2765 = vrot.lane.b32.xlu0 %v2762, 64
  %v2766 = vpop.permute.xlu0 %2765
  %v2768 = vmul.f32 %v2761, %v2766
  %2770 = vrot.lane.b32.xlu0 %v2768, 32
  %v2771 = vpop.permute.xlu0 %2770
  %v2773 = vadd.f32 %v2763, %v2771
  %v2774 = vtanh.pop %v2773
  %2776 = vrot.lane.b32.xlu0 %v2774, 64
  %v2777 = vpop.permute.xlu0 %2776
  %v2779 = vmul.f32 %v2761, %v2777
  %v2780 = vpack.c.bf16 %v2779, %v2779
  %2782 = vrot.lane.b32.xlu0 %v2780, 32
  %v2783 = vpop.permute.xlu0 %2782
  %v2785 = vsel %vm2607, %v2783, 0
  %2787 = vmatpush.bf16.msra.mxu0 0
  %2788 = vmatpush.bf16.msra.mxu0 0
  %2789 = vmatpush.bf16.msra.mxu0 0
  %2790 = vmatpush.bf16.msra.mxu0 0
  %2791 = vmatpush.bf16.msra.mxu0 0
  %2792 = vmatpush.bf16.msra.mxu0 0
  %2793 = vmatpush.bf16.msra.mxu0 %v2604
  %2794 = vmatpush.bf16.msra.mxu0 %v2603
  %2795 = vmatmul.bf16.gmra.mxu0 %v2785
  %v2796 = vpop.f32.mrf.mxu0
  %v2797 = vadd.f32 0.0, %v2796
  %v2798 = vpop.f32.mrf.mxu0
  %2799 = vdwg.mxu0
  %v2800 = vadd.f32 %v2535, %v2797
  %v2801 = vadd.f32 %v2800, %v2594
  %v2802 = vxor.u32 %v2801, 2147483648
  %v2803 = vmul.f32 %v2802, 1.442695
  %v2804 = vpow.pop %v2803
  %v2805 = vadd.f32 %v2804, 1.0
  %v2806 = vrcp.pop %v2805
  %v2807 = vmul.f32 %v2805, %v2806
  %v2808 = vsub.f32 1.0, %v2807
  %v2809 = vmul.f32 %v2806, %v2808
  %v2810 = vadd.f32 %v2806, %v2809
  %vm2811 = vweird.f32 %v2805
  %vm2812 = vweird.f32 %v2806
  %vm2813 = vmor %vm2811, %vm2812
  %v2814 = vsel %vm2813, %v2806, %v2810
  %v2815 = vand.u32 2147483647, %v2805
  %vm2816 = vcmp.eq.f32.partialorder %v2815, 8.507059e+37
  %v2817 = vand.u32 %v2805, 2147483648
  %v2818 = vor.u32 1.1754944e-38, %v2817
  %v2819 = vsel %vm2816, %v2818, %v2814
  %v2820 = vmul.f32 1.0, %v2819
  %v2821 = vtanh.pop %v2801
  %v2822 = vmul.f32 %v2820, %v2773
  %2824 = vrot.lane.b32.xlu0 %v2821, 64
  %v2825 = vpop.permute.xlu0 %2824
  %v2827 = vmul.f32 %v2820, %v2825
  %2829 = vrot.lane.b32.xlu0 %v2827, 32
  %v2830 = vpop.permute.xlu0 %2829
  %v2832 = vadd.f32 %v2822, %v2830
  %v2833 = vtanh.pop %v2832
  %2835 = vrot.lane.b32.xlu0 %v2833, 64
  %v2836 = vpop.permute.xlu0 %2835
  %v2838 = vmul.f32 %v2820, %v2836
  %v2839 = vpack.c.bf16 %v2838, %v2838
  %2841 = vrot.lane.b32.xlu0 %v2839, 32
  %v2842 = vpop.permute.xlu0 %2841
  %v2844 = vsel %vm2607, %v2842, 0
  %2846 = vmatpush.bf16.msra.mxu0 0
  %2847 = vmatpush.bf16.msra.mxu0 0
  %2848 = vmatpush.bf16.msra.mxu0 0
  %2849 = vmatpush.bf16.msra.mxu0 0
  %2850 = vmatpush.bf16.msra.mxu0 0
  %2851 = vmatpush.bf16.msra.mxu0 0
  %2852 = vmatpush.bf16.msra.mxu0 %v2604
  %2853 = vmatpush.bf16.msra.mxu0 %v2603
  %2854 = vmatmul.bf16.gmra.mxu0 %v2844
  %v2855 = vpop.f32.mrf.mxu0
  %v2856 = vadd.f32 0.0, %v2855
  %v2857 = vpop.f32.mrf.mxu0
  %2858 = vdwg.mxu0
  %v2859 = vadd.f32 %v2538, %v2856
  %v2860 = vadd.f32 %v2859, %v2594
  %v2861 = vxor.u32 %v2860, 2147483648
  %v2862 = vmul.f32 %v2861, 1.442695
  %v2863 = vpow.pop %v2862
  %v2864 = vadd.f32 %v2863, 1.0
  %v2865 = vrcp.pop %v2864
  %v2866 = vmul.f32 %v2864, %v2865
  %v2867 = vsub.f32 1.0, %v2866
  %v2868 = vmul.f32 %v2865, %v2867
  %v2869 = vadd.f32 %v2865, %v2868
  %vm2870 = vweird.f32 %v2864
  %vm2871 = vweird.f32 %v2865
  %vm2872 = vmor %vm2870, %vm2871
  %v2873 = vsel %vm2872, %v2865, %v2869
  %v2874 = vand.u32 2147483647, %v2864
  %vm2875 = vcmp.eq.f32.partialorder %v2874, 8.507059e+37
  %v2876 = vand.u32 %v2864, 2147483648
  %v2877 = vor.u32 1.1754944e-38, %v2876
  %v2878 = vsel %vm2875, %v2877, %v2873
  %v2879 = vmul.f32 1.0, %v2878
  %v2880 = vtanh.pop %v2860
  %v2881 = vmul.f32 %v2879, %v2832
  %2883 = vrot.lane.b32.xlu0 %v2880, 64
  %v2884 = vpop.permute.xlu0 %2883
  %v2886 = vmul.f32 %v2879, %v2884
  %2888 = vrot.lane.b32.xlu0 %v2886, 32
  %v2889 = vpop.permute.xlu0 %2888
  %v2891 = vadd.f32 %v2881, %v2889
  %v2892 = vtanh.pop %v2891
  %2894 = vrot.lane.b32.xlu0 %v2892, 64
  %v2895 = vpop.permute.xlu0 %2894
  %v2897 = vmul.f32 %v2879, %v2895
  %v2898 = vpack.c.bf16 %v2897, %v2897
  %2900 = vrot.lane.b32.xlu0 %v2898, 32
  %v2901 = vpop.permute.xlu0 %2900
  %v2903 = vsel %vm2607, %v2901, 0
  %2905 = vmatpush.bf16.msra.mxu0 0
  %2906 = vmatpush.bf16.msra.mxu0 0
  %2907 = vmatpush.bf16.msra.mxu0 0
  %2908 = vmatpush.bf16.msra.mxu0 0
  %2909 = vmatpush.bf16.msra.mxu0 0
  %2910 = vmatpush.bf16.msra.mxu0 0
  %2911 = vmatpush.bf16.msra.mxu0 %v2604
  %2912 = vmatpush.bf16.msra.mxu0 %v2603
  %2913 = vmatmul.bf16.gmra.mxu0 %v2903
  %v2914 = vpop.f32.mrf.mxu0
  %v2915 = vadd.f32 0.0, %v2914
  %v2916 = vpop.f32.mrf.mxu0
  %2917 = vdwg.mxu0
  %v2918 = vadd.f32 %v2540, %v2915
  %v2919 = vadd.f32 %v2918, %v2594
  %v2920 = vxor.u32 %v2919, 2147483648
  %v2921 = vmul.f32 %v2920, 1.442695
  %v2922 = vpow.pop %v2921
  %v2923 = vadd.f32 %v2922, 1.0
  %v2924 = vrcp.pop %v2923
  %v2925 = vmul.f32 %v2923, %v2924
  %v2926 = vsub.f32 1.0, %v2925
  %v2927 = vmul.f32 %v2924, %v2926
  %v2928 = vadd.f32 %v2924, %v2927
  %vm2929 = vweird.f32 %v2923
  %vm2930 = vweird.f32 %v2924
  %vm2931 = vmor %vm2929, %vm2930
  %v2932 = vsel %vm2931, %v2924, %v2928
  %v2933 = vand.u32 2147483647, %v2923
  %vm2934 = vcmp.eq.f32.partialorder %v2933, 8.507059e+37
  %v2935 = vand.u32 %v2923, 2147483648
  %v2936 = vor.u32 1.1754944e-38, %v2935
  %v2937 = vsel %vm2934, %v2936, %v2932
  %v2938 = vmul.f32 1.0, %v2937
  %v2939 = vtanh.pop %v2919
  %v2940 = vmul.f32 %v2938, %v2891
  %2942 = vrot.lane.b32.xlu0 %v2939, 64
  %v2943 = vpop.permute.xlu0 %2942
  %v2945 = vmul.f32 %v2938, %v2943
  %2947 = vrot.lane.b32.xlu0 %v2945, 32
  %v2948 = vpop.permute.xlu0 %2947
  %v2950 = vadd.f32 %v2940, %v2948
  %v2951 = vtanh.pop %v2950
  %2953 = vrot.lane.b32.xlu0 %v2951, 64
  %v2954 = vpop.permute.xlu0 %2953
  %v2956 = vmul.f32 %v2938, %v2954
  %v2957 = vpack.c.bf16 %v2956, %v2956
  %2959 = vrot.lane.b32.xlu0 %v2957, 32
  %v2960 = vpop.permute.xlu0 %2959
  %v2962 = vsel %vm2607, %v2960, 0
  %2964 = vmatpush.bf16.msra.mxu0 0
  %2965 = vmatpush.bf16.msra.mxu0 0
  %2966 = vmatpush.bf16.msra.mxu0 0
  %2967 = vmatpush.bf16.msra.mxu0 0
  %2968 = vmatpush.bf16.msra.mxu0 0
  %2969 = vmatpush.bf16.msra.mxu0 0
  %2970 = vmatpush.bf16.msra.mxu0 %v2604
  %2971 = vmatpush.bf16.msra.mxu0 %v2603
  %2972 = vmatmul.bf16.gmra.mxu0 %v2962
  %v2973 = vpop.f32.mrf.mxu0
  %v2974 = vadd.f32 0.0, %v2973
  %v2975 = vpop.f32.mrf.mxu0
  %2976 = vdwg.mxu0
  %v2977 = vadd.f32 %v2543, %v2974
  %v2978 = vadd.f32 %v2977, %v2594
  %v2979 = vxor.u32 %v2978, 2147483648
  %v2980 = vmul.f32 %v2979, 1.442695
  %v2981 = vpow.pop %v2980
  %v2982 = vadd.f32 %v2981, 1.0
  %v2983 = vrcp.pop %v2982
  %v2984 = vmul.f32 %v2982, %v2983
  %v2985 = vsub.f32 1.0, %v2984
  %v2986 = vmul.f32 %v2983, %v2985
  %v2987 = vadd.f32 %v2983, %v2986
  %vm2988 = vweird.f32 %v2982
  %vm2989 = vweird.f32 %v2983
  %vm2990 = vmor %vm2988, %vm2989
  %v2991 = vsel %vm2990, %v2983, %v2987
  %v2992 = vand.u32 2147483647, %v2982
  %vm2993 = vcmp.eq.f32.partialorder %v2992, 8.507059e+37
  %v2994 = vand.u32 %v2982, 2147483648
  %v2995 = vor.u32 1.1754944e-38, %v2994
  %v2996 = vsel %vm2993, %v2995, %v2991
  %v2997 = vmul.f32 1.0, %v2996
  %v2998 = vtanh.pop %v2978
  %v2999 = vmul.f32 %v2997, %v2950
  %3001 = vrot.lane.b32.xlu0 %v2998, 64
  %v3002 = vpop.permute.xlu0 %3001
  %v3004 = vmul.f32 %v2997, %v3002
  %3006 = vrot.lane.b32.xlu0 %v3004, 32
  %v3007 = vpop.permute.xlu0 %3006
  %v3009 = vadd.f32 %v2999, %v3007
  %v3010 = vtanh.pop %v3009
  %3012 = vrot.lane.b32.xlu0 %v3010, 64
  %v3013 = vpop.permute.xlu0 %3012
  %v3015 = vmul.f32 %v2997, %v3013
  %v3016 = vpack.c.bf16 %v3015, %v3015
  %3018 = vrot.lane.b32.xlu0 %v3016, 32
  %v3019 = vpop.permute.xlu0 %3018
  %v3021 = vsel %vm2607, %v3019, 0
  %3023 = vmatpush.bf16.msra.mxu0 0
  %3024 = vmatpush.bf16.msra.mxu0 0
  %3025 = vmatpush.bf16.msra.mxu0 0
  %3026 = vmatpush.bf16.msra.mxu0 0
  %3027 = vmatpush.bf16.msra.mxu0 0
  %3028 = vmatpush.bf16.msra.mxu0 0
  %3029 = vmatpush.bf16.msra.mxu0 %v2604
  %3030 = vmatpush.bf16.msra.mxu0 %v2603
  %3031 = vmatmul.bf16.gmra.mxu0 %v3021
  %v3032 = vpop.f32.mrf.mxu0
  %v3033 = vadd.f32 0.0, %v3032
  %v3034 = vpop.f32.mrf.mxu0
  %3035 = vdwg.mxu0
  %v3036 = vadd.f32 %v2545, %v3033
  %v3037 = vadd.f32 %v3036, %v2594
  %v3038 = vxor.u32 %v3037, 2147483648
  %v3039 = vmul.f32 %v3038, 1.442695
  %v3040 = vpow.pop %v3039
  %v3041 = vadd.f32 %v3040, 1.0
  %v3042 = vrcp.pop %v3041
  %v3043 = vmul.f32 %v3041, %v3042
  %v3044 = vsub.f32 1.0, %v3043
  %v3045 = vmul.f32 %v3042, %v3044
  %v3046 = vadd.f32 %v3042, %v3045
  %vm3047 = vweird.f32 %v3041
  %vm3048 = vweird.f32 %v3042
  %vm3049 = vmor %vm3047, %vm3048
  %v3050 = vsel %vm3049, %v3042, %v3046
  %v3051 = vand.u32 2147483647, %v3041
  %vm3052 = vcmp.eq.f32.partialorder %v3051, 8.507059e+37
  %v3053 = vand.u32 %v3041, 2147483648
  %v3054 = vor.u32 1.1754944e-38, %v3053
  %v3055 = vsel %vm3052, %v3054, %v3050
  %v3056 = vmul.f32 1.0, %v3055
  %v3057 = vtanh.pop %v3037
  %v3058 = vmul.f32 %v3056, %v3009
  %3060 = vrot.lane.b32.xlu0 %v3057, 64
  %v3061 = vpop.permute.xlu0 %3060
  %v3063 = vmul.f32 %v3056, %v3061
  %3065 = vrot.lane.b32.xlu0 %v3063, 32
  %v3066 = vpop.permute.xlu0 %3065
  %v3068 = vadd.f32 %v3058, %v3066
  %v3069 = vtanh.pop %v3068
  %3071 = vrot.lane.b32.xlu0 %v3069, 64
  %v3072 = vpop.permute.xlu0 %3071
  %v3074 = vmul.f32 %v3056, %v3072
  %v3075 = vpack.c.bf16 %v3074, %v3074
  %v3077 = vperm.slane %v159, 0
  %3080 = vrot.lane.b32.xlu0 %v3075, 32
  %v3081 = vpop.permute.xlu0 %3080
  %v3086 = vunpack.c.l.b16 %v155
  %v3087 = vunpack.c.l.b16 %v156
  %v3088 = vunpack.c.l.b16 %v157
  %v3089 = vunpack.c.l.b16 %v158
  %v3090 = vpack.c.b16 %v3087, %v3086
  %v3091 = vpack.c.b16 %v3089, %v3088
  %v3095 = vsel %vm2607, %v3081, 0
  %3097 = vmatpush.bf16.msra.mxu0 0
  %3098 = vmatpush.bf16.msra.mxu0 0
  %3099 = vmatpush.bf16.msra.mxu0 0
  %3100 = vmatpush.bf16.msra.mxu0 0
  %3101 = vmatpush.bf16.msra.mxu0 0
  %3102 = vmatpush.bf16.msra.mxu0 0
  %3103 = vmatpush.bf16.msra.mxu0 %v3091
  %3104 = vmatpush.bf16.msra.mxu0 %v3090
  %3105 = vmatmul.bf16.gmra.mxu0 %v3095
  %v3106 = vpop.f32.mrf.mxu0
  %v3107 = vadd.f32 %v3077, %v3106
  %v3108 = vpop.f32.mrf.mxu0
  %3109 = vdwg.mxu0
  %vm3110 = vcmask 7168
  %3111 = vst.msk [vmem:[%s15] sm:$0xff] %vm3110, %v3107
  %v3112 = vlaneseq
  %v3113 = vand.u32 %v3112, 127
  %vm3114 = vcmp.eq.s32.totalorder %v3113, 0
  %v3115 = vsel %vm3114, %v2442, 0.0
  %vm3116 = vcmp.eq.s32.totalorder %v3113, 1
  %v3117 = vsel %vm3116, %v2448, %v3115
  %vm3118 = vcmp.eq.s32.totalorder %v3113, 2
  %v3119 = vsel %vm3118, %v2455, %v3117
  %vm3120 = vcmp.eq.s32.totalorder %v3113, 3
  %v3121 = vsel %vm3120, %v2462, %v3119
  %vm3122 = vcmp.eq.s32.totalorder %v3113, 4
  %v3123 = vsel %vm3122, %v2469, %v3121
  %vm3124 = vcmp.eq.s32.totalorder %v3113, 5
  %v3125 = vsel %vm3124, %v2476, %v3123
  %vm3126 = vcmp.eq.s32.totalorder %v3113, 6
  %v3127 = vsel %vm3126, %v2483, %v3125
  %vm3128 = vcmp.eq.s32.totalorder %v3113, 7
  %v3129 = vsel %vm3128, %v2490, %v3127
  %3130 = vst [vmem:[%s16] sm:$0xff] %v3129
  // Predicated region
  $region62: #{stacked_lstm_forward.1} parent=0 // pred_check
    _
  $region63: #{stacked_lstm_forward.1} parent=0 // pred_check_branch
    %3132 = sbr.rel (0) target = $region65
  $region64: #{stacked_lstm_forward.1} parent=0 // pred_region
    _
  $region65: #{stacked_lstm_forward.1} parent=0 // pred_fallthru
    _
  // Predicated region
  $region66: #{stacked_lstm_forward.1} parent=0 // pred_check
    _
  $region67: #{stacked_lstm_forward.1} parent=0 // pred_check_branch
    %3134 = sbr.rel (0) target = $region69
  $region68: #{stacked_lstm_forward.1} parent=0 // pred_region
    _
  $region69: #{stacked_lstm_forward.1} parent=0 // pred_fallthru
    _
  // Predicated region
  $region70: #{stacked_lstm_forward.1} parent=0 // pred_check
    _
  $region71: #{stacked_lstm_forward.1} parent=0 // pred_check_branch
    %3136 = sbr.rel (0) target = $region73
  $region72: #{stacked_lstm_forward.1} parent=0 // pred_region
    _
  $region73: #{stacked_lstm_forward.1} parent=0 // pred_fallthru
    _
  // Predicated region
  $region74: #{stacked_lstm_forward.1} parent=0 // pred_check
    _
  $region75: #{stacked_lstm_forward.1} parent=0 // pred_check_branch
    %3138 = sbr.rel (0) target = $region77
  $region76: #{stacked_lstm_forward.1} parent=0 // pred_region
    _
  $region77: #{stacked_lstm_forward.1} parent=0 // pred_fallthru
    _

</llo_original>
